<compile_context>
chip_gen: v7x
topology: tpu7x:2x2x1
jax: 0.10.0
libtpu: 0.0.40
codegen_flags: <defaults>
</compile_context>

<pallas_src>
import functools

import jax
import jax.numpy as jnp
from jax.experimental import pallas as pl
from jax.experimental.pallas import tpu as pltpu


def _round_up(x, m):
    return (x + m - 1) // m * m


def _conv_im2col_kernel(x_ref, w_ref, o_ref, *, block_rows, k, cin, wo, kkc_pad):
    """One grid step = one (batch, row-tile): im2col + one deep MXU matmul.

    x_ref: (1, Hp, Wp, Cin)              bf16, full padded image (fetched once per n)
    w_ref: (kkc_pad, Cout_pad)           bf16, flattened weight (VMEM-resident)
    o_ref: (1, block_rows*wo, Cout_pad)  lane-dense output tile
    """
    rt = pl.program_id(1)
    row0 = pl.multiple_of(rt * block_rows, 8)  # first padded-input row of this tile

    # im2col: K*K shifted windows concatenated along the lane (channel) axis,
    # plus a zero filler so the contraction depth is exactly kkc_pad (>=128).
    taps = []
    for kh in range(k):
        rows = x_ref[0, pl.ds(row0 + kh, block_rows), :, :]      # (TH, Wp, Cin)
        for kw in range(k):
            taps.append(rows[:, kw:kw + wo, :])                   # (TH, Wo, Cin)
    fill = kkc_pad - k * k * cin
    if fill:
        taps.append(jnp.zeros((block_rows, wo, fill), dtype=taps[0].dtype))
    patches = jnp.concatenate(taps, axis=-1)                      # (TH, Wo, kkc_pad)
    # wo % 8 == 0 -> this reshape only merges the leading dims (layout preserving).
    patches = patches.reshape(block_rows * wo, kkc_pad)

    acc = jnp.dot(patches, w_ref[...], preferred_element_type=jnp.float32)
    o_ref[0] = acc.astype(o_ref.dtype)   # direct lane-dense store, no reshape


def _conv_taps_kernel(x_ref, w_ref, o_ref, *, block_rows, k, cin, wo, kkc_pad):
    """Fallback path: K*K thin matmuls (depth Cin) accumulated in f32.

    Same BlockSpecs, bf16 operands and lane-dense output as the im2col kernel;
    only used if the installed Mosaic rejects the unaligned lane concatenation.
    """
    del kkc_pad
    rt = pl.program_id(1)
    row0 = pl.multiple_of(rt * block_rows, 8)
    wmat = w_ref[...]
    acc = jnp.zeros((block_rows * wo, o_ref.shape[-1]), jnp.float32)
    for kh in range(k):
        rows = x_ref[0, pl.ds(row0 + kh, block_rows), :, :]       # (TH, Wp, Cin)
        for kw in range(k):
            t = kh * k + kw
            win = rows[:, kw:kw + wo, :].reshape(block_rows * wo, cin)
            acc = acc + jnp.dot(win, wmat[t * cin:(t + 1) * cin, :],
                                preferred_element_type=jnp.float32)
    o_ref[0] = acc.astype(o_ref.dtype)


def conv2d_pallas(x_nchw, w_oihw, *, stride=1, padding=None, block_rows=32,
                  compute_dtype=jnp.bfloat16, impl="im2col"):
    """Forward pass of the `Conv` module (stride=1, groups=1, bias=False)."""
    assert stride == 1, "kernel implements the module's default stride=1 path"
    assert block_rows % 8 == 0
    N, Cin, H, W = x_nchw.shape
    Cout, Cin_w, K, K2 = w_oihw.shape
    assert Cin == Cin_w and K == K2
    if padding is None:
        padding = (K - 1) // 2           # PyTorch module default for stride=1
    P = padding

    Ho = H + 2 * P - K + 1
    Wo = W + 2 * P - K + 1
    # Round the output tile up to TPU-friendly sizes (8-row sublane granularity,
    # 128-lane output channels).  Extra rows / cols / channels are computed on
    # zero padding and sliced away below.
    Wo_pad = _round_up(Wo, 8)
    TH = min(block_rows, _round_up(Ho, 8))
    Ho_pad = _round_up(Ho, TH)
    Cout_pad = _round_up(Cout, 128)
    KKC = K * K * Cin
    KKC_pad = _round_up(KKC, 128)

    # ---- glue (kept minimal; the module's NCHW interface forces one transpose
    # on each side).
    # TODO(synk): in the full DnCNN stack keep activations NHWC end-to-end and
    # fold the spatial zero-padding into the kernel (halo'd row tiles), so the
    # pad + transposes stop costing an extra HBM round trip per layer.
    x_nhwc = jnp.transpose(x_nchw, (0, 2, 3, 1)).astype(compute_dtype)
    x_pad = jnp.pad(x_nhwc, ((0, 0),
                             (P, P + (Ho_pad - Ho)),
                             (P, P + (Wo_pad - Wo)),
                             (0, 0)))
    Hp, Wp = Ho_pad + K - 1, Wo_pad + K - 1

    # Weight: OIHW -> (K*K*Cin, Cout) -> zero-pad to (KKC_pad, Cout_pad) -> bf16.
    w_flat = jnp.transpose(w_oihw, (2, 3, 1, 0)).reshape(KKC, Cout)
    w_flat = jnp.pad(w_flat, ((0, KKC_pad - KKC), (0, Cout_pad - Cout)))
    w_flat = w_flat.astype(compute_dtype)

    n_row_tiles = Ho_pad // TH
    kernel = _conv_im2col_kernel if impl == "im2col" else _conv_taps_kernel
    kernel = functools.partial(kernel, block_rows=TH, k=K, cin=Cin,
                               wo=Wo_pad, kkc_pad=KKC_pad)

    out_slab = pl.pallas_call(
        kernel,
        out_shape=jax.ShapeDtypeStruct((N, Ho_pad * Wo_pad, Cout_pad),
                                       x_nchw.dtype),
        grid_spec=pltpu.PrefetchScalarGridSpec(
            num_scalar_prefetch=0,
            grid=(N, n_row_tiles),
            in_specs=[
                # Full padded image per batch element: block index depends only
                # on n, so it is DMA'd once per image, not once per row tile.
                # (For production-size images switch to halo'd row tiles.)
                pl.BlockSpec((1, Hp, Wp, Cin), lambda n, rt: (n, 0, 0, 0)),
                # Invariant flattened weight: constant index map -> resident in
                # VMEM across the whole grid (no per-step re-DMA / re-stream).
                pl.BlockSpec((KKC_pad, Cout_pad), lambda n, rt: (0, 0)),
            ],
            out_specs=pl.BlockSpec((1, TH * Wo_pad, Cout_pad),
                                   lambda n, rt: (n, rt, 0)),
        ),
        compiler_params=pltpu.CompilerParams(
            # Both axes are independent -> shard across megacore / v7x's 2 TCs.
            dimension_semantics=("parallel", "parallel"),
            # Explicit VMEM budget, well inside v7x's 64 MiB physical VMEM.
            vmem_limit_bytes=32 * 1024 * 1024,
        ),
    )(x_pad, w_flat)

    out = out_slab.reshape(N, Ho_pad, Wo_pad, Cout_pad)[:, :Ho, :Wo, :Cout]
    return jnp.transpose(out, (0, 3, 1, 2))   # back to NCHW (module contract)


if __name__ == "__main__":
    # Module config (SMALL): Conv(in_channels=4, out_channels=8, kernel_size=3)
    N, Cin, H, W = 2, 4, 16, 16
    Cout, K = 8, 3

    key = jax.random.PRNGKey(0)
    kx, kw = jax.random.split(key)
    x = jax.random.normal(kx, (N, Cin, H, W), dtype=jnp.float32)
    fan_in = Cin * K * K            # nn.Conv2d weight shape: (Cout, Cin, K, K)
    w = jax.random.normal(kw, (Cout, Cin, K, K), dtype=jnp.float32) / jnp.sqrt(fan_in)

    try:
        conv = jax.jit(functools.partial(conv2d_pallas, stride=1, padding=None))
        out = jax.block_until_ready(conv(x, w))
    except Exception:
        # The im2col build relies on unaligned lane concatenation; if the
        # installed Mosaic rejects it, fall back to the per-tap matmul kernel
        # (identical specs, bf16 operands and lane-dense output).
        conv = jax.jit(functools.partial(conv2d_pallas, stride=1, padding=None,
                                         impl="taps"))
        out = jax.block_until_ready(conv(x, w))

    # Reference: XLA convolution on bf16-rounded operands (the kernel feeds
    # bf16 to the MXU and accumulates in f32), with NCHW/OIHW semantics
    # identical to the PyTorch module.
    xq = x.astype(jnp.bfloat16).astype(jnp.float32)
    wq = w.astype(jnp.bfloat16).astype(jnp.float32)
    ref = jax.lax.conv_general_dilated(
        xq, wq, window_strides=(1, 1),
        padding=[((K - 1) // 2, (K - 1) // 2)] * 2,
        dimension_numbers=("NCHW", "OIHW", "NCHW"))

    assert out.shape == ref.shape == (N, Cout, H, W)
    assert jnp.allclose(out, ref, atol=1e-3, rtol=1e-3), \
        float(jnp.max(jnp.abs(out - ref)))
    print("KERNEL_OK")
</pallas_src>

<mosaic_0001>
module attributes {stable_mosaic.version = 11 : i64} {
  func.func @_conv_im2col_kernel(%arg0: i32, %arg1: i32, %arg2: memref<1x18x18x4xbf16, #tpu.memory_space<vmem>>, %arg3: memref<128x128xbf16, #tpu.memory_space<vmem>>, %arg4: memref<1x256x128xf32, #tpu.memory_space<vmem>>) attributes {dimension_semantics = [#tpu.dimension_semantics<parallel>, #tpu.dimension_semantics<parallel>], iteration_bounds = array<i64: 2, 1>, scalar_prefetch = 0 : i64, scratch_operands = 0 : i64, tpu.core_type = #tpu.core_type<tc>, window_params = [{transform_indices = @transform_0, window_bounds = array<i64: 1, 18, 18, 4>}, {pipeline_mode = #tpu.pipeline_mode<synchronous>, transform_indices = @transform_1, window_bounds = array<i64: 128, 128>}, {transform_indices = @transform_2, window_bounds = array<i64: 1, 256, 128>}]} {
    %c16_i32 = arith.constant 16 : i32
    %0 = arith.muli %arg1, %c16_i32 : i32
    %1 = tpu.assume_multiple %0, 8 : i32
    %c0_i32 = arith.constant 0 : i32
    %2 = arith.addi %1, %c0_i32 : i32
    %c0 = arith.constant 0 : index
    %3 = arith.index_cast %2 : i32 to index
    %c0_0 = arith.constant 0 : index
    %c0_1 = arith.constant 0 : index
    %4 = vector.load %arg2[%c0, %3, %c0_0, %c0_1] : memref<1x18x18x4xbf16, #tpu.memory_space<vmem>>, vector<1x16x18x4xbf16>
    %5 = vector.shape_cast %4 : vector<1x16x18x4xbf16> to vector<16x18x4xbf16>
    %6 = vector.extract_strided_slice %5 {offsets = [0, 0, 0], sizes = [16, 16, 4], strides = [1, 1, 1]} : vector<16x18x4xbf16> to vector<16x16x4xbf16>
    %7 = vector.extract_strided_slice %5 {offsets = [0, 1, 0], sizes = [16, 16, 4], strides = [1, 1, 1]} : vector<16x18x4xbf16> to vector<16x16x4xbf16>
    %8 = vector.extract_strided_slice %5 {offsets = [0, 2, 0], sizes = [16, 16, 4], strides = [1, 1, 1]} : vector<16x18x4xbf16> to vector<16x16x4xbf16>
    %c1_i32 = arith.constant 1 : i32
    %9 = arith.addi %1, %c1_i32 : i32
    %c0_2 = arith.constant 0 : index
    %10 = arith.index_cast %9 : i32 to index
    %c0_3 = arith.constant 0 : index
    %c0_4 = arith.constant 0 : index
    %11 = vector.load %arg2[%c0_2, %10, %c0_3, %c0_4] : memref<1x18x18x4xbf16, #tpu.memory_space<vmem>>, vector<1x16x18x4xbf16>
    %12 = vector.shape_cast %11 : vector<1x16x18x4xbf16> to vector<16x18x4xbf16>
    %13 = vector.extract_strided_slice %12 {offsets = [0, 0, 0], sizes = [16, 16, 4], strides = [1, 1, 1]} : vector<16x18x4xbf16> to vector<16x16x4xbf16>
    %14 = vector.extract_strided_slice %12 {offsets = [0, 1, 0], sizes = [16, 16, 4], strides = [1, 1, 1]} : vector<16x18x4xbf16> to vector<16x16x4xbf16>
    %15 = vector.extract_strided_slice %12 {offsets = [0, 2, 0], sizes = [16, 16, 4], strides = [1, 1, 1]} : vector<16x18x4xbf16> to vector<16x16x4xbf16>
    %c2_i32 = arith.constant 2 : i32
    %16 = arith.addi %1, %c2_i32 : i32
    %c0_5 = arith.constant 0 : index
    %17 = arith.index_cast %16 : i32 to index
    %c0_6 = arith.constant 0 : index
    %c0_7 = arith.constant 0 : index
    %18 = vector.load %arg2[%c0_5, %17, %c0_6, %c0_7] : memref<1x18x18x4xbf16, #tpu.memory_space<vmem>>, vector<1x16x18x4xbf16>
    %19 = vector.shape_cast %18 : vector<1x16x18x4xbf16> to vector<16x18x4xbf16>
    %20 = vector.extract_strided_slice %19 {offsets = [0, 0, 0], sizes = [16, 16, 4], strides = [1, 1, 1]} : vector<16x18x4xbf16> to vector<16x16x4xbf16>
    %21 = vector.extract_strided_slice %19 {offsets = [0, 1, 0], sizes = [16, 16, 4], strides = [1, 1, 1]} : vector<16x18x4xbf16> to vector<16x16x4xbf16>
    %22 = vector.extract_strided_slice %19 {offsets = [0, 2, 0], sizes = [16, 16, 4], strides = [1, 1, 1]} : vector<16x18x4xbf16> to vector<16x16x4xbf16>
    %cst = arith.constant 0.000000e+00 : bf16
    %23 = vector.broadcast %cst : bf16 to vector<16x16x92xbf16>
    %24 = tpu.concatenate %6, %7, %8, %13, %14, %15, %20, %21, %22, %23 in 2 : vector<16x16x4xbf16>, vector<16x16x4xbf16>, vector<16x16x4xbf16>, vector<16x16x4xbf16>, vector<16x16x4xbf16>, vector<16x16x4xbf16>, vector<16x16x4xbf16>, vector<16x16x4xbf16>, vector<16x16x4xbf16>, vector<16x16x92xbf16> -> vector<16x16x128xbf16>
    %25 = vector.shape_cast %24 : vector<16x16x128xbf16> to vector<256x128xbf16>
    %c0_8 = arith.constant 0 : index
    %c0_9 = arith.constant 0 : index
    %26 = vector.load %arg3[%c0_8, %c0_9] : memref<128x128xbf16, #tpu.memory_space<vmem>>, vector<128x128xbf16>
    %cst_10 = arith.constant dense<0.000000e+00> : vector<256x128xf32>
    %27 = tpu.matmul %25, %26, %cst_10 {dimension_numbers = #tpu.dot_dimension_numbers<[1], [0], [0], [1], [0, 0, 1, 1], [], []>} : vector<256x128xbf16>, vector<128x128xbf16>, vector<256x128xf32> -> vector<256x128xf32>
    %c0_11 = arith.constant 0 : index
    %c0_12 = arith.constant 0 : index
    %c0_13 = arith.constant 0 : index
    %28 = vector.load %arg4[%c0_11, %c0_12, %c0_13] : memref<1x256x128xf32, #tpu.memory_space<vmem>>, vector<1x256x128xf32>
    %29 = vector.shape_cast %28 : vector<1x256x128xf32> to vector<256x128xf32>
    %30 = vector.shape_cast %27 : vector<256x128xf32> to vector<1x256x128xf32>
    tpu.vector_store %arg4[%c0_11, %c0_12, %c0_13], %30 {strides = array<i32>} : memref<1x256x128xf32, #tpu.memory_space<vmem>>, vector<1x256x128xf32>,
    return
  }
  func.func @transform_0(%arg0: i32, %arg1: i32) -> (i32, i32, i32, i32) {
    %c0_i32 = arith.constant 0 : i32
    %c0_i32_0 = arith.constant 0 : i32
    %c0_i32_1 = arith.constant 0 : i32
    %c0_i32_2 = arith.constant 0 : i32
    return %arg0, %c0_i32, %c0_i32_0, %c0_i32_1 : i32, i32, i32, i32
  }
  func.func @transform_1(%arg0: i32, %arg1: i32) -> (i32, i32) {
    %c0_i32 = arith.constant 0 : i32
    %c0_i32_0 = arith.constant 0 : i32
    %c0_i32_1 = arith.constant 0 : i32
    return %c0_i32, %c0_i32_0 : i32, i32
  }
  func.func @transform_2(%arg0: i32, %arg1: i32) -> (i32, i32, i32) {
    %c0_i32 = arith.constant 0 : i32
    %c0_i32_0 = arith.constant 0 : i32
    return %arg0, %arg1, %c0_i32 : i32, i32, i32
  }
}

module attributes {stable_mosaic.version = 11 : i64} {
  func.func @_conv_taps_kernel(%arg0: i32, %arg1: i32, %arg2: memref<1x18x18x4xbf16, #tpu.memory_space<vmem>>, %arg3: memref<128x128xbf16, #tpu.memory_space<vmem>>, %arg4: memref<1x256x128xf32, #tpu.memory_space<vmem>>) attributes {dimension_semantics = [#tpu.dimension_semantics<parallel>, #tpu.dimension_semantics<parallel>], iteration_bounds = array<i64: 2, 1>, scalar_prefetch = 0 : i64, scratch_operands = 0 : i64, tpu.core_type = #tpu.core_type<tc>, window_params = [{transform_indices = @transform_0, window_bounds = array<i64: 1, 18, 18, 4>}, {pipeline_mode = #tpu.pipeline_mode<synchronous>, transform_indices = @transform_1, window_bounds = array<i64: 128, 128>}, {transform_indices = @transform_2, window_bounds = array<i64: 1, 256, 128>}]} {
    %c16_i32 = arith.constant 16 : i32
    %0 = arith.muli %arg1, %c16_i32 : i32
    %1 = tpu.assume_multiple %0, 8 : i32
    %c0 = arith.constant 0 : index
    %c0_0 = arith.constant 0 : index
    %2 = vector.load %arg3[%c0, %c0_0] : memref<128x128xbf16, #tpu.memory_space<vmem>>, vector<128x128xbf16>
    %cst = arith.constant 0.000000e+00 : f32
    %3 = vector.broadcast %cst : f32 to vector<256x128xf32>
    %c0_i32 = arith.constant 0 : i32
    %4 = arith.addi %1, %c0_i32 : i32
    %c0_1 = arith.constant 0 : index
    %5 = arith.index_cast %4 : i32 to index
    %c0_2 = arith.constant 0 : index
    %c0_3 = arith.constant 0 : index
    %6 = vector.load %arg2[%c0_1, %5, %c0_2, %c0_3] : memref<1x18x18x4xbf16, #tpu.memory_space<vmem>>, vector<1x16x18x4xbf16>
    %7 = vector.shape_cast %6 : vector<1x16x18x4xbf16> to vector<16x18x4xbf16>
    %8 = vector.extract_strided_slice %7 {offsets = [0, 0, 0], sizes = [16, 16, 4], strides = [1, 1, 1]} : vector<16x18x4xbf16> to vector<16x16x4xbf16>
    %9 = vector.shape_cast %8 : vector<16x16x4xbf16> to vector<256x4xbf16>
    %10 = vector.extract_strided_slice %2 {offsets = [0, 0], sizes = [4, 128], strides = [1, 1]} : vector<128x128xbf16> to vector<4x128xbf16>
    %cst_4 = arith.constant dense<0.000000e+00> : vector<256x128xf32>
    %11 = tpu.matmul %9, %10, %cst_4 {dimension_numbers = #tpu.dot_dimension_numbers<[1], [0], [0], [1], [0, 0, 1, 1], [], []>} : vector<256x4xbf16>, vector<4x128xbf16>, vector<256x128xf32> -> vector<256x128xf32>
    %12 = arith.addf %3, %11 : vector<256x128xf32>
    %13 = vector.extract_strided_slice %7 {offsets = [0, 1, 0], sizes = [16, 16, 4], strides = [1, 1, 1]} : vector<16x18x4xbf16> to vector<16x16x4xbf16>
    %14 = vector.shape_cast %13 : vector<16x16x4xbf16> to vector<256x4xbf16>
    %15 = vector.extract_strided_slice %2 {offsets = [4, 0], sizes = [4, 128], strides = [1, 1]} : vector<128x128xbf16> to vector<4x128xbf16>
    %cst_5 = arith.constant dense<0.000000e+00> : vector<256x128xf32>
    %16 = tpu.matmul %14, %15, %cst_5 {dimension_numbers = #tpu.dot_dimension_numbers<[1], [0], [0], [1], [0, 0, 1, 1], [], []>} : vector<256x4xbf16>, vector<4x128xbf16>, vector<256x128xf32> -> vector<256x128xf32>
    %17 = arith.addf %12, %16 : vector<256x128xf32>
    %18 = vector.extract_strided_slice %7 {offsets = [0, 2, 0], sizes = [16, 16, 4], strides = [1, 1, 1]} : vector<16x18x4xbf16> to vector<16x16x4xbf16>
    %19 = vector.shape_cast %18 : vector<16x16x4xbf16> to vector<256x4xbf16>
    %20 = vector.extract_strided_slice %2 {offsets = [8, 0], sizes = [4, 128], strides = [1, 1]} : vector<128x128xbf16> to vector<4x128xbf16>
    %cst_6 = arith.constant dense<0.000000e+00> : vector<256x128xf32>
    %21 = tpu.matmul %19, %20, %cst_6 {dimension_numbers = #tpu.dot_dimension_numbers<[1], [0], [0], [1], [0, 0, 1, 1], [], []>} : vector<256x4xbf16>, vector<4x128xbf16>, vector<256x128xf32> -> vector<256x128xf32>
    %22 = arith.addf %17, %21 : vector<256x128xf32>
    %c1_i32 = arith.constant 1 : i32
    %23 = arith.addi %1, %c1_i32 : i32
    %c0_7 = arith.constant 0 : index
    %24 = arith.index_cast %23 : i32 to index
    %c0_8 = arith.constant 0 : index
    %c0_9 = arith.constant 0 : index
    %25 = vector.load %arg2[%c0_7, %24, %c0_8, %c0_9] : memref<1x18x18x4xbf16, #tpu.memory_space<vmem>>, vector<1x16x18x4xbf16>
    %26 = vector.shape_cast %25 : vector<1x16x18x4xbf16> to vector<16x18x4xbf16>
    %27 = vector.extract_strided_slice %26 {offsets = [0, 0, 0], sizes = [16, 16, 4], strides = [1, 1, 1]} : vector<16x18x4xbf16> to vector<16x16x4xbf16>
    %28 = vector.shape_cast %27 : vector<16x16x4xbf16> to vector<256x4xbf16>
    %29 = vector.extract_strided_slice %2 {offsets = [12, 0], sizes = [4, 128], strides = [1, 1]} : vector<128x128xbf16> to vector<4x128xbf16>
    %cst_10 = arith.constant dense<0.000000e+00> : vector<256x128xf32>
    %30 = tpu.matmul %28, %29, %cst_10 {dimension_numbers = #tpu.dot_dimension_numbers<[1], [0], [0], [1], [0, 0, 1, 1], [], []>} : vector<256x4xbf16>, vector<4x128xbf16>, vector<256x128xf32> -> vector<256x128xf32>
    %31 = arith.addf %22, %30 : vector<256x128xf32>
    %32 = vector.extract_strided_slice %26 {offsets = [0, 1, 0], sizes = [16, 16, 4], strides = [1, 1, 1]} : vector<16x18x4xbf16> to vector<16x16x4xbf16>
    %33 = vector.shape_cast %32 : vector<16x16x4xbf16> to vector<256x4xbf16>
    %34 = vector.extract_strided_slice %2 {offsets = [16, 0], sizes = [4, 128], strides = [1, 1]} : vector<128x128xbf16> to vector<4x128xbf16>
    %cst_11 = arith.constant dense<0.000000e+00> : vector<256x128xf32>
    %35 = tpu.matmul %33, %34, %cst_11 {dimension_numbers = #tpu.dot_dimension_numbers<[1], [0], [0], [1], [0, 0, 1, 1], [], []>} : vector<256x4xbf16>, vector<4x128xbf16>, vector<256x128xf32> -> vector<256x128xf32>
    %36 = arith.addf %31, %35 : vector<256x128xf32>
    %37 = vector.extract_strided_slice %26 {offsets = [0, 2, 0], sizes = [16, 16, 4], strides = [1, 1, 1]} : vector<16x18x4xbf16> to vector<16x16x4xbf16>
    %38 = vector.shape_cast %37 : vector<16x16x4xbf16> to vector<256x4xbf16>
    %39 = vector.extract_strided_slice %2 {offsets = [20, 0], sizes = [4, 128], strides = [1, 1]} : vector<128x128xbf16> to vector<4x128xbf16>
    %cst_12 = arith.constant dense<0.000000e+00> : vector<256x128xf32>
    %40 = tpu.matmul %38, %39, %cst_12 {dimension_numbers = #tpu.dot_dimension_numbers<[1], [0], [0], [1], [0, 0, 1, 1], [], []>} : vector<256x4xbf16>, vector<4x128xbf16>, vector<256x128xf32> -> vector<256x128xf32>
    %41 = arith.addf %36, %40 : vector<256x128xf32>
    %c2_i32 = arith.constant 2 : i32
    %42 = arith.addi %1, %c2_i32 : i32
    %c0_13 = arith.constant 0 : index
    %43 = arith.index_cast %42 : i32 to index
    %c0_14 = arith.constant 0 : index
    %c0_15 = arith.constant 0 : index
    %44 = vector.load %arg2[%c0_13, %43, %c0_14, %c0_15] : memref<1x18x18x4xbf16, #tpu.memory_space<vmem>>, vector<1x16x18x4xbf16>
    %45 = vector.shape_cast %44 : vector<1x16x18x4xbf16> to vector<16x18x4xbf16>
    %46 = vector.extract_strided_slice %45 {offsets = [0, 0, 0], sizes = [16, 16, 4], strides = [1, 1, 1]} : vector<16x18x4xbf16> to vector<16x16x4xbf16>
    %47 = vector.shape_cast %46 : vector<16x16x4xbf16> to vector<256x4xbf16>
    %48 = vector.extract_strided_slice %2 {offsets = [24, 0], sizes = [4, 128], strides = [1, 1]} : vector<128x128xbf16> to vector<4x128xbf16>
    %cst_16 = arith.constant dense<0.000000e+00> : vector<256x128xf32>
    %49 = tpu.matmul %47, %48, %cst_16 {dimension_numbers = #tpu.dot_dimension_numbers<[1], [0], [0], [1], [0, 0, 1, 1], [], []>} : vector<256x4xbf16>, vector<4x128xbf16>, vector<256x128xf32> -> vector<256x128xf32>
    %50 = arith.addf %41, %49 : vector<256x128xf32>
    %51 = vector.extract_strided_slice %45 {offsets = [0, 1, 0], sizes = [16, 16, 4], strides = [1, 1, 1]} : vector<16x18x4xbf16> to vector<16x16x4xbf16>
    %52 = vector.shape_cast %51 : vector<16x16x4xbf16> to vector<256x4xbf16>
    %53 = vector.extract_strided_slice %2 {offsets = [28, 0], sizes = [4, 128], strides = [1, 1]} : vector<128x128xbf16> to vector<4x128xbf16>
    %cst_17 = arith.constant dense<0.000000e+00> : vector<256x128xf32>
    %54 = tpu.matmul %52, %53, %cst_17 {dimension_numbers = #tpu.dot_dimension_numbers<[1], [0], [0], [1], [0, 0, 1, 1], [], []>} : vector<256x4xbf16>, vector<4x128xbf16>, vector<256x128xf32> -> vector<256x128xf32>
    %55 = arith.addf %50, %54 : vector<256x128xf32>
    %56 = vector.extract_strided_slice %45 {offsets = [0, 2, 0], sizes = [16, 16, 4], strides = [1, 1, 1]} : vector<16x18x4xbf16> to vector<16x16x4xbf16>
    %57 = vector.shape_cast %56 : vector<16x16x4xbf16> to vector<256x4xbf16>
    %58 = vector.extract_strided_slice %2 {offsets = [32, 0], sizes = [4, 128], strides = [1, 1]} : vector<128x128xbf16> to vector<4x128xbf16>
    %cst_18 = arith.constant dense<0.000000e+00> : vector<256x128xf32>
    %59 = tpu.matmul %57, %58, %cst_18 {dimension_numbers = #tpu.dot_dimension_numbers<[1], [0], [0], [1], [0, 0, 1, 1], [], []>} : vector<256x4xbf16>, vector<4x128xbf16>, vector<256x128xf32> -> vector<256x128xf32>
    %60 = arith.addf %55, %59 : vector<256x128xf32>
    %c0_19 = arith.constant 0 : index
    %c0_20 = arith.constant 0 : index
    %c0_21 = arith.constant 0 : index
    %61 = vector.load %arg4[%c0_19, %c0_20, %c0_21] : memref<1x256x128xf32, #tpu.memory_space<vmem>>, vector<1x256x128xf32>
    %62 = vector.shape_cast %61 : vector<1x256x128xf32> to vector<256x128xf32>
    %63 = vector.shape_cast %60 : vector<256x128xf32> to vector<1x256x128xf32>
    tpu.vector_store %arg4[%c0_19, %c0_20, %c0_21], %63 {strides = array<i32>} : memref<1x256x128xf32, #tpu.memory_space<vmem>>, vector<1x256x128xf32>,
    return
  }
  func.func @transform_0(%arg0: i32, %arg1: i32) -> (i32, i32, i32, i32) {
    %c0_i32 = arith.constant 0 : i32
    %c0_i32_0 = arith.constant 0 : i32
    %c0_i32_1 = arith.constant 0 : i32
    %c0_i32_2 = arith.constant 0 : i32
    return %arg0, %c0_i32, %c0_i32_0, %c0_i32_1 : i32, i32, i32, i32
  }
  func.func @transform_1(%arg0: i32, %arg1: i32) -> (i32, i32) {
    %c0_i32 = arith.constant 0 : i32
    %c0_i32_0 = arith.constant 0 : i32
    %c0_i32_1 = arith.constant 0 : i32
    return %c0_i32, %c0_i32_0 : i32, i32
  }
  func.func @transform_2(%arg0: i32, %arg1: i32) -> (i32, i32, i32) {
    %c0_i32 = arith.constant 0 : i32
    %c0_i32_0 = arith.constant 0 : i32
    return %arg0, %arg1, %c0_i32 : i32, i32, i32
  }
}

</mosaic_0001>

<llo_original>
// kernel: conv2d_pallas.1
$region0: #{conv2d_pallas.1}
  #allocation0 [shape = 'u32[]', space=smem, size = 0x4, offset = 0x4, fixed_abs, tag = 'smem constant byte address 0x4 - core index']
  #allocation1 [shape = 'u32[144,128]{1,0:T(1,128)}', space=vmem, size = 0x12000, scoped, tag = 'internal scratch']
  %s0 = inlined_call_operand.vmem [shape: bf16[2,18,18,4], index: 0, kind: input, shape index: {}]
  %s1 = inlined_call_operand.vmem [shape: bf16[128,128], index: 1, kind: input, shape index: {}]
  %s2 = inlined_call_operand.vmem [shape: f32[2,256,128], index: 2, kind: output, shape index: {}]
  %s3 = sld [smem:[#allocation0]]
  $region41: #{conv2d_pallas.1} parent=0
    _
  %s5 = ssub.s32 1, %s3
  %s6 = scalar_select 0, %s5, %s3
  loop: start=0, step=1, limit=4
  $region2: #{conv2d_pallas.1} parent=0 // loop_pre_header
    _
  $region3: #{conv2d_pallas.1} parent=0 // loop_header
    %s8 = sphi 0, %s12
    %p9 = scmp.ge.s32.totalorder %s8, 4
    %s15 = sphi 0, %s27
    %s16 = sphi 0, %s23
    %s17 = sphi 0, %s15
    %s18 = sphi 0, %s16
    %s19 = sphi 0, %s17
    %s20 = sphi 0, %s18
    %s30 = sphi 0, %s32
    %s33 = sphi 0, %s30
    %s34 = sphi 0, %s33
    %s50 = sphi 0, %s34
    %s54 = sphi 0, %s54
    %s56 = sphi 0, %s54
    %s57 = sphi 0, %s56
    %s71 = sphi 0, %s57
    %s79 = sphi 0, %s81
    %s82 = sphi 0, %s79
    %s83 = sphi 0, %s82
    %s99 = sphi 0, %s83
  $region4: #{conv2d_pallas.1} parent=0 // loop_header_branch
    %11 = sbr.rel (%p9) target = $region8
  $region5: #{conv2d_pallas.1} parent=0 // loop_body
    %s13 = ssub.s32 %s8, 1
    %s14 = ssub.s32 %s8, 2
    %s21 = sadd.s32 1, %s16
    %p22 = scmp.ge.s32.totalorder %s21, 1
    %s23 = scalar_select %p22, 0, %s21
    %s24 = sadd.s32 1, %s15
    %s25 = scalar_select %p22, %s24, %s15
    %p26 = scmp.ge.s32.totalorder %s25, 2
    %s27 = scalar_select %p26, 0, %s25
    %s28 = ssub.s32 %s15, %s27
    %p29 = scmp.eq.s32.totalorder %s28, 0
    %s31 = sadd.s32 %s30, 1
    %s32 = scalar_select %p29, %s30, %s31
    %p35 = pneg %p29
    %p36 = scmp.eq.s32.totalorder %s8, 1
    %p37 = por %p35, %p36
    %p38 = scmp.ne.s32.totalorder %s30, %s33
    %p39 = scmp.eq.s32.totalorder %s8, 0
    %p40 = por %p38, %p39
    %p41 = scmp.ne.s32.totalorder %s30, %s33
    %p42 = scmp.eq.s32.totalorder %s13, 1
    %p43 = por %p41, %p42
    %p44 = scmp.ne.s32.totalorder %s33, %s34
    %p45 = scmp.eq.s32.totalorder %s13, 0
    %p46 = por %p44, %p45
    %p47 = scmp.ne.s32.totalorder %s33, %s34
    %p48 = scmp.eq.s32.totalorder %s14, 1
    %p49 = por %p47, %p48
    %p51 = scmp.ne.s32.totalorder %s34, %s50
    %p52 = scmp.eq.s32.totalorder %s14, 0
    %p53 = por %p51, %p52
    %s55 = sadd.s32 %s54, 1
    %p58 = scmp.eq.s32.totalorder %s8, 1
    %p59 = scmp.ne.s32.totalorder %s54, %s56
    %p60 = scmp.eq.s32.totalorder %s8, 0
    %p61 = por %p59, %p60
    %p62 = scmp.ne.s32.totalorder %s54, %s56
    %p63 = scmp.eq.s32.totalorder %s13, 1
    %p64 = por %p62, %p63
    %p65 = scmp.ne.s32.totalorder %s56, %s57
    %p66 = scmp.eq.s32.totalorder %s13, 0
    %p67 = por %p65, %p66
    %p68 = scmp.ne.s32.totalorder %s56, %s57
    %p69 = scmp.eq.s32.totalorder %s14, 1
    %p70 = por %p68, %p69
    %p72 = scmp.ne.s32.totalorder %s57, %s71
    %p73 = scmp.eq.s32.totalorder %s14, 0
    %p74 = por %p72, %p73
    %s75 = ssub.s32 %s15, %s27
    %s76 = ssub.s32 %s16, %s23
    %s77 = sor.u32 %s75, %s76
    %p78 = scmp.eq.s32.totalorder %s77, 0
    %s80 = sadd.s32 %s79, 1
    %s81 = scalar_select %p78, %s79, %s80
    %p84 = pneg %p78
    %p85 = scmp.eq.s32.totalorder %s8, 1
    %p86 = por %p84, %p85
    %p87 = scmp.ne.s32.totalorder %s79, %s82
    %p88 = scmp.eq.s32.totalorder %s8, 0
    %p89 = por %p87, %p88
    %p90 = scmp.ne.s32.totalorder %s79, %s82
    %p91 = scmp.eq.s32.totalorder %s13, 1
    %p92 = por %p90, %p91
    %p93 = scmp.ne.s32.totalorder %s82, %s83
    %p94 = scmp.eq.s32.totalorder %s13, 0
    %p95 = por %p93, %p94
    %p96 = scmp.ne.s32.totalorder %s82, %s83
    %p97 = scmp.eq.s32.totalorder %s14, 1
    %p98 = por %p96, %p97
    %p100 = scmp.ne.s32.totalorder %s83, %s99
    %p101 = scmp.eq.s32.totalorder %s14, 0
    %p102 = por %p100, %p101
    %p103 = scmp.le.s32.totalorder 1, %s8
    %p104 = scmp.lt.s32.totalorder %s8, 3
    %p105 = pnand %p103, %p104
    %p106 = pneg %p105
    // Predicated region
    $region9: #{conv2d_pallas.1} parent=5 // pred_check
      _
    $region10: #{conv2d_pallas.1} parent=5 // pred_check_branch
      %108 = sbr.rel (%p105) target = $region12
    $region11: #{conv2d_pallas.1} parent=5 // pred_region
      %s109 = ssub.s32 %s8, 1
      // Predicated region
      $region13: #{conv2d_pallas.1} parent=11 // pred_check
        %p110 = pneg %p67
      $region14: #{conv2d_pallas.1} parent=11 // pred_check_branch
        %112 = sbr.rel (%p110) target = $region16
      $region15: #{conv2d_pallas.1} parent=11 // pred_region
        _
      $region16: #{conv2d_pallas.1} parent=11 // pred_fallthru
        _
    $region12: #{conv2d_pallas.1} parent=5 // pred_fallthru
      _
    %p113 = scmp.lt.s32.totalorder %s8, 2
    // Predicated region
    $region17: #{conv2d_pallas.1} parent=5 // pred_check
      %p114 = pneg %p113
    $region18: #{conv2d_pallas.1} parent=5 // pred_check_branch
      %116 = sbr.rel (%p114) target = $region20
    $region19: #{conv2d_pallas.1} parent=5 // pred_region
      // Predicated region
      $region21: #{conv2d_pallas.1} parent=19 // pred_check
        %p117 = pneg %p40
      $region22: #{conv2d_pallas.1} parent=19 // pred_check_branch
        %119 = sbr.rel (%p117) target = $region24
      $region23: #{conv2d_pallas.1} parent=19 // pred_region
        %p120 = scmp.lt.s32.totalorder %s15, 1
        %s121 = scalar_select %p120, %s15, 1
        %s122 = smul.addr %s121, 54
        %s123 = smul.addr %s122, 4
        %s124 = scalar_lea.vmem %s0, %s123
      $region24: #{conv2d_pallas.1} parent=19 // pred_fallthru
        _
    $region20: #{conv2d_pallas.1} parent=5 // pred_fallthru
      _
    %p125 = scmp.le.s32.totalorder 1, %s8
    %p126 = scmp.lt.s32.totalorder %s8, 3
    %p127 = pnand %p125, %p126
    %p128 = pneg %p127
    // Predicated region
    $region25: #{conv2d_pallas.1} parent=5 // pred_check
      _
    $region26: #{conv2d_pallas.1} parent=5 // pred_check_branch
      %130 = sbr.rel (%p127) target = $region28
    $region27: #{conv2d_pallas.1} parent=5 // pred_region
      %s131 = ssub.s32 %s8, 1
      %p132 = scmp.lt.s32.totalorder %s17, 1
      %s133 = scalar_select %p132, %s17, 1
      %s134 = smul.addr %s133, 54
      %s135 = smul.addr %s134, 4
      %s136 = scalar_lea.vmem %s0, %s135
      %p137 = pneg %p46
      %p138 = pneg %p43
      %p139 = pneg %p67
      %p140 = pneg %p64
      %p141 = pneg %p95
      %p142 = pneg %p92
      %s143 = smul.u32 32, %s18
      %p144 = scmp.lt.s32.totalorder %s17, 1
      %s145 = scalar_select %p144, %s17, 1
      %p146 = scmp.lt.s32.totalorder %s143, 31
      %s147 = scalar_select %p146, %s143, 31
      %s148 = smul.addr %s145, 32
      %s149 = sadd.s32 %s147, %s148
      %s150 = smul.addr %s149, 8
      %s151 = scalar_lea.vmem %s2, %s150
      %p152 = scmp.lt.s32.totalorder %s17, 1
      %s153 = scalar_select %p152, %s17, 1
      %s154 = smul.addr %s153, 54
      %s155 = smul.addr %s154, 4
      %s156 = scalar_lea.vmem %s0, %s155
      %s157 = smul.u32 32, %s18
      %p158 = scmp.lt.s32.totalorder %s17, 1
      %s159 = scalar_select %p158, %s17, 1
      %p160 = scmp.lt.s32.totalorder %s157, 31
      %s161 = scalar_select %p160, %s157, 31
      %s162 = smul.addr %s159, 32
      %s163 = sadd.s32 %s161, %s162
      %s164 = smul.addr %s163, 8
      %s165 = scalar_lea.vmem %s2, %s164
      %s166 = smul.u32 32, %s18
      %s168 = smul.u32 %s18, 16
      %s169 = smul.u32 %s168, 3
      %s170 = smul.addr %s169, 4
      %s171 = scalar_lea.vmem %s156, %s170
      %v172 = vld [vmem:[%s171] sm:$0xf]
      %v173 = vld [vmem:[%s171 + $0x4] sm:$0xf]
      %v174 = vld [vmem:[%s171 + $0x8] sm:$0x1]
      %v175 = vld [vmem:[%s171 + $0xc] sm:$0xf]
      %v176 = vld [vmem:[%s171 + $0x10] sm:$0xf]
      %v177 = vld [vmem:[%s171 + $0x14] sm:$0x1]
      %v178 = vld [vmem:[%s171 + $0x18] sm:$0xf]
      %v179 = vld [vmem:[%s171 + $0x1c] sm:$0xf]
      %v180 = vld [vmem:[%s171 + $0x20] sm:$0x1]
      %v181 = vld [vmem:[%s171 + $0x24] sm:$0xf]
      %v182 = vld [vmem:[%s171 + $0x28] sm:$0xf]
      %v183 = vld [vmem:[%s171 + $0x2c] sm:$0x1]
      %v184 = vld [vmem:[%s171 + $0x30] sm:$0xf]
      %v185 = vld [vmem:[%s171 + $0x34] sm:$0xf]
      %v186 = vld [vmem:[%s171 + $0x38] sm:$0x1]
      %v187 = vld [vmem:[%s171 + $0x3c] sm:$0xf]
      %v188 = vld [vmem:[%s171 + $0x40] sm:$0xf]
      %v189 = vld [vmem:[%s171 + $0x44] sm:$0x1]
      %v190 = vld [vmem:[%s171 + $0x48] sm:$0xf]
      %v191 = vld [vmem:[%s171 + $0x4c] sm:$0xf]
      %v192 = vld [vmem:[%s171 + $0x50] sm:$0x1]
      %v193 = vld [vmem:[%s171 + $0x54] sm:$0xf]
      %v194 = vld [vmem:[%s171 + $0x58] sm:$0xf]
      %v195 = vld [vmem:[%s171 + $0x5c] sm:$0x1]
      %v196 = vld [vmem:[%s171 + $0x60] sm:$0xf]
      %v197 = vld [vmem:[%s171 + $0x64] sm:$0xf]
      %v198 = vld [vmem:[%s171 + $0x68] sm:$0x1]
      %v199 = vld [vmem:[%s171 + $0x6c] sm:$0xf]
      %v200 = vld [vmem:[%s171 + $0x70] sm:$0xf]
      %v201 = vld [vmem:[%s171 + $0x74] sm:$0x1]
      %v202 = vld [vmem:[%s171 + $0x78] sm:$0xf]
      %v203 = vld [vmem:[%s171 + $0x7c] sm:$0xf]
      %v204 = vld [vmem:[%s171 + $0x80] sm:$0x1]
      %v205 = vld [vmem:[%s171 + $0x84] sm:$0xf]
      %v206 = vld [vmem:[%s171 + $0x88] sm:$0xf]
      %v207 = vld [vmem:[%s171 + $0x8c] sm:$0x1]
      %v208 = vld [vmem:[%s171 + $0x90] sm:$0xf]
      %v209 = vld [vmem:[%s171 + $0x94] sm:$0xf]
      %v210 = vld [vmem:[%s171 + $0x98] sm:$0x1]
      %v211 = vld [vmem:[%s171 + $0x9c] sm:$0xf]
      %v212 = vld [vmem:[%s171 + $0xa0] sm:$0xf]
      %v213 = vld [vmem:[%s171 + $0xa4] sm:$0x1]
      %v214 = vld [vmem:[%s171 + $0xa8] sm:$0xf]
      %v215 = vld [vmem:[%s171 + $0xac] sm:$0xf]
      %v216 = vld [vmem:[%s171 + $0xb0] sm:$0x1]
      %v217 = vld [vmem:[%s171 + $0xb4] sm:$0xf]
      %v218 = vld [vmem:[%s171 + $0xb8] sm:$0xf]
      %v219 = vld [vmem:[%s171 + $0xbc] sm:$0x1]
      %s220 = sadd.s32 %s168, 1
      %s221 = smul.u32 %s220, 3
      %s222 = smul.addr %s221, 4
      %s223 = scalar_lea.vmem %s156, %s222
      %v224 = vld [vmem:[%s223] sm:$0xf]
      %v225 = vld [vmem:[%s223 + $0x4] sm:$0xf]
      %v226 = vld [vmem:[%s223 + $0x8] sm:$0x1]
      %v227 = vld [vmem:[%s223 + $0xc] sm:$0xf]
      %v228 = vld [vmem:[%s223 + $0x10] sm:$0xf]
      %v229 = vld [vmem:[%s223 + $0x14] sm:$0x1]
      %v230 = vld [vmem:[%s223 + $0x18] sm:$0xf]
      %v231 = vld [vmem:[%s223 + $0x1c] sm:$0xf]
      %v232 = vld [vmem:[%s223 + $0x20] sm:$0x1]
      %v233 = vld [vmem:[%s223 + $0x24] sm:$0xf]
      %v234 = vld [vmem:[%s223 + $0x28] sm:$0xf]
      %v235 = vld [vmem:[%s223 + $0x2c] sm:$0x1]
      %v236 = vld [vmem:[%s223 + $0x30] sm:$0xf]
      %v237 = vld [vmem:[%s223 + $0x34] sm:$0xf]
      %v238 = vld [vmem:[%s223 + $0x38] sm:$0x1]
      %v239 = vld [vmem:[%s223 + $0x3c] sm:$0xf]
      %v240 = vld [vmem:[%s223 + $0x40] sm:$0xf]
      %v241 = vld [vmem:[%s223 + $0x44] sm:$0x1]
      %v242 = vld [vmem:[%s223 + $0x48] sm:$0xf]
      %v243 = vld [vmem:[%s223 + $0x4c] sm:$0xf]
      %v244 = vld [vmem:[%s223 + $0x50] sm:$0x1]
      %v245 = vld [vmem:[%s223 + $0x54] sm:$0xf]
      %v246 = vld [vmem:[%s223 + $0x58] sm:$0xf]
      %v247 = vld [vmem:[%s223 + $0x5c] sm:$0x1]
      %v248 = vld [vmem:[%s223 + $0x60] sm:$0xf]
      %v249 = vld [vmem:[%s223 + $0x64] sm:$0xf]
      %v250 = vld [vmem:[%s223 + $0x68] sm:$0x1]
      %v251 = vld [vmem:[%s223 + $0x6c] sm:$0xf]
      %v252 = vld [vmem:[%s223 + $0x70] sm:$0xf]
      %v253 = vld [vmem:[%s223 + $0x74] sm:$0x1]
      %v254 = vld [vmem:[%s223 + $0x78] sm:$0xf]
      %v255 = vld [vmem:[%s223 + $0x7c] sm:$0xf]
      %v256 = vld [vmem:[%s223 + $0x80] sm:$0x1]
      %v257 = vld [vmem:[%s223 + $0x84] sm:$0xf]
      %v258 = vld [vmem:[%s223 + $0x88] sm:$0xf]
      %v259 = vld [vmem:[%s223 + $0x8c] sm:$0x1]
      %v260 = vld [vmem:[%s223 + $0x90] sm:$0xf]
      %v261 = vld [vmem:[%s223 + $0x94] sm:$0xf]
      %v262 = vld [vmem:[%s223 + $0x98] sm:$0x1]
      %v263 = vld [vmem:[%s223 + $0x9c] sm:$0xf]
      %v264 = vld [vmem:[%s223 + $0xa0] sm:$0xf]
      %v265 = vld [vmem:[%s223 + $0xa4] sm:$0x1]
      %v266 = vld [vmem:[%s223 + $0xa8] sm:$0xf]
      %v267 = vld [vmem:[%s223 + $0xac] sm:$0xf]
      %v268 = vld [vmem:[%s223 + $0xb0] sm:$0x1]
      %v269 = vld [vmem:[%s223 + $0xb4] sm:$0xf]
      %v270 = vld [vmem:[%s223 + $0xb8] sm:$0xf]
      %v271 = vld [vmem:[%s223 + $0xbc] sm:$0x1]
      %s272 = sadd.s32 %s168, 2
      %s273 = smul.u32 %s272, 3
      %s274 = smul.addr %s273, 4
      %s275 = scalar_lea.vmem %s156, %s274
      %v276 = vld [vmem:[%s275] sm:$0xf]
      %v277 = vld [vmem:[%s275 + $0x4] sm:$0xf]
      %v278 = vld [vmem:[%s275 + $0x8] sm:$0x1]
      %v279 = vld [vmem:[%s275 + $0xc] sm:$0xf]
      %v280 = vld [vmem:[%s275 + $0x10] sm:$0xf]
      %v281 = vld [vmem:[%s275 + $0x14] sm:$0x1]
      %v282 = vld [vmem:[%s275 + $0x18] sm:$0xf]
      %v283 = vld [vmem:[%s275 + $0x1c] sm:$0xf]
      %v284 = vld [vmem:[%s275 + $0x20] sm:$0x1]
      %v285 = vld [vmem:[%s275 + $0x24] sm:$0xf]
      %v286 = vld [vmem:[%s275 + $0x28] sm:$0xf]
      %v287 = vld [vmem:[%s275 + $0x2c] sm:$0x1]
      %v288 = vld [vmem:[%s275 + $0x30] sm:$0xf]
      %v289 = vld [vmem:[%s275 + $0x34] sm:$0xf]
      %v290 = vld [vmem:[%s275 + $0x38] sm:$0x1]
      %v291 = vld [vmem:[%s275 + $0x3c] sm:$0xf]
      %v292 = vld [vmem:[%s275 + $0x40] sm:$0xf]
      %v293 = vld [vmem:[%s275 + $0x44] sm:$0x1]
      %v294 = vld [vmem:[%s275 + $0x48] sm:$0xf]
      %v295 = vld [vmem:[%s275 + $0x4c] sm:$0xf]
      %v296 = vld [vmem:[%s275 + $0x50] sm:$0x1]
      %v297 = vld [vmem:[%s275 + $0x54] sm:$0xf]
      %v298 = vld [vmem:[%s275 + $0x58] sm:$0xf]
      %v299 = vld [vmem:[%s275 + $0x5c] sm:$0x1]
      %v300 = vld [vmem:[%s275 + $0x60] sm:$0xf]
      %v301 = vld [vmem:[%s275 + $0x64] sm:$0xf]
      %v302 = vld [vmem:[%s275 + $0x68] sm:$0x1]
      %v303 = vld [vmem:[%s275 + $0x6c] sm:$0xf]
      %v304 = vld [vmem:[%s275 + $0x70] sm:$0xf]
      %v305 = vld [vmem:[%s275 + $0x74] sm:$0x1]
      %v306 = vld [vmem:[%s275 + $0x78] sm:$0xf]
      %v307 = vld [vmem:[%s275 + $0x7c] sm:$0xf]
      %v308 = vld [vmem:[%s275 + $0x80] sm:$0x1]
      %v309 = vld [vmem:[%s275 + $0x84] sm:$0xf]
      %v310 = vld [vmem:[%s275 + $0x88] sm:$0xf]
      %v311 = vld [vmem:[%s275 + $0x8c] sm:$0x1]
      %v312 = vld [vmem:[%s275 + $0x90] sm:$0xf]
      %v313 = vld [vmem:[%s275 + $0x94] sm:$0xf]
      %v314 = vld [vmem:[%s275 + $0x98] sm:$0x1]
      %v315 = vld [vmem:[%s275 + $0x9c] sm:$0xf]
      %v316 = vld [vmem:[%s275 + $0xa0] sm:$0xf]
      %v317 = vld [vmem:[%s275 + $0xa4] sm:$0x1]
      %v318 = vld [vmem:[%s275 + $0xa8] sm:$0xf]
      %v319 = vld [vmem:[%s275 + $0xac] sm:$0xf]
      %v320 = vld [vmem:[%s275 + $0xb0] sm:$0x1]
      %v321 = vld [vmem:[%s275 + $0xb4] sm:$0xf]
      %v322 = vld [vmem:[%s275 + $0xb8] sm:$0xf]
      %v323 = vld [vmem:[%s275 + $0xbc] sm:$0x1]
      %v356 = vunpack.c.l.b16 %v172
      %v357 = vunpack.c.l.b16 %v173
      %v358 = vunpack.c.l.b16 %v175
      %v359 = vunpack.c.l.b16 %v176
      %v360 = vunpack.c.l.b16 %v178
      %v361 = vunpack.c.l.b16 %v179
      %v362 = vunpack.c.l.b16 %v181
      %v363 = vunpack.c.l.b16 %v182
      %v364 = vunpack.c.l.b16 %v184
      %v365 = vunpack.c.l.b16 %v185
      %v366 = vunpack.c.l.b16 %v187
      %v367 = vunpack.c.l.b16 %v188
      %v368 = vunpack.c.l.b16 %v190
      %v369 = vunpack.c.l.b16 %v191
      %v370 = vunpack.c.l.b16 %v193
      %v371 = vunpack.c.l.b16 %v194
      %v372 = vunpack.c.l.b16 %v196
      %v373 = vunpack.c.l.b16 %v197
      %v374 = vunpack.c.l.b16 %v199
      %v375 = vunpack.c.l.b16 %v200
      %v376 = vunpack.c.l.b16 %v202
      %v377 = vunpack.c.l.b16 %v203
      %v378 = vunpack.c.l.b16 %v205
      %v379 = vunpack.c.l.b16 %v206
      %v380 = vunpack.c.l.b16 %v208
      %v381 = vunpack.c.l.b16 %v209
      %v382 = vunpack.c.l.b16 %v211
      %v383 = vunpack.c.l.b16 %v212
      %v384 = vunpack.c.l.b16 %v214
      %v385 = vunpack.c.l.b16 %v215
      %v386 = vunpack.c.l.b16 %v217
      %v387 = vunpack.c.l.b16 %v218
      %v388 = vpack.c.b16 %v357, %v356
      %v389 = vpack.c.b16 %v359, %v358
      %v390 = vpack.c.b16 %v361, %v360
      %v391 = vpack.c.b16 %v363, %v362
      %v392 = vpack.c.b16 %v365, %v364
      %v393 = vpack.c.b16 %v367, %v366
      %v394 = vpack.c.b16 %v369, %v368
      %v395 = vpack.c.b16 %v371, %v370
      %v396 = vpack.c.b16 %v373, %v372
      %v397 = vpack.c.b16 %v375, %v374
      %v398 = vpack.c.b16 %v377, %v376
      %v399 = vpack.c.b16 %v379, %v378
      %v400 = vpack.c.b16 %v381, %v380
      %v401 = vpack.c.b16 %v383, %v382
      %v402 = vpack.c.b16 %v385, %v384
      %v403 = vpack.c.b16 %v387, %v386
      %v420 = vunpack.c.l.b16 %v174
      %v421 = vunpack.c.l.b16 %v177
      %v422 = vunpack.c.l.b16 %v180
      %v423 = vunpack.c.l.b16 %v183
      %v424 = vunpack.c.l.b16 %v186
      %v425 = vunpack.c.l.b16 %v189
      %v426 = vunpack.c.l.b16 %v192
      %v427 = vunpack.c.l.b16 %v195
      %v428 = vunpack.c.l.b16 %v198
      %v429 = vunpack.c.l.b16 %v201
      %v430 = vunpack.c.l.b16 %v204
      %v431 = vunpack.c.l.b16 %v207
      %v432 = vunpack.c.l.b16 %v210
      %v433 = vunpack.c.l.b16 %v213
      %v434 = vunpack.c.l.b16 %v216
      %v435 = vunpack.c.l.b16 %v219
      %v436 = vpack.c.b16 %v420, %v420
      %v437 = vpack.c.b16 %v421, %v421
      %v438 = vpack.c.b16 %v422, %v422
      %v439 = vpack.c.b16 %v423, %v423
      %v440 = vpack.c.b16 %v424, %v424
      %v441 = vpack.c.b16 %v425, %v425
      %v442 = vpack.c.b16 %v426, %v426
      %v443 = vpack.c.b16 %v427, %v427
      %v444 = vpack.c.b16 %v428, %v428
      %v445 = vpack.c.b16 %v429, %v429
      %v446 = vpack.c.b16 %v430, %v430
      %v447 = vpack.c.b16 %v431, %v431
      %v448 = vpack.c.b16 %v432, %v432
      %v449 = vpack.c.b16 %v433, %v433
      %v450 = vpack.c.b16 %v434, %v434
      %v451 = vpack.c.b16 %v435, %v435
      %vm452 = vsmask.f32 7424
      %v454 = vshrl.u32 %v388, 16
      %v456 = vshll.u32 %v388, 16
      %v458 = vrot.slane %v456, 1
      %v459 = vor.u32 %v454, %v458
      %v461 = vshll.u32 %v436, 16
      %v463 = vrot.slane %v461, 1
      %v464 = vsel %vm452, %v459, %v463
      %v466 = vshrl.u32 %v389, 16
      %v468 = vshll.u32 %v389, 16
      %v470 = vrot.slane %v468, 1
      %v471 = vor.u32 %v466, %v470
      %v473 = vshll.u32 %v437, 16
      %v475 = vrot.slane %v473, 1
      %v476 = vsel %vm452, %v471, %v475
      %v478 = vshrl.u32 %v390, 16
      %v480 = vshll.u32 %v390, 16
      %v482 = vrot.slane %v480, 1
      %v483 = vor.u32 %v478, %v482
      %v485 = vshll.u32 %v438, 16
      %v487 = vrot.slane %v485, 1
      %v488 = vsel %vm452, %v483, %v487
      %v490 = vshrl.u32 %v391, 16
      %v492 = vshll.u32 %v391, 16
      %v494 = vrot.slane %v492, 1
      %v495 = vor.u32 %v490, %v494
      %v497 = vshll.u32 %v439, 16
      %v499 = vrot.slane %v497, 1
      %v500 = vsel %vm452, %v495, %v499
      %v502 = vshrl.u32 %v392, 16
      %v504 = vshll.u32 %v392, 16
      %v506 = vrot.slane %v504, 1
      %v507 = vor.u32 %v502, %v506
      %v509 = vshll.u32 %v440, 16
      %v511 = vrot.slane %v509, 1
      %v512 = vsel %vm452, %v507, %v511
      %v514 = vshrl.u32 %v393, 16
      %v516 = vshll.u32 %v393, 16
      %v518 = vrot.slane %v516, 1
      %v519 = vor.u32 %v514, %v518
      %v521 = vshll.u32 %v441, 16
      %v523 = vrot.slane %v521, 1
      %v524 = vsel %vm452, %v519, %v523
      %v526 = vshrl.u32 %v394, 16
      %v528 = vshll.u32 %v394, 16
      %v530 = vrot.slane %v528, 1
      %v531 = vor.u32 %v526, %v530
      %v533 = vshll.u32 %v442, 16
      %v535 = vrot.slane %v533, 1
      %v536 = vsel %vm452, %v531, %v535
      %v538 = vshrl.u32 %v395, 16
      %v540 = vshll.u32 %v395, 16
      %v542 = vrot.slane %v540, 1
      %v543 = vor.u32 %v538, %v542
      %v545 = vshll.u32 %v443, 16
      %v547 = vrot.slane %v545, 1
      %v548 = vsel %vm452, %v543, %v547
      %v550 = vshrl.u32 %v396, 16
      %v552 = vshll.u32 %v396, 16
      %v554 = vrot.slane %v552, 1
      %v555 = vor.u32 %v550, %v554
      %v557 = vshll.u32 %v444, 16
      %v559 = vrot.slane %v557, 1
      %v560 = vsel %vm452, %v555, %v559
      %v562 = vshrl.u32 %v397, 16
      %v564 = vshll.u32 %v397, 16
      %v566 = vrot.slane %v564, 1
      %v567 = vor.u32 %v562, %v566
      %v569 = vshll.u32 %v445, 16
      %v571 = vrot.slane %v569, 1
      %v572 = vsel %vm452, %v567, %v571
      %v574 = vshrl.u32 %v398, 16
      %v576 = vshll.u32 %v398, 16
      %v578 = vrot.slane %v576, 1
      %v579 = vor.u32 %v574, %v578
      %v581 = vshll.u32 %v446, 16
      %v583 = vrot.slane %v581, 1
      %v584 = vsel %vm452, %v579, %v583
      %v586 = vshrl.u32 %v399, 16
      %v588 = vshll.u32 %v399, 16
      %v590 = vrot.slane %v588, 1
      %v591 = vor.u32 %v586, %v590
      %v593 = vshll.u32 %v447, 16
      %v595 = vrot.slane %v593, 1
      %v596 = vsel %vm452, %v591, %v595
      %v598 = vshrl.u32 %v400, 16
      %v600 = vshll.u32 %v400, 16
      %v602 = vrot.slane %v600, 1
      %v603 = vor.u32 %v598, %v602
      %v605 = vshll.u32 %v448, 16
      %v607 = vrot.slane %v605, 1
      %v608 = vsel %vm452, %v603, %v607
      %v610 = vshrl.u32 %v401, 16
      %v612 = vshll.u32 %v401, 16
      %v614 = vrot.slane %v612, 1
      %v615 = vor.u32 %v610, %v614
      %v617 = vshll.u32 %v449, 16
      %v619 = vrot.slane %v617, 1
      %v620 = vsel %vm452, %v615, %v619
      %v622 = vshrl.u32 %v402, 16
      %v624 = vshll.u32 %v402, 16
      %v626 = vrot.slane %v624, 1
      %v627 = vor.u32 %v622, %v626
      %v629 = vshll.u32 %v450, 16
      %v631 = vrot.slane %v629, 1
      %v632 = vsel %vm452, %v627, %v631
      %v634 = vshrl.u32 %v403, 16
      %v636 = vshll.u32 %v403, 16
      %v638 = vrot.slane %v636, 1
      %v639 = vor.u32 %v634, %v638
      %v641 = vshll.u32 %v451, 16
      %v643 = vrot.slane %v641, 1
      %v644 = vsel %vm452, %v639, %v643
      %645 = vrot.lane.b32.xlu0 %v464, 4
      %v646 = vpop.permute.xlu0 %645
      %647 = vrot.lane.b32.xlu0 %v476, 4
      %v648 = vpop.permute.xlu0 %647
      %649 = vrot.lane.b32.xlu0 %v488, 4
      %v650 = vpop.permute.xlu0 %649
      %651 = vrot.lane.b32.xlu0 %v500, 4
      %v652 = vpop.permute.xlu0 %651
      %653 = vrot.lane.b32.xlu0 %v512, 4
      %v654 = vpop.permute.xlu0 %653
      %655 = vrot.lane.b32.xlu0 %v524, 4
      %v656 = vpop.permute.xlu0 %655
      %657 = vrot.lane.b32.xlu0 %v536, 4
      %v658 = vpop.permute.xlu0 %657
      %659 = vrot.lane.b32.xlu0 %v548, 4
      %v660 = vpop.permute.xlu0 %659
      %661 = vrot.lane.b32.xlu0 %v560, 4
      %v662 = vpop.permute.xlu0 %661
      %663 = vrot.lane.b32.xlu0 %v572, 4
      %v664 = vpop.permute.xlu0 %663
      %665 = vrot.lane.b32.xlu0 %v584, 4
      %v666 = vpop.permute.xlu0 %665
      %667 = vrot.lane.b32.xlu0 %v596, 4
      %v668 = vpop.permute.xlu0 %667
      %669 = vrot.lane.b32.xlu0 %v608, 4
      %v670 = vpop.permute.xlu0 %669
      %671 = vrot.lane.b32.xlu0 %v620, 4
      %v672 = vpop.permute.xlu0 %671
      %673 = vrot.lane.b32.xlu0 %v632, 4
      %v674 = vpop.permute.xlu0 %673
      %675 = vrot.lane.b32.xlu0 %v644, 4
      %v676 = vpop.permute.xlu0 %675
      %vm677 = vcmask 1046528
      %v678 = vrot.slane %v388, 1
      %v679 = vrot.slane %v436, 1
      %v680 = vsel %vm677, %v678, %v679
      %v681 = vrot.slane %v389, 1
      %v682 = vrot.slane %v437, 1
      %v683 = vsel %vm677, %v681, %v682
      %v684 = vrot.slane %v390, 1
      %v685 = vrot.slane %v438, 1
      %v686 = vsel %vm677, %v684, %v685
      %v687 = vrot.slane %v391, 1
      %v688 = vrot.slane %v439, 1
      %v689 = vsel %vm677, %v687, %v688
      %v690 = vrot.slane %v392, 1
      %v691 = vrot.slane %v440, 1
      %v692 = vsel %vm677, %v690, %v691
      %v693 = vrot.slane %v393, 1
      %v694 = vrot.slane %v441, 1
      %v695 = vsel %vm677, %v693, %v694
      %v696 = vrot.slane %v394, 1
      %v697 = vrot.slane %v442, 1
      %v698 = vsel %vm677, %v696, %v697
      %v699 = vrot.slane %v395, 1
      %v700 = vrot.slane %v443, 1
      %v701 = vsel %vm677, %v699, %v700
      %v702 = vrot.slane %v396, 1
      %v703 = vrot.slane %v444, 1
      %v704 = vsel %vm677, %v702, %v703
      %v705 = vrot.slane %v397, 1
      %v706 = vrot.slane %v445, 1
      %v707 = vsel %vm677, %v705, %v706
      %v708 = vrot.slane %v398, 1
      %v709 = vrot.slane %v446, 1
      %v710 = vsel %vm677, %v708, %v709
      %v711 = vrot.slane %v399, 1
      %v712 = vrot.slane %v447, 1
      %v713 = vsel %vm677, %v711, %v712
      %v714 = vrot.slane %v400, 1
      %v715 = vrot.slane %v448, 1
      %v716 = vsel %vm677, %v714, %v715
      %v717 = vrot.slane %v401, 1
      %v718 = vrot.slane %v449, 1
      %v719 = vsel %vm677, %v717, %v718
      %v720 = vrot.slane %v402, 1
      %v721 = vrot.slane %v450, 1
      %v722 = vsel %vm677, %v720, %v721
      %v723 = vrot.slane %v403, 1
      %v724 = vrot.slane %v451, 1
      %v725 = vsel %vm677, %v723, %v724
      %726 = vrot.lane.b32.xlu0 %v680, 8
      %v727 = vpop.permute.xlu0 %726
      %728 = vrot.lane.b32.xlu0 %v683, 8
      %v729 = vpop.permute.xlu0 %728
      %730 = vrot.lane.b32.xlu0 %v686, 8
      %v731 = vpop.permute.xlu0 %730
      %732 = vrot.lane.b32.xlu0 %v689, 8
      %v733 = vpop.permute.xlu0 %732
      %734 = vrot.lane.b32.xlu0 %v692, 8
      %v735 = vpop.permute.xlu0 %734
      %736 = vrot.lane.b32.xlu0 %v695, 8
      %v737 = vpop.permute.xlu0 %736
      %738 = vrot.lane.b32.xlu0 %v698, 8
      %v739 = vpop.permute.xlu0 %738
      %740 = vrot.lane.b32.xlu0 %v701, 8
      %v741 = vpop.permute.xlu0 %740
      %742 = vrot.lane.b32.xlu0 %v704, 8
      %v743 = vpop.permute.xlu0 %742
      %744 = vrot.lane.b32.xlu0 %v707, 8
      %v745 = vpop.permute.xlu0 %744
      %746 = vrot.lane.b32.xlu0 %v710, 8
      %v747 = vpop.permute.xlu0 %746
      %748 = vrot.lane.b32.xlu0 %v713, 8
      %v749 = vpop.permute.xlu0 %748
      %750 = vrot.lane.b32.xlu0 %v716, 8
      %v751 = vpop.permute.xlu0 %750
      %752 = vrot.lane.b32.xlu0 %v719, 8
      %v753 = vpop.permute.xlu0 %752
      %754 = vrot.lane.b32.xlu0 %v722, 8
      %v755 = vpop.permute.xlu0 %754
      %756 = vrot.lane.b32.xlu0 %v725, 8
      %v757 = vpop.permute.xlu0 %756
      %v790 = vunpack.c.l.b16 %v224
      %v791 = vunpack.c.l.b16 %v225
      %v792 = vunpack.c.l.b16 %v227
      %v793 = vunpack.c.l.b16 %v228
      %v794 = vunpack.c.l.b16 %v230
      %v795 = vunpack.c.l.b16 %v231
      %v796 = vunpack.c.l.b16 %v233
      %v797 = vunpack.c.l.b16 %v234
      %v798 = vunpack.c.l.b16 %v236
      %v799 = vunpack.c.l.b16 %v237
      %v800 = vunpack.c.l.b16 %v239
      %v801 = vunpack.c.l.b16 %v240
      %v802 = vunpack.c.l.b16 %v242
      %v803 = vunpack.c.l.b16 %v243
      %v804 = vunpack.c.l.b16 %v245
      %v805 = vunpack.c.l.b16 %v246
      %v806 = vunpack.c.l.b16 %v248
      %v807 = vunpack.c.l.b16 %v249
      %v808 = vunpack.c.l.b16 %v251
      %v809 = vunpack.c.l.b16 %v252
      %v810 = vunpack.c.l.b16 %v254
      %v811 = vunpack.c.l.b16 %v255
      %v812 = vunpack.c.l.b16 %v257
      %v813 = vunpack.c.l.b16 %v258
      %v814 = vunpack.c.l.b16 %v260
      %v815 = vunpack.c.l.b16 %v261
      %v816 = vunpack.c.l.b16 %v263
      %v817 = vunpack.c.l.b16 %v264
      %v818 = vunpack.c.l.b16 %v266
      %v819 = vunpack.c.l.b16 %v267
      %v820 = vunpack.c.l.b16 %v269
      %v821 = vunpack.c.l.b16 %v270
      %v822 = vpack.c.b16 %v791, %v790
      %v823 = vpack.c.b16 %v793, %v792
      %v824 = vpack.c.b16 %v795, %v794
      %v825 = vpack.c.b16 %v797, %v796
      %v826 = vpack.c.b16 %v799, %v798
      %v827 = vpack.c.b16 %v801, %v800
      %v828 = vpack.c.b16 %v803, %v802
      %v829 = vpack.c.b16 %v805, %v804
      %v830 = vpack.c.b16 %v807, %v806
      %v831 = vpack.c.b16 %v809, %v808
      %v832 = vpack.c.b16 %v811, %v810
      %v833 = vpack.c.b16 %v813, %v812
      %v834 = vpack.c.b16 %v815, %v814
      %v835 = vpack.c.b16 %v817, %v816
      %v836 = vpack.c.b16 %v819, %v818
      %v837 = vpack.c.b16 %v821, %v820
      %838 = vrot.lane.b32.xlu0 %v822, 12
      %v839 = vpop.permute.xlu0 %838
      %840 = vrot.lane.b32.xlu0 %v823, 12
      %v841 = vpop.permute.xlu0 %840
      %842 = vrot.lane.b32.xlu0 %v824, 12
      %v843 = vpop.permute.xlu0 %842
      %844 = vrot.lane.b32.xlu0 %v825, 12
      %v845 = vpop.permute.xlu0 %844
      %846 = vrot.lane.b32.xlu0 %v826, 12
      %v847 = vpop.permute.xlu0 %846
      %848 = vrot.lane.b32.xlu0 %v827, 12
      %v849 = vpop.permute.xlu0 %848
      %850 = vrot.lane.b32.xlu0 %v828, 12
      %v851 = vpop.permute.xlu0 %850
      %852 = vrot.lane.b32.xlu0 %v829, 12
      %v853 = vpop.permute.xlu0 %852
      %854 = vrot.lane.b32.xlu0 %v830, 12
      %v855 = vpop.permute.xlu0 %854
      %856 = vrot.lane.b32.xlu0 %v831, 12
      %v857 = vpop.permute.xlu0 %856
      %858 = vrot.lane.b32.xlu0 %v832, 12
      %v859 = vpop.permute.xlu0 %858
      %860 = vrot.lane.b32.xlu0 %v833, 12
      %v861 = vpop.permute.xlu0 %860
      %862 = vrot.lane.b32.xlu0 %v834, 12
      %v863 = vpop.permute.xlu0 %862
      %864 = vrot.lane.b32.xlu0 %v835, 12
      %v865 = vpop.permute.xlu0 %864
      %866 = vrot.lane.b32.xlu0 %v836, 12
      %v867 = vpop.permute.xlu0 %866
      %868 = vrot.lane.b32.xlu0 %v837, 12
      %v869 = vpop.permute.xlu0 %868
      %v886 = vunpack.c.l.b16 %v226
      %v887 = vunpack.c.l.b16 %v229
      %v888 = vunpack.c.l.b16 %v232
      %v889 = vunpack.c.l.b16 %v235
      %v890 = vunpack.c.l.b16 %v238
      %v891 = vunpack.c.l.b16 %v241
      %v892 = vunpack.c.l.b16 %v244
      %v893 = vunpack.c.l.b16 %v247
      %v894 = vunpack.c.l.b16 %v250
      %v895 = vunpack.c.l.b16 %v253
      %v896 = vunpack.c.l.b16 %v256
      %v897 = vunpack.c.l.b16 %v259
      %v898 = vunpack.c.l.b16 %v262
      %v899 = vunpack.c.l.b16 %v265
      %v900 = vunpack.c.l.b16 %v268
      %v901 = vunpack.c.l.b16 %v271
      %v902 = vpack.c.b16 %v886, %v886
      %v903 = vpack.c.b16 %v887, %v887
      %v904 = vpack.c.b16 %v888, %v888
      %v905 = vpack.c.b16 %v889, %v889
      %v906 = vpack.c.b16 %v890, %v890
      %v907 = vpack.c.b16 %v891, %v891
      %v908 = vpack.c.b16 %v892, %v892
      %v909 = vpack.c.b16 %v893, %v893
      %v910 = vpack.c.b16 %v894, %v894
      %v911 = vpack.c.b16 %v895, %v895
      %v912 = vpack.c.b16 %v896, %v896
      %v913 = vpack.c.b16 %v897, %v897
      %v914 = vpack.c.b16 %v898, %v898
      %v915 = vpack.c.b16 %v899, %v899
      %v916 = vpack.c.b16 %v900, %v900
      %v917 = vpack.c.b16 %v901, %v901
      %v919 = vshrl.u32 %v822, 16
      %v921 = vshll.u32 %v822, 16
      %v923 = vrot.slane %v921, 1
      %v924 = vor.u32 %v919, %v923
      %v926 = vshll.u32 %v902, 16
      %v928 = vrot.slane %v926, 1
      %v929 = vsel %vm452, %v924, %v928
      %v931 = vshrl.u32 %v823, 16
      %v933 = vshll.u32 %v823, 16
      %v935 = vrot.slane %v933, 1
      %v936 = vor.u32 %v931, %v935
      %v938 = vshll.u32 %v903, 16
      %v940 = vrot.slane %v938, 1
      %v941 = vsel %vm452, %v936, %v940
      %v943 = vshrl.u32 %v824, 16
      %v945 = vshll.u32 %v824, 16
      %v947 = vrot.slane %v945, 1
      %v948 = vor.u32 %v943, %v947
      %v950 = vshll.u32 %v904, 16
      %v952 = vrot.slane %v950, 1
      %v953 = vsel %vm452, %v948, %v952
      %v955 = vshrl.u32 %v825, 16
      %v957 = vshll.u32 %v825, 16
      %v959 = vrot.slane %v957, 1
      %v960 = vor.u32 %v955, %v959
      %v962 = vshll.u32 %v905, 16
      %v964 = vrot.slane %v962, 1
      %v965 = vsel %vm452, %v960, %v964
      %v967 = vshrl.u32 %v826, 16
      %v969 = vshll.u32 %v826, 16
      %v971 = vrot.slane %v969, 1
      %v972 = vor.u32 %v967, %v971
      %v974 = vshll.u32 %v906, 16
      %v976 = vrot.slane %v974, 1
      %v977 = vsel %vm452, %v972, %v976
      %v979 = vshrl.u32 %v827, 16
      %v981 = vshll.u32 %v827, 16
      %v983 = vrot.slane %v981, 1
      %v984 = vor.u32 %v979, %v983
      %v986 = vshll.u32 %v907, 16
      %v988 = vrot.slane %v986, 1
      %v989 = vsel %vm452, %v984, %v988
      %v991 = vshrl.u32 %v828, 16
      %v993 = vshll.u32 %v828, 16
      %v995 = vrot.slane %v993, 1
      %v996 = vor.u32 %v991, %v995
      %v998 = vshll.u32 %v908, 16
      %v1000 = vrot.slane %v998, 1
      %v1001 = vsel %vm452, %v996, %v1000
      %v1003 = vshrl.u32 %v829, 16
      %v1005 = vshll.u32 %v829, 16
      %v1007 = vrot.slane %v1005, 1
      %v1008 = vor.u32 %v1003, %v1007
      %v1010 = vshll.u32 %v909, 16
      %v1012 = vrot.slane %v1010, 1
      %v1013 = vsel %vm452, %v1008, %v1012
      %v1015 = vshrl.u32 %v830, 16
      %v1017 = vshll.u32 %v830, 16
      %v1019 = vrot.slane %v1017, 1
      %v1020 = vor.u32 %v1015, %v1019
      %v1022 = vshll.u32 %v910, 16
      %v1024 = vrot.slane %v1022, 1
      %v1025 = vsel %vm452, %v1020, %v1024
      %v1027 = vshrl.u32 %v831, 16
      %v1029 = vshll.u32 %v831, 16
      %v1031 = vrot.slane %v1029, 1
      %v1032 = vor.u32 %v1027, %v1031
      %v1034 = vshll.u32 %v911, 16
      %v1036 = vrot.slane %v1034, 1
      %v1037 = vsel %vm452, %v1032, %v1036
      %v1039 = vshrl.u32 %v832, 16
      %v1041 = vshll.u32 %v832, 16
      %v1043 = vrot.slane %v1041, 1
      %v1044 = vor.u32 %v1039, %v1043
      %v1046 = vshll.u32 %v912, 16
      %v1048 = vrot.slane %v1046, 1
      %v1049 = vsel %vm452, %v1044, %v1048
      %v1051 = vshrl.u32 %v833, 16
      %v1053 = vshll.u32 %v833, 16
      %v1055 = vrot.slane %v1053, 1
      %v1056 = vor.u32 %v1051, %v1055
      %v1058 = vshll.u32 %v913, 16
      %v1060 = vrot.slane %v1058, 1
      %v1061 = vsel %vm452, %v1056, %v1060
      %v1063 = vshrl.u32 %v834, 16
      %v1065 = vshll.u32 %v834, 16
      %v1067 = vrot.slane %v1065, 1
      %v1068 = vor.u32 %v1063, %v1067
      %v1070 = vshll.u32 %v914, 16
      %v1072 = vrot.slane %v1070, 1
      %v1073 = vsel %vm452, %v1068, %v1072
      %v1075 = vshrl.u32 %v835, 16
      %v1077 = vshll.u32 %v835, 16
      %v1079 = vrot.slane %v1077, 1
      %v1080 = vor.u32 %v1075, %v1079
      %v1082 = vshll.u32 %v915, 16
      %v1084 = vrot.slane %v1082, 1
      %v1085 = vsel %vm452, %v1080, %v1084
      %v1087 = vshrl.u32 %v836, 16
      %v1089 = vshll.u32 %v836, 16
      %v1091 = vrot.slane %v1089, 1
      %v1092 = vor.u32 %v1087, %v1091
      %v1094 = vshll.u32 %v916, 16
      %v1096 = vrot.slane %v1094, 1
      %v1097 = vsel %vm452, %v1092, %v1096
      %v1099 = vshrl.u32 %v837, 16
      %v1101 = vshll.u32 %v837, 16
      %v1103 = vrot.slane %v1101, 1
      %v1104 = vor.u32 %v1099, %v1103
      %v1106 = vshll.u32 %v917, 16
      %v1108 = vrot.slane %v1106, 1
      %v1109 = vsel %vm452, %v1104, %v1108
      %1110 = vrot.lane.b32.xlu0 %v929, 16
      %v1111 = vpop.permute.xlu0 %1110
      %1112 = vrot.lane.b32.xlu0 %v941, 16
      %v1113 = vpop.permute.xlu0 %1112
      %1114 = vrot.lane.b32.xlu0 %v953, 16
      %v1115 = vpop.permute.xlu0 %1114
      %1116 = vrot.lane.b32.xlu0 %v965, 16
      %v1117 = vpop.permute.xlu0 %1116
      %1118 = vrot.lane.b32.xlu0 %v977, 16
      %v1119 = vpop.permute.xlu0 %1118
      %1120 = vrot.lane.b32.xlu0 %v989, 16
      %v1121 = vpop.permute.xlu0 %1120
      %1122 = vrot.lane.b32.xlu0 %v1001, 16
      %v1123 = vpop.permute.xlu0 %1122
      %1124 = vrot.lane.b32.xlu0 %v1013, 16
      %v1125 = vpop.permute.xlu0 %1124
      %1126 = vrot.lane.b32.xlu0 %v1025, 16
      %v1127 = vpop.permute.xlu0 %1126
      %1128 = vrot.lane.b32.xlu0 %v1037, 16
      %v1129 = vpop.permute.xlu0 %1128
      %1130 = vrot.lane.b32.xlu0 %v1049, 16
      %v1131 = vpop.permute.xlu0 %1130
      %1132 = vrot.lane.b32.xlu0 %v1061, 16
      %v1133 = vpop.permute.xlu0 %1132
      %1134 = vrot.lane.b32.xlu0 %v1073, 16
      %v1135 = vpop.permute.xlu0 %1134
      %1136 = vrot.lane.b32.xlu0 %v1085, 16
      %v1137 = vpop.permute.xlu0 %1136
      %1138 = vrot.lane.b32.xlu0 %v1097, 16
      %v1139 = vpop.permute.xlu0 %1138
      %1140 = vrot.lane.b32.xlu0 %v1109, 16
      %v1141 = vpop.permute.xlu0 %1140
      %v1142 = vrot.slane %v822, 1
      %v1143 = vrot.slane %v902, 1
      %v1144 = vsel %vm677, %v1142, %v1143
      %v1145 = vrot.slane %v823, 1
      %v1146 = vrot.slane %v903, 1
      %v1147 = vsel %vm677, %v1145, %v1146
      %v1148 = vrot.slane %v824, 1
      %v1149 = vrot.slane %v904, 1
      %v1150 = vsel %vm677, %v1148, %v1149
      %v1151 = vrot.slane %v825, 1
      %v1152 = vrot.slane %v905, 1
      %v1153 = vsel %vm677, %v1151, %v1152
      %v1154 = vrot.slane %v826, 1
      %v1155 = vrot.slane %v906, 1
      %v1156 = vsel %vm677, %v1154, %v1155
      %v1157 = vrot.slane %v827, 1
      %v1158 = vrot.slane %v907, 1
      %v1159 = vsel %vm677, %v1157, %v1158
      %v1160 = vrot.slane %v828, 1
      %v1161 = vrot.slane %v908, 1
      %v1162 = vsel %vm677, %v1160, %v1161
      %v1163 = vrot.slane %v829, 1
      %v1164 = vrot.slane %v909, 1
      %v1165 = vsel %vm677, %v1163, %v1164
      %v1166 = vrot.slane %v830, 1
      %v1167 = vrot.slane %v910, 1
      %v1168 = vsel %vm677, %v1166, %v1167
      %v1169 = vrot.slane %v831, 1
      %v1170 = vrot.slane %v911, 1
      %v1171 = vsel %vm677, %v1169, %v1170
      %v1172 = vrot.slane %v832, 1
      %v1173 = vrot.slane %v912, 1
      %v1174 = vsel %vm677, %v1172, %v1173
      %v1175 = vrot.slane %v833, 1
      %v1176 = vrot.slane %v913, 1
      %v1177 = vsel %vm677, %v1175, %v1176
      %v1178 = vrot.slane %v834, 1
      %v1179 = vrot.slane %v914, 1
      %v1180 = vsel %vm677, %v1178, %v1179
      %v1181 = vrot.slane %v835, 1
      %v1182 = vrot.slane %v915, 1
      %v1183 = vsel %vm677, %v1181, %v1182
      %v1184 = vrot.slane %v836, 1
      %v1185 = vrot.slane %v916, 1
      %v1186 = vsel %vm677, %v1184, %v1185
      %v1187 = vrot.slane %v837, 1
      %v1188 = vrot.slane %v917, 1
      %v1189 = vsel %vm677, %v1187, %v1188
      %1190 = vrot.lane.b32.xlu0 %v1144, 20
      %v1191 = vpop.permute.xlu0 %1190
      %1192 = vrot.lane.b32.xlu0 %v1147, 20
      %v1193 = vpop.permute.xlu0 %1192
      %1194 = vrot.lane.b32.xlu0 %v1150, 20
      %v1195 = vpop.permute.xlu0 %1194
      %1196 = vrot.lane.b32.xlu0 %v1153, 20
      %v1197 = vpop.permute.xlu0 %1196
      %1198 = vrot.lane.b32.xlu0 %v1156, 20
      %v1199 = vpop.permute.xlu0 %1198
      %1200 = vrot.lane.b32.xlu0 %v1159, 20
      %v1201 = vpop.permute.xlu0 %1200
      %1202 = vrot.lane.b32.xlu0 %v1162, 20
      %v1203 = vpop.permute.xlu0 %1202
      %1204 = vrot.lane.b32.xlu0 %v1165, 20
      %v1205 = vpop.permute.xlu0 %1204
      %1206 = vrot.lane.b32.xlu0 %v1168, 20
      %v1207 = vpop.permute.xlu0 %1206
      %1208 = vrot.lane.b32.xlu0 %v1171, 20
      %v1209 = vpop.permute.xlu0 %1208
      %1210 = vrot.lane.b32.xlu0 %v1174, 20
      %v1211 = vpop.permute.xlu0 %1210
      %1212 = vrot.lane.b32.xlu0 %v1177, 20
      %v1213 = vpop.permute.xlu0 %1212
      %1214 = vrot.lane.b32.xlu0 %v1180, 20
      %v1215 = vpop.permute.xlu0 %1214
      %1216 = vrot.lane.b32.xlu0 %v1183, 20
      %v1217 = vpop.permute.xlu0 %1216
      %1218 = vrot.lane.b32.xlu0 %v1186, 20
      %v1219 = vpop.permute.xlu0 %1218
      %1220 = vrot.lane.b32.xlu0 %v1189, 20
      %v1221 = vpop.permute.xlu0 %1220
      %v1254 = vunpack.c.l.b16 %v276
      %v1255 = vunpack.c.l.b16 %v277
      %v1256 = vunpack.c.l.b16 %v279
      %v1257 = vunpack.c.l.b16 %v280
      %v1258 = vunpack.c.l.b16 %v282
      %v1259 = vunpack.c.l.b16 %v283
      %v1260 = vunpack.c.l.b16 %v285
      %v1261 = vunpack.c.l.b16 %v286
      %v1262 = vunpack.c.l.b16 %v288
      %v1263 = vunpack.c.l.b16 %v289
      %v1264 = vunpack.c.l.b16 %v291
      %v1265 = vunpack.c.l.b16 %v292
      %v1266 = vunpack.c.l.b16 %v294
      %v1267 = vunpack.c.l.b16 %v295
      %v1268 = vunpack.c.l.b16 %v297
      %v1269 = vunpack.c.l.b16 %v298
      %v1270 = vunpack.c.l.b16 %v300
      %v1271 = vunpack.c.l.b16 %v301
      %v1272 = vunpack.c.l.b16 %v303
      %v1273 = vunpack.c.l.b16 %v304
      %v1274 = vunpack.c.l.b16 %v306
      %v1275 = vunpack.c.l.b16 %v307
      %v1276 = vunpack.c.l.b16 %v309
      %v1277 = vunpack.c.l.b16 %v310
      %v1278 = vunpack.c.l.b16 %v312
      %v1279 = vunpack.c.l.b16 %v313
      %v1280 = vunpack.c.l.b16 %v315
      %v1281 = vunpack.c.l.b16 %v316
      %v1282 = vunpack.c.l.b16 %v318
      %v1283 = vunpack.c.l.b16 %v319
      %v1284 = vunpack.c.l.b16 %v321
      %v1285 = vunpack.c.l.b16 %v322
      %v1286 = vpack.c.b16 %v1255, %v1254
      %v1287 = vpack.c.b16 %v1257, %v1256
      %v1288 = vpack.c.b16 %v1259, %v1258
      %v1289 = vpack.c.b16 %v1261, %v1260
      %v1290 = vpack.c.b16 %v1263, %v1262
      %v1291 = vpack.c.b16 %v1265, %v1264
      %v1292 = vpack.c.b16 %v1267, %v1266
      %v1293 = vpack.c.b16 %v1269, %v1268
      %v1294 = vpack.c.b16 %v1271, %v1270
      %v1295 = vpack.c.b16 %v1273, %v1272
      %v1296 = vpack.c.b16 %v1275, %v1274
      %v1297 = vpack.c.b16 %v1277, %v1276
      %v1298 = vpack.c.b16 %v1279, %v1278
      %v1299 = vpack.c.b16 %v1281, %v1280
      %v1300 = vpack.c.b16 %v1283, %v1282
      %v1301 = vpack.c.b16 %v1285, %v1284
      %1302 = vrot.lane.b32.xlu0 %v1286, 24
      %v1303 = vpop.permute.xlu0 %1302
      %1304 = vrot.lane.b32.xlu0 %v1287, 24
      %v1305 = vpop.permute.xlu0 %1304
      %1306 = vrot.lane.b32.xlu0 %v1288, 24
      %v1307 = vpop.permute.xlu0 %1306
      %1308 = vrot.lane.b32.xlu0 %v1289, 24
      %v1309 = vpop.permute.xlu0 %1308
      %1310 = vrot.lane.b32.xlu0 %v1290, 24
      %v1311 = vpop.permute.xlu0 %1310
      %1312 = vrot.lane.b32.xlu0 %v1291, 24
      %v1313 = vpop.permute.xlu0 %1312
      %1314 = vrot.lane.b32.xlu0 %v1292, 24
      %v1315 = vpop.permute.xlu0 %1314
      %1316 = vrot.lane.b32.xlu0 %v1293, 24
      %v1317 = vpop.permute.xlu0 %1316
      %1318 = vrot.lane.b32.xlu0 %v1294, 24
      %v1319 = vpop.permute.xlu0 %1318
      %1320 = vrot.lane.b32.xlu0 %v1295, 24
      %v1321 = vpop.permute.xlu0 %1320
      %1322 = vrot.lane.b32.xlu0 %v1296, 24
      %v1323 = vpop.permute.xlu0 %1322
      %1324 = vrot.lane.b32.xlu0 %v1297, 24
      %v1325 = vpop.permute.xlu0 %1324
      %1326 = vrot.lane.b32.xlu0 %v1298, 24
      %v1327 = vpop.permute.xlu0 %1326
      %1328 = vrot.lane.b32.xlu0 %v1299, 24
      %v1329 = vpop.permute.xlu0 %1328
      %1330 = vrot.lane.b32.xlu0 %v1300, 24
      %v1331 = vpop.permute.xlu0 %1330
      %1332 = vrot.lane.b32.xlu0 %v1301, 24
      %v1333 = vpop.permute.xlu0 %1332
      %v1350 = vunpack.c.l.b16 %v278
      %v1351 = vunpack.c.l.b16 %v281
      %v1352 = vunpack.c.l.b16 %v284
      %v1353 = vunpack.c.l.b16 %v287
      %v1354 = vunpack.c.l.b16 %v290
      %v1355 = vunpack.c.l.b16 %v293
      %v1356 = vunpack.c.l.b16 %v296
      %v1357 = vunpack.c.l.b16 %v299
      %v1358 = vunpack.c.l.b16 %v302
      %v1359 = vunpack.c.l.b16 %v305
      %v1360 = vunpack.c.l.b16 %v308
      %v1361 = vunpack.c.l.b16 %v311
      %v1362 = vunpack.c.l.b16 %v314
      %v1363 = vunpack.c.l.b16 %v317
      %v1364 = vunpack.c.l.b16 %v320
      %v1365 = vunpack.c.l.b16 %v323
      %v1366 = vpack.c.b16 %v1350, %v1350
      %v1367 = vpack.c.b16 %v1351, %v1351
      %v1368 = vpack.c.b16 %v1352, %v1352
      %v1369 = vpack.c.b16 %v1353, %v1353
      %v1370 = vpack.c.b16 %v1354, %v1354
      %v1371 = vpack.c.b16 %v1355, %v1355
      %v1372 = vpack.c.b16 %v1356, %v1356
      %v1373 = vpack.c.b16 %v1357, %v1357
      %v1374 = vpack.c.b16 %v1358, %v1358
      %v1375 = vpack.c.b16 %v1359, %v1359
      %v1376 = vpack.c.b16 %v1360, %v1360
      %v1377 = vpack.c.b16 %v1361, %v1361
      %v1378 = vpack.c.b16 %v1362, %v1362
      %v1379 = vpack.c.b16 %v1363, %v1363
      %v1380 = vpack.c.b16 %v1364, %v1364
      %v1381 = vpack.c.b16 %v1365, %v1365
      %v1383 = vshrl.u32 %v1286, 16
      %v1385 = vshll.u32 %v1286, 16
      %v1387 = vrot.slane %v1385, 1
      %v1388 = vor.u32 %v1383, %v1387
      %v1390 = vshll.u32 %v1366, 16
      %v1392 = vrot.slane %v1390, 1
      %v1393 = vsel %vm452, %v1388, %v1392
      %v1395 = vshrl.u32 %v1287, 16
      %v1397 = vshll.u32 %v1287, 16
      %v1399 = vrot.slane %v1397, 1
      %v1400 = vor.u32 %v1395, %v1399
      %v1402 = vshll.u32 %v1367, 16
      %v1404 = vrot.slane %v1402, 1
      %v1405 = vsel %vm452, %v1400, %v1404
      %v1407 = vshrl.u32 %v1288, 16
      %v1409 = vshll.u32 %v1288, 16
      %v1411 = vrot.slane %v1409, 1
      %v1412 = vor.u32 %v1407, %v1411
      %v1414 = vshll.u32 %v1368, 16
      %v1416 = vrot.slane %v1414, 1
      %v1417 = vsel %vm452, %v1412, %v1416
      %v1419 = vshrl.u32 %v1289, 16
      %v1421 = vshll.u32 %v1289, 16
      %v1423 = vrot.slane %v1421, 1
      %v1424 = vor.u32 %v1419, %v1423
      %v1426 = vshll.u32 %v1369, 16
      %v1428 = vrot.slane %v1426, 1
      %v1429 = vsel %vm452, %v1424, %v1428
      %v1431 = vshrl.u32 %v1290, 16
      %v1433 = vshll.u32 %v1290, 16
      %v1435 = vrot.slane %v1433, 1
      %v1436 = vor.u32 %v1431, %v1435
      %v1438 = vshll.u32 %v1370, 16
      %v1440 = vrot.slane %v1438, 1
      %v1441 = vsel %vm452, %v1436, %v1440
      %v1443 = vshrl.u32 %v1291, 16
      %v1445 = vshll.u32 %v1291, 16
      %v1447 = vrot.slane %v1445, 1
      %v1448 = vor.u32 %v1443, %v1447
      %v1450 = vshll.u32 %v1371, 16
      %v1452 = vrot.slane %v1450, 1
      %v1453 = vsel %vm452, %v1448, %v1452
      %v1455 = vshrl.u32 %v1292, 16
      %v1457 = vshll.u32 %v1292, 16
      %v1459 = vrot.slane %v1457, 1
      %v1460 = vor.u32 %v1455, %v1459
      %v1462 = vshll.u32 %v1372, 16
      %v1464 = vrot.slane %v1462, 1
      %v1465 = vsel %vm452, %v1460, %v1464
      %v1467 = vshrl.u32 %v1293, 16
      %v1469 = vshll.u32 %v1293, 16
      %v1471 = vrot.slane %v1469, 1
      %v1472 = vor.u32 %v1467, %v1471
      %v1474 = vshll.u32 %v1373, 16
      %v1476 = vrot.slane %v1474, 1
      %v1477 = vsel %vm452, %v1472, %v1476
      %v1479 = vshrl.u32 %v1294, 16
      %v1481 = vshll.u32 %v1294, 16
      %v1483 = vrot.slane %v1481, 1
      %v1484 = vor.u32 %v1479, %v1483
      %v1486 = vshll.u32 %v1374, 16
      %v1488 = vrot.slane %v1486, 1
      %v1489 = vsel %vm452, %v1484, %v1488
      %v1491 = vshrl.u32 %v1295, 16
      %v1493 = vshll.u32 %v1295, 16
      %v1495 = vrot.slane %v1493, 1
      %v1496 = vor.u32 %v1491, %v1495
      %v1498 = vshll.u32 %v1375, 16
      %v1500 = vrot.slane %v1498, 1
      %v1501 = vsel %vm452, %v1496, %v1500
      %v1503 = vshrl.u32 %v1296, 16
      %v1505 = vshll.u32 %v1296, 16
      %v1507 = vrot.slane %v1505, 1
      %v1508 = vor.u32 %v1503, %v1507
      %v1510 = vshll.u32 %v1376, 16
      %v1512 = vrot.slane %v1510, 1
      %v1513 = vsel %vm452, %v1508, %v1512
      %v1515 = vshrl.u32 %v1297, 16
      %v1517 = vshll.u32 %v1297, 16
      %v1519 = vrot.slane %v1517, 1
      %v1520 = vor.u32 %v1515, %v1519
      %v1522 = vshll.u32 %v1377, 16
      %v1524 = vrot.slane %v1522, 1
      %v1525 = vsel %vm452, %v1520, %v1524
      %v1527 = vshrl.u32 %v1298, 16
      %v1529 = vshll.u32 %v1298, 16
      %v1531 = vrot.slane %v1529, 1
      %v1532 = vor.u32 %v1527, %v1531
      %v1534 = vshll.u32 %v1378, 16
      %v1536 = vrot.slane %v1534, 1
      %v1537 = vsel %vm452, %v1532, %v1536
      %v1539 = vshrl.u32 %v1299, 16
      %v1541 = vshll.u32 %v1299, 16
      %v1543 = vrot.slane %v1541, 1
      %v1544 = vor.u32 %v1539, %v1543
      %v1546 = vshll.u32 %v1379, 16
      %v1548 = vrot.slane %v1546, 1
      %v1549 = vsel %vm452, %v1544, %v1548
      %v1551 = vshrl.u32 %v1300, 16
      %v1553 = vshll.u32 %v1300, 16
      %v1555 = vrot.slane %v1553, 1
      %v1556 = vor.u32 %v1551, %v1555
      %v1558 = vshll.u32 %v1380, 16
      %v1560 = vrot.slane %v1558, 1
      %v1561 = vsel %vm452, %v1556, %v1560
      %v1563 = vshrl.u32 %v1301, 16
      %v1565 = vshll.u32 %v1301, 16
      %v1567 = vrot.slane %v1565, 1
      %v1568 = vor.u32 %v1563, %v1567
      %v1570 = vshll.u32 %v1381, 16
      %v1572 = vrot.slane %v1570, 1
      %v1573 = vsel %vm452, %v1568, %v1572
      %1574 = vrot.lane.b32.xlu0 %v1393, 28
      %v1575 = vpop.permute.xlu0 %1574
      %1576 = vrot.lane.b32.xlu0 %v1405, 28
      %v1577 = vpop.permute.xlu0 %1576
      %1578 = vrot.lane.b32.xlu0 %v1417, 28
      %v1579 = vpop.permute.xlu0 %1578
      %1580 = vrot.lane.b32.xlu0 %v1429, 28
      %v1581 = vpop.permute.xlu0 %1580
      %1582 = vrot.lane.b32.xlu0 %v1441, 28
      %v1583 = vpop.permute.xlu0 %1582
      %1584 = vrot.lane.b32.xlu0 %v1453, 28
      %v1585 = vpop.permute.xlu0 %1584
      %1586 = vrot.lane.b32.xlu0 %v1465, 28
      %v1587 = vpop.permute.xlu0 %1586
      %1588 = vrot.lane.b32.xlu0 %v1477, 28
      %v1589 = vpop.permute.xlu0 %1588
      %1590 = vrot.lane.b32.xlu0 %v1489, 28
      %v1591 = vpop.permute.xlu0 %1590
      %1592 = vrot.lane.b32.xlu0 %v1501, 28
      %v1593 = vpop.permute.xlu0 %1592
      %1594 = vrot.lane.b32.xlu0 %v1513, 28
      %v1595 = vpop.permute.xlu0 %1594
      %1596 = vrot.lane.b32.xlu0 %v1525, 28
      %v1597 = vpop.permute.xlu0 %1596
      %1598 = vrot.lane.b32.xlu0 %v1537, 28
      %v1599 = vpop.permute.xlu0 %1598
      %1600 = vrot.lane.b32.xlu0 %v1549, 28
      %v1601 = vpop.permute.xlu0 %1600
      %1602 = vrot.lane.b32.xlu0 %v1561, 28
      %v1603 = vpop.permute.xlu0 %1602
      %1604 = vrot.lane.b32.xlu0 %v1573, 28
      %v1605 = vpop.permute.xlu0 %1604
      %v1606 = vrot.slane %v1286, 1
      %v1607 = vrot.slane %v1366, 1
      %v1608 = vsel %vm677, %v1606, %v1607
      %v1609 = vrot.slane %v1287, 1
      %v1610 = vrot.slane %v1367, 1
      %v1611 = vsel %vm677, %v1609, %v1610
      %v1612 = vrot.slane %v1288, 1
      %v1613 = vrot.slane %v1368, 1
      %v1614 = vsel %vm677, %v1612, %v1613
      %v1615 = vrot.slane %v1289, 1
      %v1616 = vrot.slane %v1369, 1
      %v1617 = vsel %vm677, %v1615, %v1616
      %v1618 = vrot.slane %v1290, 1
      %v1619 = vrot.slane %v1370, 1
      %v1620 = vsel %vm677, %v1618, %v1619
      %v1621 = vrot.slane %v1291, 1
      %v1622 = vrot.slane %v1371, 1
      %v1623 = vsel %vm677, %v1621, %v1622
      %v1624 = vrot.slane %v1292, 1
      %v1625 = vrot.slane %v1372, 1
      %v1626 = vsel %vm677, %v1624, %v1625
      %v1627 = vrot.slane %v1293, 1
      %v1628 = vrot.slane %v1373, 1
      %v1629 = vsel %vm677, %v1627, %v1628
      %v1630 = vrot.slane %v1294, 1
      %v1631 = vrot.slane %v1374, 1
      %v1632 = vsel %vm677, %v1630, %v1631
      %v1633 = vrot.slane %v1295, 1
      %v1634 = vrot.slane %v1375, 1
      %v1635 = vsel %vm677, %v1633, %v1634
      %v1636 = vrot.slane %v1296, 1
      %v1637 = vrot.slane %v1376, 1
      %v1638 = vsel %vm677, %v1636, %v1637
      %v1639 = vrot.slane %v1297, 1
      %v1640 = vrot.slane %v1377, 1
      %v1641 = vsel %vm677, %v1639, %v1640
      %v1642 = vrot.slane %v1298, 1
      %v1643 = vrot.slane %v1378, 1
      %v1644 = vsel %vm677, %v1642, %v1643
      %v1645 = vrot.slane %v1299, 1
      %v1646 = vrot.slane %v1379, 1
      %v1647 = vsel %vm677, %v1645, %v1646
      %v1648 = vrot.slane %v1300, 1
      %v1649 = vrot.slane %v1380, 1
      %v1650 = vsel %vm677, %v1648, %v1649
      %v1651 = vrot.slane %v1301, 1
      %v1652 = vrot.slane %v1381, 1
      %v1653 = vsel %vm677, %v1651, %v1652
      %1654 = vrot.lane.b32.xlu0 %v1608, 32
      %v1655 = vpop.permute.xlu0 %1654
      %1656 = vrot.lane.b32.xlu0 %v1611, 32
      %v1657 = vpop.permute.xlu0 %1656
      %1658 = vrot.lane.b32.xlu0 %v1614, 32
      %v1659 = vpop.permute.xlu0 %1658
      %1660 = vrot.lane.b32.xlu0 %v1617, 32
      %v1661 = vpop.permute.xlu0 %1660
      %1662 = vrot.lane.b32.xlu0 %v1620, 32
      %v1663 = vpop.permute.xlu0 %1662
      %1664 = vrot.lane.b32.xlu0 %v1623, 32
      %v1665 = vpop.permute.xlu0 %1664
      %1666 = vrot.lane.b32.xlu0 %v1626, 32
      %v1667 = vpop.permute.xlu0 %1666
      %1668 = vrot.lane.b32.xlu0 %v1629, 32
      %v1669 = vpop.permute.xlu0 %1668
      %1670 = vrot.lane.b32.xlu0 %v1632, 32
      %v1671 = vpop.permute.xlu0 %1670
      %1672 = vrot.lane.b32.xlu0 %v1635, 32
      %v1673 = vpop.permute.xlu0 %1672
      %1674 = vrot.lane.b32.xlu0 %v1638, 32
      %v1675 = vpop.permute.xlu0 %1674
      %1676 = vrot.lane.b32.xlu0 %v1641, 32
      %v1677 = vpop.permute.xlu0 %1676
      %1678 = vrot.lane.b32.xlu0 %v1644, 32
      %v1679 = vpop.permute.xlu0 %1678
      %1680 = vrot.lane.b32.xlu0 %v1647, 32
      %v1681 = vpop.permute.xlu0 %1680
      %1682 = vrot.lane.b32.xlu0 %v1650, 32
      %v1683 = vpop.permute.xlu0 %1682
      %1684 = vrot.lane.b32.xlu0 %v1653, 32
      %v1685 = vpop.permute.xlu0 %1684
      %vm1686 = vcmask 31744
      %v1688 = vsel %vm1686, %v388, %v646
      %v1690 = vsel %vm1686, %v389, %v648
      %v1692 = vsel %vm1686, %v390, %v650
      %v1694 = vsel %vm1686, %v391, %v652
      %v1696 = vsel %vm1686, %v392, %v654
      %v1698 = vsel %vm1686, %v393, %v656
      %v1700 = vsel %vm1686, %v394, %v658
      %v1702 = vsel %vm1686, %v395, %v660
      %v1704 = vsel %vm1686, %v396, %v662
      %v1706 = vsel %vm1686, %v397, %v664
      %v1708 = vsel %vm1686, %v398, %v666
      %v1710 = vsel %vm1686, %v399, %v668
      %v1712 = vsel %vm1686, %v400, %v670
      %v1714 = vsel %vm1686, %v401, %v672
      %v1716 = vsel %vm1686, %v402, %v674
      %v1718 = vsel %vm1686, %v403, %v676
      %vm1719 = vcmask 64512
      %v1721 = vsel %vm1719, %v1688, %v727
      %v1723 = vsel %vm1719, %v1690, %v729
      %v1725 = vsel %vm1719, %v1692, %v731
      %v1727 = vsel %vm1719, %v1694, %v733
      %v1729 = vsel %vm1719, %v1696, %v735
      %v1731 = vsel %vm1719, %v1698, %v737
      %v1733 = vsel %vm1719, %v1700, %v739
      %v1735 = vsel %vm1719, %v1702, %v741
      %v1737 = vsel %vm1719, %v1704, %v743
      %v1739 = vsel %vm1719, %v1706, %v745
      %v1741 = vsel %vm1719, %v1708, %v747
      %v1743 = vsel %vm1719, %v1710, %v749
      %v1745 = vsel %vm1719, %v1712, %v751
      %v1747 = vsel %vm1719, %v1714, %v753
      %v1749 = vsel %vm1719, %v1716, %v755
      %v1751 = vsel %vm1719, %v1718, %v757
      %vm1752 = vcmask 97280
      %v1754 = vsel %vm1752, %v1721, %v839
      %v1756 = vsel %vm1752, %v1723, %v841
      %v1758 = vsel %vm1752, %v1725, %v843
      %v1760 = vsel %vm1752, %v1727, %v845
      %v1762 = vsel %vm1752, %v1729, %v847
      %v1764 = vsel %vm1752, %v1731, %v849
      %v1766 = vsel %vm1752, %v1733, %v851
      %v1768 = vsel %vm1752, %v1735, %v853
      %v1770 = vsel %vm1752, %v1737, %v855
      %v1772 = vsel %vm1752, %v1739, %v857
      %v1774 = vsel %vm1752, %v1741, %v859
      %v1776 = vsel %vm1752, %v1743, %v861
      %v1778 = vsel %vm1752, %v1745, %v863
      %v1780 = vsel %vm1752, %v1747, %v865
      %v1782 = vsel %vm1752, %v1749, %v867
      %v1784 = vsel %vm1752, %v1751, %v869
      %vm1785 = vcmask 130048
      %v1787 = vsel %vm1785, %v1754, %v1111
      %v1789 = vsel %vm1785, %v1756, %v1113
      %v1791 = vsel %vm1785, %v1758, %v1115
      %v1793 = vsel %vm1785, %v1760, %v1117
      %v1795 = vsel %vm1785, %v1762, %v1119
      %v1797 = vsel %vm1785, %v1764, %v1121
      %v1799 = vsel %vm1785, %v1766, %v1123
      %v1801 = vsel %vm1785, %v1768, %v1125
      %v1803 = vsel %vm1785, %v1770, %v1127
      %v1805 = vsel %vm1785, %v1772, %v1129
      %v1807 = vsel %vm1785, %v1774, %v1131
      %v1809 = vsel %vm1785, %v1776, %v1133
      %v1811 = vsel %vm1785, %v1778, %v1135
      %v1813 = vsel %vm1785, %v1780, %v1137
      %v1815 = vsel %vm1785, %v1782, %v1139
      %v1817 = vsel %vm1785, %v1784, %v1141
      %vm1818 = vcmask 162816
      %v1820 = vsel %vm1818, %v1787, %v1191
      %v1822 = vsel %vm1818, %v1789, %v1193
      %v1824 = vsel %vm1818, %v1791, %v1195
      %v1826 = vsel %vm1818, %v1793, %v1197
      %v1828 = vsel %vm1818, %v1795, %v1199
      %v1830 = vsel %vm1818, %v1797, %v1201
      %v1832 = vsel %vm1818, %v1799, %v1203
      %v1834 = vsel %vm1818, %v1801, %v1205
      %v1836 = vsel %vm1818, %v1803, %v1207
      %v1838 = vsel %vm1818, %v1805, %v1209
      %v1840 = vsel %vm1818, %v1807, %v1211
      %v1842 = vsel %vm1818, %v1809, %v1213
      %v1844 = vsel %vm1818, %v1811, %v1215
      %v1846 = vsel %vm1818, %v1813, %v1217
      %v1848 = vsel %vm1818, %v1815, %v1219
      %v1850 = vsel %vm1818, %v1817, %v1221
      %vm1851 = vcmask 195584
      %v1853 = vsel %vm1851, %v1820, %v1303
      %v1855 = vsel %vm1851, %v1822, %v1305
      %v1857 = vsel %vm1851, %v1824, %v1307
      %v1859 = vsel %vm1851, %v1826, %v1309
      %v1861 = vsel %vm1851, %v1828, %v1311
      %v1863 = vsel %vm1851, %v1830, %v1313
      %v1865 = vsel %vm1851, %v1832, %v1315
      %v1867 = vsel %vm1851, %v1834, %v1317
      %v1869 = vsel %vm1851, %v1836, %v1319
      %v1871 = vsel %vm1851, %v1838, %v1321
      %v1873 = vsel %vm1851, %v1840, %v1323
      %v1875 = vsel %vm1851, %v1842, %v1325
      %v1877 = vsel %vm1851, %v1844, %v1327
      %v1879 = vsel %vm1851, %v1846, %v1329
      %v1881 = vsel %vm1851, %v1848, %v1331
      %v1883 = vsel %vm1851, %v1850, %v1333
      %vm1884 = vcmask 228352
      %v1886 = vsel %vm1884, %v1853, %v1575
      %v1888 = vsel %vm1884, %v1855, %v1577
      %v1890 = vsel %vm1884, %v1857, %v1579
      %v1892 = vsel %vm1884, %v1859, %v1581
      %v1894 = vsel %vm1884, %v1861, %v1583
      %v1896 = vsel %vm1884, %v1863, %v1585
      %v1898 = vsel %vm1884, %v1865, %v1587
      %v1900 = vsel %vm1884, %v1867, %v1589
      %v1902 = vsel %vm1884, %v1869, %v1591
      %v1904 = vsel %vm1884, %v1871, %v1593
      %v1906 = vsel %vm1884, %v1873, %v1595
      %v1908 = vsel %vm1884, %v1875, %v1597
      %v1910 = vsel %vm1884, %v1877, %v1599
      %v1912 = vsel %vm1884, %v1879, %v1601
      %v1914 = vsel %vm1884, %v1881, %v1603
      %v1916 = vsel %vm1884, %v1883, %v1605
      %vm1917 = vcmask 261120
      %v1919 = vsel %vm1917, %v1886, %v1655
      %v1921 = vsel %vm1917, %v1888, %v1657
      %v1923 = vsel %vm1917, %v1890, %v1659
      %v1925 = vsel %vm1917, %v1892, %v1661
      %v1927 = vsel %vm1917, %v1894, %v1663
      %v1929 = vsel %vm1917, %v1896, %v1665
      %v1931 = vsel %vm1917, %v1898, %v1667
      %v1933 = vsel %vm1917, %v1900, %v1669
      %v1935 = vsel %vm1917, %v1902, %v1671
      %v1937 = vsel %vm1917, %v1904, %v1673
      %v1939 = vsel %vm1917, %v1906, %v1675
      %v1941 = vsel %vm1917, %v1908, %v1677
      %v1943 = vsel %vm1917, %v1910, %v1679
      %v1945 = vsel %vm1917, %v1912, %v1681
      %v1947 = vsel %vm1917, %v1914, %v1683
      %v1949 = vsel %vm1917, %v1916, %v1685
      %vm1950 = vcmask 293888
      %v1952 = vsel %vm1950, %v1919, 0
      %v1954 = vsel %vm1950, %v1921, 0
      %v1956 = vsel %vm1950, %v1923, 0
      %v1958 = vsel %vm1950, %v1925, 0
      %v1960 = vsel %vm1950, %v1927, 0
      %v1962 = vsel %vm1950, %v1929, 0
      %v1964 = vsel %vm1950, %v1931, 0
      %v1966 = vsel %vm1950, %v1933, 0
      %v1968 = vsel %vm1950, %v1935, 0
      %v1970 = vsel %vm1950, %v1937, 0
      %v1972 = vsel %vm1950, %v1939, 0
      %v1974 = vsel %vm1950, %v1941, 0
      %v1976 = vsel %vm1950, %v1943, 0
      %v1978 = vsel %vm1950, %v1945, 0
      %v1980 = vsel %vm1950, %v1947, 0
      %v1982 = vsel %vm1950, %v1949, 0
      %v1984 = vld [vmem:[%s1] sm:$0xf]
      %v1985 = vld [vmem:[%s1 + $0x4] sm:$0xf]
      %v1986 = vld [vmem:[%s1 + $0x8] sm:$0xf]
      %v1987 = vld [vmem:[%s1 + $0xc] sm:$0xf]
      %v1988 = vld [vmem:[%s1 + $0x10] sm:$0xf]
      %v1989 = vld [vmem:[%s1 + $0x14] sm:$0xf]
      %v1990 = vld [vmem:[%s1 + $0x18] sm:$0xf]
      %v1991 = vld [vmem:[%s1 + $0x1c] sm:$0xf]
      %v1992 = vld [vmem:[%s1 + $0x20] sm:$0xf]
      %v1993 = vld [vmem:[%s1 + $0x24] sm:$0xf]
      %v1994 = vld [vmem:[%s1 + $0x28] sm:$0xf]
      %v1995 = vld [vmem:[%s1 + $0x2c] sm:$0xf]
      %v1996 = vld [vmem:[%s1 + $0x30] sm:$0xf]
      %v1997 = vld [vmem:[%s1 + $0x34] sm:$0xf]
      %v1998 = vld [vmem:[%s1 + $0x38] sm:$0xf]
      %v1999 = vld [vmem:[%s1 + $0x3c] sm:$0xf]
      %v2016 = vunpack.c.l.b16 %v1984
      %v2017 = vunpack.c.l.b16 %v1985
      %v2018 = vunpack.c.l.b16 %v1986
      %v2019 = vunpack.c.l.b16 %v1987
      %v2020 = vunpack.c.l.b16 %v1988
      %v2021 = vunpack.c.l.b16 %v1989
      %v2022 = vunpack.c.l.b16 %v1990
      %v2023 = vunpack.c.l.b16 %v1991
      %v2024 = vunpack.c.l.b16 %v1992
      %v2025 = vunpack.c.l.b16 %v1993
      %v2026 = vunpack.c.l.b16 %v1994
      %v2027 = vunpack.c.l.b16 %v1995
      %v2028 = vunpack.c.l.b16 %v1996
      %v2029 = vunpack.c.l.b16 %v1997
      %v2030 = vunpack.c.l.b16 %v1998
      %v2031 = vunpack.c.l.b16 %v1999
      %v2032 = vpack.c.b16 %v2017, %v2016
      %v2033 = vpack.c.b16 %v2019, %v2018
      %v2034 = vpack.c.b16 %v2021, %v2020
      %v2035 = vpack.c.b16 %v2023, %v2022
      %v2036 = vpack.c.b16 %v2025, %v2024
      %v2037 = vpack.c.b16 %v2027, %v2026
      %v2038 = vpack.c.b16 %v2029, %v2028
      %v2039 = vpack.c.b16 %v2031, %v2030
      %2048 = vmatprep.subr.bf16.mxu0 0
      %2049 = vmatpush1.bf16.msra.mxu0 %v2032
      %2050 = vmatprep.subr.bf16.mxu0 0
      %2051 = vmatpush1.bf16.msra.mxu0 %v2033
      %2052 = vmatprep.subr.bf16.mxu0 0
      %2053 = vmatpush1.bf16.msra.mxu0 %v2034
      %2054 = vmatprep.subr.bf16.mxu0 0
      %2055 = vmatpush1.bf16.msra.mxu0 %v2035
      %2056 = vmatprep.subr.bf16.mxu0 0
      %2057 = vmatpush1.bf16.msra.mxu0 %v2036
      %2058 = vmatprep.subr.bf16.mxu0 0
      %2059 = vmatpush1.bf16.msra.mxu0 %v2037
      %2060 = vmatprep.subr.bf16.mxu0 0
      %2061 = vmatpush1.bf16.msra.mxu0 %v2038
      %2062 = vmatprep.subr.bf16.mxu0 0
      %2063 = vmatpush1.bf16.msra.mxu0 %v2039
      %2064 = vmatprep.subr.bf16.mxu0 0
      %2065 = vmatpush1.bf16.msra.mxu0 0
      %2066 = vmatprep.subr.bf16.mxu0 0
      %2067 = vmatpush1.bf16.msra.mxu0 0
      %2068 = vmatprep.subr.bf16.mxu0 0
      %2069 = vmatpush1.bf16.msra.mxu0 0
      %2070 = vmatprep.subr.bf16.mxu0 0
      %2071 = vmatpush1.bf16.msra.mxu0 0
      %2072 = vmatprep.subr.bf16.mxu0 0
      %2073 = vmatpush1.bf16.msra.mxu0 0
      %2074 = vmatprep.subr.bf16.mxu0 0
      %2075 = vmatpush1.bf16.msra.mxu0 0
      %2076 = vmatprep.subr.bf16.mxu0 0
      %2077 = vmatpush1.bf16.msra.mxu0 0
      %2078 = vmatprep.subr.bf16.mxu0 0
      %2079 = vmatpush1.bf16.msra.mxu0 0
      %2080 = vmatprep.mubr.bf16.mxu0 0
      %2081 = vmatmul.mubr.bf16.gmra.mrb[0].mxu0 %v1952
      %v2082 = vpop.f32.mrb[0].mxu0
      %v2083 = vadd.f32 0.0, %v2082
      %v2084 = vpop.f32.mrb[0].mxu0
      %v2085 = vpop.f32.mrb[0].mxu0
      %v2086 = vadd.f32 0.0, %v2085
      %v2087 = vpop.f32.mrb[0].mxu0
      %2088 = vmatprep.mubr.bf16.mxu0 0
      %2089 = vmatmul.mubr.bf16.gmra.mrb[0].mxu0 %v1954
      %v2090 = vpop.f32.mrb[0].mxu0
      %v2091 = vadd.f32 0.0, %v2090
      %v2092 = vpop.f32.mrb[0].mxu0
      %v2093 = vpop.f32.mrb[0].mxu0
      %v2094 = vadd.f32 0.0, %v2093
      %v2095 = vpop.f32.mrb[0].mxu0
      %2096 = vmatprep.mubr.bf16.mxu0 0
      %2097 = vmatmul.mubr.bf16.gmra.mrb[0].mxu0 %v1956
      %v2098 = vpop.f32.mrb[0].mxu0
      %v2099 = vadd.f32 0.0, %v2098
      %v2100 = vpop.f32.mrb[0].mxu0
      %v2101 = vpop.f32.mrb[0].mxu0
      %v2102 = vadd.f32 0.0, %v2101
      %v2103 = vpop.f32.mrb[0].mxu0
      %2104 = vmatprep.mubr.bf16.mxu0 0
      %2105 = vmatmul.mubr.bf16.gmra.mrb[0].mxu0 %v1958
      %v2106 = vpop.f32.mrb[0].mxu0
      %v2107 = vadd.f32 0.0, %v2106
      %v2108 = vpop.f32.mrb[0].mxu0
      %v2109 = vpop.f32.mrb[0].mxu0
      %v2110 = vadd.f32 0.0, %v2109
      %v2111 = vpop.f32.mrb[0].mxu0
      %2112 = vmatprep.mubr.bf16.mxu0 0
      %2113 = vmatmul.mubr.bf16.gmra.mrb[0].mxu0 %v1960
      %v2114 = vpop.f32.mrb[0].mxu0
      %v2115 = vadd.f32 0.0, %v2114
      %v2116 = vpop.f32.mrb[0].mxu0
      %v2117 = vpop.f32.mrb[0].mxu0
      %v2118 = vadd.f32 0.0, %v2117
      %v2119 = vpop.f32.mrb[0].mxu0
      %2120 = vmatprep.mubr.bf16.mxu0 0
      %2121 = vmatmul.mubr.bf16.gmra.mrb[0].mxu0 %v1962
      %v2122 = vpop.f32.mrb[0].mxu0
      %v2123 = vadd.f32 0.0, %v2122
      %v2124 = vpop.f32.mrb[0].mxu0
      %v2125 = vpop.f32.mrb[0].mxu0
      %v2126 = vadd.f32 0.0, %v2125
      %v2127 = vpop.f32.mrb[0].mxu0
      %2128 = vmatprep.mubr.bf16.mxu0 0
      %2129 = vmatmul.mubr.bf16.gmra.mrb[0].mxu0 %v1964
      %v2130 = vpop.f32.mrb[0].mxu0
      %v2131 = vadd.f32 0.0, %v2130
      %v2132 = vpop.f32.mrb[0].mxu0
      %v2133 = vpop.f32.mrb[0].mxu0
      %v2134 = vadd.f32 0.0, %v2133
      %v2135 = vpop.f32.mrb[0].mxu0
      %2136 = vmatprep.mubr.bf16.mxu0 0
      %2137 = vmatmul.mubr.bf16.gmra.mrb[0].mxu0 %v1966
      %v2138 = vpop.f32.mrb[0].mxu0
      %v2139 = vadd.f32 0.0, %v2138
      %v2140 = vpop.f32.mrb[0].mxu0
      %v2141 = vpop.f32.mrb[0].mxu0
      %v2142 = vadd.f32 0.0, %v2141
      %v2143 = vpop.f32.mrb[0].mxu0
      %2144 = vmatprep.mubr.bf16.mxu0 0
      %2145 = vmatmul.mubr.bf16.gmra.mrb[0].mxu0 %v1968
      %v2146 = vpop.f32.mrb[0].mxu0
      %v2147 = vadd.f32 0.0, %v2146
      %v2148 = vpop.f32.mrb[0].mxu0
      %v2149 = vpop.f32.mrb[0].mxu0
      %v2150 = vadd.f32 0.0, %v2149
      %v2151 = vpop.f32.mrb[0].mxu0
      %2152 = vmatprep.mubr.bf16.mxu0 0
      %2153 = vmatmul.mubr.bf16.gmra.mrb[0].mxu0 %v1970
      %v2154 = vpop.f32.mrb[0].mxu0
      %v2155 = vadd.f32 0.0, %v2154
      %v2156 = vpop.f32.mrb[0].mxu0
      %v2157 = vpop.f32.mrb[0].mxu0
      %v2158 = vadd.f32 0.0, %v2157
      %v2159 = vpop.f32.mrb[0].mxu0
      %2160 = vmatprep.mubr.bf16.mxu0 0
      %2161 = vmatmul.mubr.bf16.gmra.mrb[0].mxu0 %v1972
      %v2162 = vpop.f32.mrb[0].mxu0
      %v2163 = vadd.f32 0.0, %v2162
      %v2164 = vpop.f32.mrb[0].mxu0
      %v2165 = vpop.f32.mrb[0].mxu0
      %v2166 = vadd.f32 0.0, %v2165
      %v2167 = vpop.f32.mrb[0].mxu0
      %2168 = vmatprep.mubr.bf16.mxu0 0
      %2169 = vmatmul.mubr.bf16.gmra.mrb[0].mxu0 %v1974
      %v2170 = vpop.f32.mrb[0].mxu0
      %v2171 = vadd.f32 0.0, %v2170
      %v2172 = vpop.f32.mrb[0].mxu0
      %v2173 = vpop.f32.mrb[0].mxu0
      %v2174 = vadd.f32 0.0, %v2173
      %v2175 = vpop.f32.mrb[0].mxu0
      %2176 = vmatprep.mubr.bf16.mxu0 0
      %2177 = vmatmul.mubr.bf16.gmra.mrb[0].mxu0 %v1976
      %v2178 = vpop.f32.mrb[0].mxu0
      %v2179 = vadd.f32 0.0, %v2178
      %v2180 = vpop.f32.mrb[0].mxu0
      %v2181 = vpop.f32.mrb[0].mxu0
      %v2182 = vadd.f32 0.0, %v2181
      %v2183 = vpop.f32.mrb[0].mxu0
      %2184 = vmatprep.mubr.bf16.mxu0 0
      %2185 = vmatmul.mubr.bf16.gmra.mrb[0].mxu0 %v1978
      %v2186 = vpop.f32.mrb[0].mxu0
      %v2187 = vadd.f32 0.0, %v2186
      %v2188 = vpop.f32.mrb[0].mxu0
      %v2189 = vpop.f32.mrb[0].mxu0
      %v2190 = vadd.f32 0.0, %v2189
      %v2191 = vpop.f32.mrb[0].mxu0
      %2192 = vmatprep.mubr.bf16.mxu0 0
      %2193 = vmatmul.mubr.bf16.gmra.mrb[0].mxu0 %v1980
      %v2194 = vpop.f32.mrb[0].mxu0
      %v2195 = vadd.f32 0.0, %v2194
      %v2196 = vpop.f32.mrb[0].mxu0
      %v2197 = vpop.f32.mrb[0].mxu0
      %v2198 = vadd.f32 0.0, %v2197
      %v2199 = vpop.f32.mrb[0].mxu0
      %2200 = vmatprep.mubr.bf16.mxu0 0
      %2201 = vmatmul.mubr.bf16.gmra.mrb[0].mxu0 %v1982
      %v2202 = vpop.f32.mrb[0].mxu0
      %v2203 = vadd.f32 0.0, %v2202
      %v2204 = vpop.f32.mrb[0].mxu0
      %v2205 = vpop.f32.mrb[0].mxu0
      %v2206 = vadd.f32 0.0, %v2205
      %v2207 = vpop.f32.mrb[0].mxu0
      %2208 = vdwg.mxu0
      %2209 = vst [vmem:[%s165] sm:$0xff] %v2083
      %2210 = vst [vmem:[%s165 + $0x8] sm:$0xff] %v2086
      %2211 = vst [vmem:[%s165 + $0x10] sm:$0xff] %v2091
      %2212 = vst [vmem:[%s165 + $0x18] sm:$0xff] %v2094
      %2213 = vst [vmem:[%s165 + $0x20] sm:$0xff] %v2099
      %2214 = vst [vmem:[%s165 + $0x28] sm:$0xff] %v2102
      %2215 = vst [vmem:[%s165 + $0x30] sm:$0xff] %v2107
      %2216 = vst [vmem:[%s165 + $0x38] sm:$0xff] %v2110
      %2217 = vst [vmem:[%s165 + $0x40] sm:$0xff] %v2115
      %2218 = vst [vmem:[%s165 + $0x48] sm:$0xff] %v2118
      %2219 = vst [vmem:[%s165 + $0x50] sm:$0xff] %v2123
      %2220 = vst [vmem:[%s165 + $0x58] sm:$0xff] %v2126
      %2221 = vst [vmem:[%s165 + $0x60] sm:$0xff] %v2131
      %2222 = vst [vmem:[%s165 + $0x68] sm:$0xff] %v2134
      %2223 = vst [vmem:[%s165 + $0x70] sm:$0xff] %v2139
      %2224 = vst [vmem:[%s165 + $0x78] sm:$0xff] %v2142
      %2225 = vst [vmem:[%s165 + $0x80] sm:$0xff] %v2147
      %2226 = vst [vmem:[%s165 + $0x88] sm:$0xff] %v2150
      %2227 = vst [vmem:[%s165 + $0x90] sm:$0xff] %v2155
      %2228 = vst [vmem:[%s165 + $0x98] sm:$0xff] %v2158
      %2229 = vst [vmem:[%s165 + $0xa0] sm:$0xff] %v2163
      %2230 = vst [vmem:[%s165 + $0xa8] sm:$0xff] %v2166
      %2231 = vst [vmem:[%s165 + $0xb0] sm:$0xff] %v2171
      %2232 = vst [vmem:[%s165 + $0xb8] sm:$0xff] %v2174
      %2233 = vst [vmem:[%s165 + $0xc0] sm:$0xff] %v2179
      %2234 = vst [vmem:[%s165 + $0xc8] sm:$0xff] %v2182
      %2235 = vst [vmem:[%s165 + $0xd0] sm:$0xff] %v2187
      %2236 = vst [vmem:[%s165 + $0xd8] sm:$0xff] %v2190
      %2237 = vst [vmem:[%s165 + $0xe0] sm:$0xff] %v2195
      %2238 = vst [vmem:[%s165 + $0xe8] sm:$0xff] %v2198
      %2239 = vst [vmem:[%s165 + $0xf0] sm:$0xff] %v2203
      %2240 = vst [vmem:[%s165 + $0xf8] sm:$0xff] %v2206
      %s2241 = smul.u32 32, %s18
      %p2242 = scmp.lt.s32.totalorder %s17, 1
      %s2243 = scalar_select %p2242, %s17, 1
      %p2244 = scmp.lt.s32.totalorder %s2241, 31
      %s2245 = scalar_select %p2244, %s2241, 31
      %s2246 = smul.addr %s2243, 32
      %s2247 = sadd.s32 %s2245, %s2246
      %s2248 = smul.addr %s2247, 8
      %s2249 = scalar_lea.vmem %s2, %s2248
      // Predicated region
      $region29: #{conv2d_pallas.1} parent=27 // pred_check
        %p2250 = pneg %p92
      $region30: #{conv2d_pallas.1} parent=27 // pred_check_branch
        %2252 = sbr.rel (%p2250) target = $region32
      $region31: #{conv2d_pallas.1} parent=27 // pred_region
        %s2253 = smul.u32 32, %s18
      $region32: #{conv2d_pallas.1} parent=27 // pred_fallthru
        _
    $region28: #{conv2d_pallas.1} parent=5 // pred_fallthru
      _
    %p2254 = scmp.le.s32.totalorder 2, %s8
    // Predicated region
    $region33: #{conv2d_pallas.1} parent=5 // pred_check
      %p2255 = pneg %p2254
    $region34: #{conv2d_pallas.1} parent=5 // pred_check_branch
      %2257 = sbr.rel (%p2255) target = $region36
    $region35: #{conv2d_pallas.1} parent=5 // pred_region
      %s2258 = ssub.s32 %s8, 2
      // Predicated region
      $region37: #{conv2d_pallas.1} parent=35 // pred_check
        %p2259 = pneg %p98
      $region38: #{conv2d_pallas.1} parent=35 // pred_check_branch
        %2261 = sbr.rel (%p2259) target = $region40
      $region39: #{conv2d_pallas.1} parent=35 // pred_region
        %s2262 = smul.u32 32, %s20
        %p2263 = scmp.lt.s32.totalorder %s19, 1
        %s2264 = scalar_select %p2263, %s19, 1
        %p2265 = scmp.lt.s32.totalorder %s2262, 31
        %s2266 = scalar_select %p2265, %s2262, 31
        %s2267 = smul.addr %s2264, 32
        %s2268 = sadd.s32 %s2266, %s2267
        %s2269 = smul.addr %s2268, 8
        %s2270 = scalar_lea.vmem %s2, %s2269
      $region40: #{conv2d_pallas.1} parent=35 // pred_fallthru
        _
    $region36: #{conv2d_pallas.1} parent=5 // pred_fallthru
      _
  $region6: #{conv2d_pallas.1} parent=0 // loop_footer
    %s12 = sadd.s32 1, %s8
  $region7: #{conv2d_pallas.1} parent=0 // loop_footer_branch
    %7 = sbr.rel target = $region3
  $region8: #{conv2d_pallas.1} parent=0 // loop_exit
    _

// kernel: conv2d_pallas.1
$region0: #{conv2d_pallas.1}
  #allocation0 [shape = 'u32[]', space=smem, size = 0x4, offset = 0x4, fixed_abs, tag = 'smem constant byte address 0x4 - core index']
  #allocation1 [shape = 'u32[144,128]{1,0:T(1,128)}', space=vmem, size = 0x12000, scoped, tag = 'internal scratch']
  %s0 = inlined_call_operand.vmem [shape: bf16[2,18,18,4], index: 0, kind: input, shape index: {}]
  %s1 = inlined_call_operand.vmem [shape: bf16[128,128], index: 1, kind: input, shape index: {}]
  %s2 = inlined_call_operand.vmem [shape: f32[2,256,128], index: 2, kind: output, shape index: {}]
  %s3 = sld [smem:[#allocation0]]
  $region41: #{conv2d_pallas.1} parent=0
    _
  %s5 = ssub.s32 1, %s3
  %s6 = scalar_select 0, %s5, %s3
  loop: start=0, step=1, limit=4
  $region2: #{conv2d_pallas.1} parent=0 // loop_pre_header
    _
  $region3: #{conv2d_pallas.1} parent=0 // loop_header
    %s8 = sphi 0, %s12
    %p9 = scmp.ge.s32.totalorder %s8, 4
    %s15 = sphi 0, %s27
    %s16 = sphi 0, %s23
    %s17 = sphi 0, %s15
    %s18 = sphi 0, %s16
    %s19 = sphi 0, %s17
    %s20 = sphi 0, %s18
    %s30 = sphi 0, %s32
    %s33 = sphi 0, %s30
    %s34 = sphi 0, %s33
    %s50 = sphi 0, %s34
    %s54 = sphi 0, %s54
    %s56 = sphi 0, %s54
    %s57 = sphi 0, %s56
    %s71 = sphi 0, %s57
    %s79 = sphi 0, %s81
    %s82 = sphi 0, %s79
    %s83 = sphi 0, %s82
    %s99 = sphi 0, %s83
  $region4: #{conv2d_pallas.1} parent=0 // loop_header_branch
    %11 = sbr.rel (%p9) target = $region8
  $region5: #{conv2d_pallas.1} parent=0 // loop_body
    %s13 = ssub.s32 %s8, 1
    %s14 = ssub.s32 %s8, 2
    %s21 = sadd.s32 1, %s16
    %p22 = scmp.ge.s32.totalorder %s21, 1
    %s23 = scalar_select %p22, 0, %s21
    %s24 = sadd.s32 1, %s15
    %s25 = scalar_select %p22, %s24, %s15
    %p26 = scmp.ge.s32.totalorder %s25, 2
    %s27 = scalar_select %p26, 0, %s25
    %s28 = ssub.s32 %s15, %s27
    %p29 = scmp.eq.s32.totalorder %s28, 0
    %s31 = sadd.s32 %s30, 1
    %s32 = scalar_select %p29, %s30, %s31
    %p35 = pneg %p29
    %p36 = scmp.eq.s32.totalorder %s8, 1
    %p37 = por %p35, %p36
    %p38 = scmp.ne.s32.totalorder %s30, %s33
    %p39 = scmp.eq.s32.totalorder %s8, 0
    %p40 = por %p38, %p39
    %p41 = scmp.ne.s32.totalorder %s30, %s33
    %p42 = scmp.eq.s32.totalorder %s13, 1
    %p43 = por %p41, %p42
    %p44 = scmp.ne.s32.totalorder %s33, %s34
    %p45 = scmp.eq.s32.totalorder %s13, 0
    %p46 = por %p44, %p45
    %p47 = scmp.ne.s32.totalorder %s33, %s34
    %p48 = scmp.eq.s32.totalorder %s14, 1
    %p49 = por %p47, %p48
    %p51 = scmp.ne.s32.totalorder %s34, %s50
    %p52 = scmp.eq.s32.totalorder %s14, 0
    %p53 = por %p51, %p52
    %s55 = sadd.s32 %s54, 1
    %p58 = scmp.eq.s32.totalorder %s8, 1
    %p59 = scmp.ne.s32.totalorder %s54, %s56
    %p60 = scmp.eq.s32.totalorder %s8, 0
    %p61 = por %p59, %p60
    %p62 = scmp.ne.s32.totalorder %s54, %s56
    %p63 = scmp.eq.s32.totalorder %s13, 1
    %p64 = por %p62, %p63
    %p65 = scmp.ne.s32.totalorder %s56, %s57
    %p66 = scmp.eq.s32.totalorder %s13, 0
    %p67 = por %p65, %p66
    %p68 = scmp.ne.s32.totalorder %s56, %s57
    %p69 = scmp.eq.s32.totalorder %s14, 1
    %p70 = por %p68, %p69
    %p72 = scmp.ne.s32.totalorder %s57, %s71
    %p73 = scmp.eq.s32.totalorder %s14, 0
    %p74 = por %p72, %p73
    %s75 = ssub.s32 %s15, %s27
    %s76 = ssub.s32 %s16, %s23
    %s77 = sor.u32 %s75, %s76
    %p78 = scmp.eq.s32.totalorder %s77, 0
    %s80 = sadd.s32 %s79, 1
    %s81 = scalar_select %p78, %s79, %s80
    %p84 = pneg %p78
    %p85 = scmp.eq.s32.totalorder %s8, 1
    %p86 = por %p84, %p85
    %p87 = scmp.ne.s32.totalorder %s79, %s82
    %p88 = scmp.eq.s32.totalorder %s8, 0
    %p89 = por %p87, %p88
    %p90 = scmp.ne.s32.totalorder %s79, %s82
    %p91 = scmp.eq.s32.totalorder %s13, 1
    %p92 = por %p90, %p91
    %p93 = scmp.ne.s32.totalorder %s82, %s83
    %p94 = scmp.eq.s32.totalorder %s13, 0
    %p95 = por %p93, %p94
    %p96 = scmp.ne.s32.totalorder %s82, %s83
    %p97 = scmp.eq.s32.totalorder %s14, 1
    %p98 = por %p96, %p97
    %p100 = scmp.ne.s32.totalorder %s83, %s99
    %p101 = scmp.eq.s32.totalorder %s14, 0
    %p102 = por %p100, %p101
    %p103 = scmp.le.s32.totalorder 1, %s8
    %p104 = scmp.lt.s32.totalorder %s8, 3
    %p105 = pnand %p103, %p104
    %p106 = pneg %p105
    // Predicated region
    $region9: #{conv2d_pallas.1} parent=5 // pred_check
      _
    $region10: #{conv2d_pallas.1} parent=5 // pred_check_branch
      %108 = sbr.rel (%p105) target = $region12
    $region11: #{conv2d_pallas.1} parent=5 // pred_region
      %s109 = ssub.s32 %s8, 1
      // Predicated region
      $region13: #{conv2d_pallas.1} parent=11 // pred_check
        %p110 = pneg %p67
      $region14: #{conv2d_pallas.1} parent=11 // pred_check_branch
        %112 = sbr.rel (%p110) target = $region16
      $region15: #{conv2d_pallas.1} parent=11 // pred_region
        _
      $region16: #{conv2d_pallas.1} parent=11 // pred_fallthru
        _
    $region12: #{conv2d_pallas.1} parent=5 // pred_fallthru
      _
    %p113 = scmp.lt.s32.totalorder %s8, 2
    // Predicated region
    $region17: #{conv2d_pallas.1} parent=5 // pred_check
      %p114 = pneg %p113
    $region18: #{conv2d_pallas.1} parent=5 // pred_check_branch
      %116 = sbr.rel (%p114) target = $region20
    $region19: #{conv2d_pallas.1} parent=5 // pred_region
      // Predicated region
      $region21: #{conv2d_pallas.1} parent=19 // pred_check
        %p117 = pneg %p40
      $region22: #{conv2d_pallas.1} parent=19 // pred_check_branch
        %119 = sbr.rel (%p117) target = $region24
      $region23: #{conv2d_pallas.1} parent=19 // pred_region
        %p120 = scmp.lt.s32.totalorder %s15, 1
        %s121 = scalar_select %p120, %s15, 1
        %s122 = smul.addr %s121, 54
        %s123 = smul.addr %s122, 4
        %s124 = scalar_lea.vmem %s0, %s123
      $region24: #{conv2d_pallas.1} parent=19 // pred_fallthru
        _
    $region20: #{conv2d_pallas.1} parent=5 // pred_fallthru
      _
    %p125 = scmp.le.s32.totalorder 1, %s8
    %p126 = scmp.lt.s32.totalorder %s8, 3
    %p127 = pnand %p125, %p126
    %p128 = pneg %p127
    // Predicated region
    $region25: #{conv2d_pallas.1} parent=5 // pred_check
      _
    $region26: #{conv2d_pallas.1} parent=5 // pred_check_branch
      %130 = sbr.rel (%p127) target = $region28
    $region27: #{conv2d_pallas.1} parent=5 // pred_region
      %s131 = ssub.s32 %s8, 1
      %p132 = scmp.lt.s32.totalorder %s17, 1
      %s133 = scalar_select %p132, %s17, 1
      %s134 = smul.addr %s133, 54
      %s135 = smul.addr %s134, 4
      %s136 = scalar_lea.vmem %s0, %s135
      %p137 = pneg %p46
      %p138 = pneg %p43
      %p139 = pneg %p67
      %p140 = pneg %p64
      %p141 = pneg %p95
      %p142 = pneg %p92
      %s143 = smul.u32 32, %s18
      %p144 = scmp.lt.s32.totalorder %s17, 1
      %s145 = scalar_select %p144, %s17, 1
      %p146 = scmp.lt.s32.totalorder %s143, 31
      %s147 = scalar_select %p146, %s143, 31
      %s148 = smul.addr %s145, 32
      %s149 = sadd.s32 %s147, %s148
      %s150 = smul.addr %s149, 8
      %s151 = scalar_lea.vmem %s2, %s150
      %p152 = scmp.lt.s32.totalorder %s17, 1
      %s153 = scalar_select %p152, %s17, 1
      %s154 = smul.addr %s153, 54
      %s155 = smul.addr %s154, 4
      %s156 = scalar_lea.vmem %s0, %s155
      %s157 = smul.u32 32, %s18
      %p158 = scmp.lt.s32.totalorder %s17, 1
      %s159 = scalar_select %p158, %s17, 1
      %p160 = scmp.lt.s32.totalorder %s157, 31
      %s161 = scalar_select %p160, %s157, 31
      %s162 = smul.addr %s159, 32
      %s163 = sadd.s32 %s161, %s162
      %s164 = smul.addr %s163, 8
      %s165 = scalar_lea.vmem %s2, %s164
      %s166 = smul.u32 32, %s18
      %s168 = smul.u32 %s18, 16
      %v169 = vld [vmem:[%s1] sm:$0xf]
      %v170 = vld [vmem:[%s1 + $0x4] sm:$0xf]
      %v171 = vld [vmem:[%s1 + $0x8] sm:$0xf]
      %v172 = vld [vmem:[%s1 + $0xc] sm:$0xf]
      %v173 = vld [vmem:[%s1 + $0x10] sm:$0xf]
      %s174 = smul.u32 %s168, 3
      %s175 = smul.addr %s174, 4
      %s176 = scalar_lea.vmem %s156, %s175
      %v177 = vld [vmem:[%s176] sm:$0xf]
      %v178 = vld [vmem:[%s176 + $0x4] sm:$0xf]
      %v179 = vld [vmem:[%s176 + $0x8] sm:$0x1]
      %v180 = vld [vmem:[%s176 + $0xc] sm:$0xf]
      %v181 = vld [vmem:[%s176 + $0x10] sm:$0xf]
      %v182 = vld [vmem:[%s176 + $0x14] sm:$0x1]
      %v183 = vld [vmem:[%s176 + $0x18] sm:$0xf]
      %v184 = vld [vmem:[%s176 + $0x1c] sm:$0xf]
      %v185 = vld [vmem:[%s176 + $0x20] sm:$0x1]
      %v186 = vld [vmem:[%s176 + $0x24] sm:$0xf]
      %v187 = vld [vmem:[%s176 + $0x28] sm:$0xf]
      %v188 = vld [vmem:[%s176 + $0x2c] sm:$0x1]
      %v189 = vld [vmem:[%s176 + $0x30] sm:$0xf]
      %v190 = vld [vmem:[%s176 + $0x34] sm:$0xf]
      %v191 = vld [vmem:[%s176 + $0x38] sm:$0x1]
      %v192 = vld [vmem:[%s176 + $0x3c] sm:$0xf]
      %v193 = vld [vmem:[%s176 + $0x40] sm:$0xf]
      %v194 = vld [vmem:[%s176 + $0x44] sm:$0x1]
      %v195 = vld [vmem:[%s176 + $0x48] sm:$0xf]
      %v196 = vld [vmem:[%s176 + $0x4c] sm:$0xf]
      %v197 = vld [vmem:[%s176 + $0x50] sm:$0x1]
      %v198 = vld [vmem:[%s176 + $0x54] sm:$0xf]
      %v199 = vld [vmem:[%s176 + $0x58] sm:$0xf]
      %v200 = vld [vmem:[%s176 + $0x5c] sm:$0x1]
      %v201 = vld [vmem:[%s176 + $0x60] sm:$0xf]
      %v202 = vld [vmem:[%s176 + $0x64] sm:$0xf]
      %v203 = vld [vmem:[%s176 + $0x68] sm:$0x1]
      %v204 = vld [vmem:[%s176 + $0x6c] sm:$0xf]
      %v205 = vld [vmem:[%s176 + $0x70] sm:$0xf]
      %v206 = vld [vmem:[%s176 + $0x74] sm:$0x1]
      %v207 = vld [vmem:[%s176 + $0x78] sm:$0xf]
      %v208 = vld [vmem:[%s176 + $0x7c] sm:$0xf]
      %v209 = vld [vmem:[%s176 + $0x80] sm:$0x1]
      %v210 = vld [vmem:[%s176 + $0x84] sm:$0xf]
      %v211 = vld [vmem:[%s176 + $0x88] sm:$0xf]
      %v212 = vld [vmem:[%s176 + $0x8c] sm:$0x1]
      %v213 = vld [vmem:[%s176 + $0x90] sm:$0xf]
      %v214 = vld [vmem:[%s176 + $0x94] sm:$0xf]
      %v215 = vld [vmem:[%s176 + $0x98] sm:$0x1]
      %v216 = vld [vmem:[%s176 + $0x9c] sm:$0xf]
      %v217 = vld [vmem:[%s176 + $0xa0] sm:$0xf]
      %v218 = vld [vmem:[%s176 + $0xa4] sm:$0x1]
      %v219 = vld [vmem:[%s176 + $0xa8] sm:$0xf]
      %v220 = vld [vmem:[%s176 + $0xac] sm:$0xf]
      %v221 = vld [vmem:[%s176 + $0xb0] sm:$0x1]
      %v222 = vld [vmem:[%s176 + $0xb4] sm:$0xf]
      %v223 = vld [vmem:[%s176 + $0xb8] sm:$0xf]
      %v224 = vld [vmem:[%s176 + $0xbc] sm:$0x1]
      %vm225 = vsmask.f32 3328
      %vm226 = vsmask.f32 7440
      %vm227 = vmor %vm225, %vm226
      %v229 = vshrl.u32 %v177, 16
      %v231 = vrot.slane %v229, 4
      %v232 = vshll.u32 %v177, 16
      %v234 = vrot.slane %v232, 5
      %v235 = vor.u32 %v231, %v234
      %v236 = vrot.slane %v235, 4
      %v238 = vshll.u32 %v178, 16
      %v240 = vrot.slane %v238, 5
      %v241 = vsel %vm227, %v236, %v240
      %v242 = vshrl.u32 %v178, 16
      %v244 = vrot.slane %v242, 4
      %v245 = vor.u32 %v244, %v240
      %v246 = vrot.slane %v245, 4
      %v248 = vshll.u32 %v179, 16
      %v250 = vrot.slane %v248, 5
      %v251 = vsel %vm227, %v246, %v250
      %v253 = vshrl.u32 %v180, 16
      %v255 = vrot.slane %v253, 4
      %v256 = vshll.u32 %v180, 16
      %v258 = vrot.slane %v256, 5
      %v259 = vor.u32 %v255, %v258
      %v260 = vrot.slane %v259, 4
      %v262 = vshll.u32 %v181, 16
      %v264 = vrot.slane %v262, 5
      %v265 = vsel %vm227, %v260, %v264
      %v266 = vshrl.u32 %v181, 16
      %v268 = vrot.slane %v266, 4
      %v269 = vor.u32 %v268, %v264
      %v270 = vrot.slane %v269, 4
      %v272 = vshll.u32 %v182, 16
      %v274 = vrot.slane %v272, 5
      %v275 = vsel %vm227, %v270, %v274
      %v277 = vshrl.u32 %v183, 16
      %v279 = vrot.slane %v277, 4
      %v280 = vshll.u32 %v183, 16
      %v282 = vrot.slane %v280, 5
      %v283 = vor.u32 %v279, %v282
      %v284 = vrot.slane %v283, 4
      %v286 = vshll.u32 %v184, 16
      %v288 = vrot.slane %v286, 5
      %v289 = vsel %vm227, %v284, %v288
      %v290 = vshrl.u32 %v184, 16
      %v292 = vrot.slane %v290, 4
      %v293 = vor.u32 %v292, %v288
      %v294 = vrot.slane %v293, 4
      %v296 = vshll.u32 %v185, 16
      %v298 = vrot.slane %v296, 5
      %v299 = vsel %vm227, %v294, %v298
      %v301 = vshrl.u32 %v186, 16
      %v303 = vrot.slane %v301, 4
      %v304 = vshll.u32 %v186, 16
      %v306 = vrot.slane %v304, 5
      %v307 = vor.u32 %v303, %v306
      %v308 = vrot.slane %v307, 4
      %v310 = vshll.u32 %v187, 16
      %v312 = vrot.slane %v310, 5
      %v313 = vsel %vm227, %v308, %v312
      %v314 = vshrl.u32 %v187, 16
      %v316 = vrot.slane %v314, 4
      %v317 = vor.u32 %v316, %v312
      %v318 = vrot.slane %v317, 4
      %v320 = vshll.u32 %v188, 16
      %v322 = vrot.slane %v320, 5
      %v323 = vsel %vm227, %v318, %v322
      %v325 = vshrl.u32 %v189, 16
      %v327 = vrot.slane %v325, 4
      %v328 = vshll.u32 %v189, 16
      %v330 = vrot.slane %v328, 5
      %v331 = vor.u32 %v327, %v330
      %v332 = vrot.slane %v331, 4
      %v334 = vshll.u32 %v190, 16
      %v336 = vrot.slane %v334, 5
      %v337 = vsel %vm227, %v332, %v336
      %v338 = vshrl.u32 %v190, 16
      %v340 = vrot.slane %v338, 4
      %v341 = vor.u32 %v340, %v336
      %v342 = vrot.slane %v341, 4
      %v344 = vshll.u32 %v191, 16
      %v346 = vrot.slane %v344, 5
      %v347 = vsel %vm227, %v342, %v346
      %v349 = vshrl.u32 %v192, 16
      %v351 = vrot.slane %v349, 4
      %v352 = vshll.u32 %v192, 16
      %v354 = vrot.slane %v352, 5
      %v355 = vor.u32 %v351, %v354
      %v356 = vrot.slane %v355, 4
      %v358 = vshll.u32 %v193, 16
      %v360 = vrot.slane %v358, 5
      %v361 = vsel %vm227, %v356, %v360
      %v362 = vshrl.u32 %v193, 16
      %v364 = vrot.slane %v362, 4
      %v365 = vor.u32 %v364, %v360
      %v366 = vrot.slane %v365, 4
      %v368 = vshll.u32 %v194, 16
      %v370 = vrot.slane %v368, 5
      %v371 = vsel %vm227, %v366, %v370
      %v373 = vshrl.u32 %v195, 16
      %v375 = vrot.slane %v373, 4
      %v376 = vshll.u32 %v195, 16
      %v378 = vrot.slane %v376, 5
      %v379 = vor.u32 %v375, %v378
      %v380 = vrot.slane %v379, 4
      %v382 = vshll.u32 %v196, 16
      %v384 = vrot.slane %v382, 5
      %v385 = vsel %vm227, %v380, %v384
      %v386 = vshrl.u32 %v196, 16
      %v388 = vrot.slane %v386, 4
      %v389 = vor.u32 %v388, %v384
      %v390 = vrot.slane %v389, 4
      %v392 = vshll.u32 %v197, 16
      %v394 = vrot.slane %v392, 5
      %v395 = vsel %vm227, %v390, %v394
      %v397 = vshrl.u32 %v198, 16
      %v399 = vrot.slane %v397, 4
      %v400 = vshll.u32 %v198, 16
      %v402 = vrot.slane %v400, 5
      %v403 = vor.u32 %v399, %v402
      %v404 = vrot.slane %v403, 4
      %v406 = vshll.u32 %v199, 16
      %v408 = vrot.slane %v406, 5
      %v409 = vsel %vm227, %v404, %v408
      %v410 = vshrl.u32 %v199, 16
      %v412 = vrot.slane %v410, 4
      %v413 = vor.u32 %v412, %v408
      %v414 = vrot.slane %v413, 4
      %v416 = vshll.u32 %v200, 16
      %v418 = vrot.slane %v416, 5
      %v419 = vsel %vm227, %v414, %v418
      %v421 = vshrl.u32 %v201, 16
      %v423 = vrot.slane %v421, 4
      %v424 = vshll.u32 %v201, 16
      %v426 = vrot.slane %v424, 5
      %v427 = vor.u32 %v423, %v426
      %v428 = vrot.slane %v427, 4
      %v430 = vshll.u32 %v202, 16
      %v432 = vrot.slane %v430, 5
      %v433 = vsel %vm227, %v428, %v432
      %v434 = vshrl.u32 %v202, 16
      %v436 = vrot.slane %v434, 4
      %v437 = vor.u32 %v436, %v432
      %v438 = vrot.slane %v437, 4
      %v440 = vshll.u32 %v203, 16
      %v442 = vrot.slane %v440, 5
      %v443 = vsel %vm227, %v438, %v442
      %v445 = vshrl.u32 %v204, 16
      %v447 = vrot.slane %v445, 4
      %v448 = vshll.u32 %v204, 16
      %v450 = vrot.slane %v448, 5
      %v451 = vor.u32 %v447, %v450
      %v452 = vrot.slane %v451, 4
      %v454 = vshll.u32 %v205, 16
      %v456 = vrot.slane %v454, 5
      %v457 = vsel %vm227, %v452, %v456
      %v458 = vshrl.u32 %v205, 16
      %v460 = vrot.slane %v458, 4
      %v461 = vor.u32 %v460, %v456
      %v462 = vrot.slane %v461, 4
      %v464 = vshll.u32 %v206, 16
      %v466 = vrot.slane %v464, 5
      %v467 = vsel %vm227, %v462, %v466
      %v469 = vshrl.u32 %v207, 16
      %v471 = vrot.slane %v469, 4
      %v472 = vshll.u32 %v207, 16
      %v474 = vrot.slane %v472, 5
      %v475 = vor.u32 %v471, %v474
      %v476 = vrot.slane %v475, 4
      %v478 = vshll.u32 %v208, 16
      %v480 = vrot.slane %v478, 5
      %v481 = vsel %vm227, %v476, %v480
      %v482 = vshrl.u32 %v208, 16
      %v484 = vrot.slane %v482, 4
      %v485 = vor.u32 %v484, %v480
      %v486 = vrot.slane %v485, 4
      %v488 = vshll.u32 %v209, 16
      %v490 = vrot.slane %v488, 5
      %v491 = vsel %vm227, %v486, %v490
      %v493 = vshrl.u32 %v210, 16
      %v495 = vrot.slane %v493, 4
      %v496 = vshll.u32 %v210, 16
      %v498 = vrot.slane %v496, 5
      %v499 = vor.u32 %v495, %v498
      %v500 = vrot.slane %v499, 4
      %v502 = vshll.u32 %v211, 16
      %v504 = vrot.slane %v502, 5
      %v505 = vsel %vm227, %v500, %v504
      %v506 = vshrl.u32 %v211, 16
      %v508 = vrot.slane %v506, 4
      %v509 = vor.u32 %v508, %v504
      %v510 = vrot.slane %v509, 4
      %v512 = vshll.u32 %v212, 16
      %v514 = vrot.slane %v512, 5
      %v515 = vsel %vm227, %v510, %v514
      %v517 = vshrl.u32 %v213, 16
      %v519 = vrot.slane %v517, 4
      %v520 = vshll.u32 %v213, 16
      %v522 = vrot.slane %v520, 5
      %v523 = vor.u32 %v519, %v522
      %v524 = vrot.slane %v523, 4
      %v526 = vshll.u32 %v214, 16
      %v528 = vrot.slane %v526, 5
      %v529 = vsel %vm227, %v524, %v528
      %v530 = vshrl.u32 %v214, 16
      %v532 = vrot.slane %v530, 4
      %v533 = vor.u32 %v532, %v528
      %v534 = vrot.slane %v533, 4
      %v536 = vshll.u32 %v215, 16
      %v538 = vrot.slane %v536, 5
      %v539 = vsel %vm227, %v534, %v538
      %v541 = vshrl.u32 %v216, 16
      %v543 = vrot.slane %v541, 4
      %v544 = vshll.u32 %v216, 16
      %v546 = vrot.slane %v544, 5
      %v547 = vor.u32 %v543, %v546
      %v548 = vrot.slane %v547, 4
      %v550 = vshll.u32 %v217, 16
      %v552 = vrot.slane %v550, 5
      %v553 = vsel %vm227, %v548, %v552
      %v554 = vshrl.u32 %v217, 16
      %v556 = vrot.slane %v554, 4
      %v557 = vor.u32 %v556, %v552
      %v558 = vrot.slane %v557, 4
      %v560 = vshll.u32 %v218, 16
      %v562 = vrot.slane %v560, 5
      %v563 = vsel %vm227, %v558, %v562
      %v565 = vshrl.u32 %v219, 16
      %v567 = vrot.slane %v565, 4
      %v568 = vshll.u32 %v219, 16
      %v570 = vrot.slane %v568, 5
      %v571 = vor.u32 %v567, %v570
      %v572 = vrot.slane %v571, 4
      %v574 = vshll.u32 %v220, 16
      %v576 = vrot.slane %v574, 5
      %v577 = vsel %vm227, %v572, %v576
      %v578 = vshrl.u32 %v220, 16
      %v580 = vrot.slane %v578, 4
      %v581 = vor.u32 %v580, %v576
      %v582 = vrot.slane %v581, 4
      %v584 = vshll.u32 %v221, 16
      %v586 = vrot.slane %v584, 5
      %v587 = vsel %vm227, %v582, %v586
      %v589 = vshrl.u32 %v222, 16
      %v591 = vrot.slane %v589, 4
      %v592 = vshll.u32 %v222, 16
      %v594 = vrot.slane %v592, 5
      %v595 = vor.u32 %v591, %v594
      %v596 = vrot.slane %v595, 4
      %v598 = vshll.u32 %v223, 16
      %v600 = vrot.slane %v598, 5
      %v601 = vsel %vm227, %v596, %v600
      %v602 = vshrl.u32 %v223, 16
      %v604 = vrot.slane %v602, 4
      %v605 = vor.u32 %v604, %v600
      %v606 = vrot.slane %v605, 4
      %v608 = vshll.u32 %v224, 16
      %v610 = vrot.slane %v608, 5
      %v611 = vsel %vm227, %v606, %v610
      %v612 = vunpack.c.l.b16 %v241
      %v613 = vunpack.c.l.b16 %v251
      %v614 = vunpack.c.l.b16 %v265
      %v615 = vunpack.c.l.b16 %v275
      %v616 = vunpack.c.l.b16 %v289
      %v617 = vunpack.c.l.b16 %v299
      %v618 = vunpack.c.l.b16 %v313
      %v619 = vunpack.c.l.b16 %v323
      %v620 = vunpack.c.l.b16 %v337
      %v621 = vunpack.c.l.b16 %v347
      %v622 = vunpack.c.l.b16 %v361
      %v623 = vunpack.c.l.b16 %v371
      %v624 = vunpack.c.l.b16 %v385
      %v625 = vunpack.c.l.b16 %v395
      %v626 = vunpack.c.l.b16 %v409
      %v627 = vunpack.c.l.b16 %v419
      %v628 = vunpack.c.l.b16 %v433
      %v629 = vunpack.c.l.b16 %v443
      %v630 = vunpack.c.l.b16 %v457
      %v631 = vunpack.c.l.b16 %v467
      %v632 = vunpack.c.l.b16 %v481
      %v633 = vunpack.c.l.b16 %v491
      %v634 = vunpack.c.l.b16 %v505
      %v635 = vunpack.c.l.b16 %v515
      %v636 = vunpack.c.l.b16 %v529
      %v637 = vunpack.c.l.b16 %v539
      %v638 = vunpack.c.l.b16 %v553
      %v639 = vunpack.c.l.b16 %v563
      %v640 = vunpack.c.l.b16 %v577
      %v641 = vunpack.c.l.b16 %v587
      %v642 = vunpack.c.l.b16 %v601
      %v643 = vunpack.c.l.b16 %v611
      %v644 = vpack.c.b16 %v613, %v612
      %v645 = vpack.c.b16 %v615, %v614
      %v646 = vpack.c.b16 %v617, %v616
      %v647 = vpack.c.b16 %v619, %v618
      %v648 = vpack.c.b16 %v621, %v620
      %v649 = vpack.c.b16 %v623, %v622
      %v650 = vpack.c.b16 %v625, %v624
      %v651 = vpack.c.b16 %v627, %v626
      %v652 = vpack.c.b16 %v629, %v628
      %v653 = vpack.c.b16 %v631, %v630
      %v654 = vpack.c.b16 %v633, %v632
      %v655 = vpack.c.b16 %v635, %v634
      %v656 = vpack.c.b16 %v637, %v636
      %v657 = vpack.c.b16 %v639, %v638
      %v658 = vpack.c.b16 %v641, %v640
      %v659 = vpack.c.b16 %v643, %v642
      %v661 = vunpack.c.l.b16 %v169
      %v662 = vpack.c.b16 %v661, %v661
      %v663 = vrot.slane %v662, 2
      %vm664 = vcmask 31744
      %v666 = vsel %vm664, %v644, 0
      %v669 = vsel %vm664, %v645, 0
      %v672 = vsel %vm664, %v646, 0
      %v675 = vsel %vm664, %v647, 0
      %v678 = vsel %vm664, %v648, 0
      %v681 = vsel %vm664, %v649, 0
      %v684 = vsel %vm664, %v650, 0
      %v687 = vsel %vm664, %v651, 0
      %v690 = vsel %vm664, %v652, 0
      %v693 = vsel %vm664, %v653, 0
      %v696 = vsel %vm664, %v654, 0
      %v699 = vsel %vm664, %v655, 0
      %v702 = vsel %vm664, %v656, 0
      %v705 = vsel %vm664, %v657, 0
      %v708 = vsel %vm664, %v658, 0
      %v711 = vsel %vm664, %v659, 0
      %vm713 = vcmask 1041408
      %v715 = vsel %vm713, %v663, 0
      %717 = vmatprep.subr.bf16.mxu0 0
      %718 = vmatpush1.bf16.msra.mxu0 %v715
      %719 = vmatprep.subr.bf16.mxu0 0
      %720 = vmatpush1.bf16.msra.mxu0 0
      %721 = vmatprep.subr.bf16.mxu0 0
      %722 = vmatpush1.bf16.msra.mxu0 0
      %723 = vmatprep.subr.bf16.mxu0 0
      %724 = vmatpush1.bf16.msra.mxu0 0
      %725 = vmatprep.subr.bf16.mxu0 0
      %726 = vmatpush1.bf16.msra.mxu0 0
      %727 = vmatprep.subr.bf16.mxu0 0
      %728 = vmatpush1.bf16.msra.mxu0 0
      %729 = vmatprep.subr.bf16.mxu0 0
      %730 = vmatpush1.bf16.msra.mxu0 0
      %731 = vmatprep.subr.bf16.mxu0 0
      %732 = vmatpush1.bf16.msra.mxu0 0
      %733 = vmatprep.subr.bf16.mxu0 0
      %734 = vmatpush1.bf16.msra.mxu0 0
      %735 = vmatprep.subr.bf16.mxu0 0
      %736 = vmatpush1.bf16.msra.mxu0 0
      %737 = vmatprep.subr.bf16.mxu0 0
      %738 = vmatpush1.bf16.msra.mxu0 0
      %739 = vmatprep.subr.bf16.mxu0 0
      %740 = vmatpush1.bf16.msra.mxu0 0
      %741 = vmatprep.subr.bf16.mxu0 0
      %742 = vmatpush1.bf16.msra.mxu0 0
      %743 = vmatprep.subr.bf16.mxu0 0
      %744 = vmatpush1.bf16.msra.mxu0 0
      %745 = vmatprep.subr.bf16.mxu0 0
      %746 = vmatpush1.bf16.msra.mxu0 0
      %747 = vmatprep.subr.bf16.mxu0 0
      %748 = vmatpush1.bf16.msra.mxu0 0
      %749 = vmatprep.mubr.bf16.mxu0 0
      %750 = vmatmul.mubr.bf16.gmra.mrb[0].mxu0 %v666
      %v751 = vpop.f32.mrb[0].mxu0
      %v752 = vadd.f32 0.0, %v751
      %v753 = vpop.f32.mrb[0].mxu0
      %v754 = vpop.f32.mrb[0].mxu0
      %v755 = vadd.f32 0.0, %v754
      %v756 = vpop.f32.mrb[0].mxu0
      %757 = vmatprep.mubr.bf16.mxu0 0
      %758 = vmatmul.mubr.bf16.gmra.mrb[0].mxu0 %v669
      %v759 = vpop.f32.mrb[0].mxu0
      %v760 = vadd.f32 0.0, %v759
      %v761 = vpop.f32.mrb[0].mxu0
      %v762 = vpop.f32.mrb[0].mxu0
      %v763 = vadd.f32 0.0, %v762
      %v764 = vpop.f32.mrb[0].mxu0
      %765 = vmatprep.mubr.bf16.mxu0 0
      %766 = vmatmul.mubr.bf16.gmra.mrb[0].mxu0 %v672
      %v767 = vpop.f32.mrb[0].mxu0
      %v768 = vadd.f32 0.0, %v767
      %v769 = vpop.f32.mrb[0].mxu0
      %v770 = vpop.f32.mrb[0].mxu0
      %v771 = vadd.f32 0.0, %v770
      %v772 = vpop.f32.mrb[0].mxu0
      %773 = vmatprep.mubr.bf16.mxu0 0
      %774 = vmatmul.mubr.bf16.gmra.mrb[0].mxu0 %v675
      %v775 = vpop.f32.mrb[0].mxu0
      %v776 = vadd.f32 0.0, %v775
      %v777 = vpop.f32.mrb[0].mxu0
      %v778 = vpop.f32.mrb[0].mxu0
      %v779 = vadd.f32 0.0, %v778
      %v780 = vpop.f32.mrb[0].mxu0
      %781 = vmatprep.mubr.bf16.mxu0 0
      %782 = vmatmul.mubr.bf16.gmra.mrb[0].mxu0 %v678
      %v783 = vpop.f32.mrb[0].mxu0
      %v784 = vadd.f32 0.0, %v783
      %v785 = vpop.f32.mrb[0].mxu0
      %v786 = vpop.f32.mrb[0].mxu0
      %v787 = vadd.f32 0.0, %v786
      %v788 = vpop.f32.mrb[0].mxu0
      %789 = vmatprep.mubr.bf16.mxu0 0
      %790 = vmatmul.mubr.bf16.gmra.mrb[0].mxu0 %v681
      %v791 = vpop.f32.mrb[0].mxu0
      %v792 = vadd.f32 0.0, %v791
      %v793 = vpop.f32.mrb[0].mxu0
      %v794 = vpop.f32.mrb[0].mxu0
      %v795 = vadd.f32 0.0, %v794
      %v796 = vpop.f32.mrb[0].mxu0
      %797 = vmatprep.mubr.bf16.mxu0 0
      %798 = vmatmul.mubr.bf16.gmra.mrb[0].mxu0 %v684
      %v799 = vpop.f32.mrb[0].mxu0
      %v800 = vadd.f32 0.0, %v799
      %v801 = vpop.f32.mrb[0].mxu0
      %v802 = vpop.f32.mrb[0].mxu0
      %v803 = vadd.f32 0.0, %v802
      %v804 = vpop.f32.mrb[0].mxu0
      %805 = vmatprep.mubr.bf16.mxu0 0
      %806 = vmatmul.mubr.bf16.gmra.mrb[0].mxu0 %v687
      %v807 = vpop.f32.mrb[0].mxu0
      %v808 = vadd.f32 0.0, %v807
      %v809 = vpop.f32.mrb[0].mxu0
      %v810 = vpop.f32.mrb[0].mxu0
      %v811 = vadd.f32 0.0, %v810
      %v812 = vpop.f32.mrb[0].mxu0
      %813 = vmatprep.mubr.bf16.mxu0 0
      %814 = vmatmul.mubr.bf16.gmra.mrb[0].mxu0 %v690
      %v815 = vpop.f32.mrb[0].mxu0
      %v816 = vadd.f32 0.0, %v815
      %v817 = vpop.f32.mrb[0].mxu0
      %v818 = vpop.f32.mrb[0].mxu0
      %v819 = vadd.f32 0.0, %v818
      %v820 = vpop.f32.mrb[0].mxu0
      %821 = vmatprep.mubr.bf16.mxu0 0
      %822 = vmatmul.mubr.bf16.gmra.mrb[0].mxu0 %v693
      %v823 = vpop.f32.mrb[0].mxu0
      %v824 = vadd.f32 0.0, %v823
      %v825 = vpop.f32.mrb[0].mxu0
      %v826 = vpop.f32.mrb[0].mxu0
      %v827 = vadd.f32 0.0, %v826
      %v828 = vpop.f32.mrb[0].mxu0
      %829 = vmatprep.mubr.bf16.mxu0 0
      %830 = vmatmul.mubr.bf16.gmra.mrb[0].mxu0 %v696
      %v831 = vpop.f32.mrb[0].mxu0
      %v832 = vadd.f32 0.0, %v831
      %v833 = vpop.f32.mrb[0].mxu0
      %v834 = vpop.f32.mrb[0].mxu0
      %v835 = vadd.f32 0.0, %v834
      %v836 = vpop.f32.mrb[0].mxu0
      %837 = vmatprep.mubr.bf16.mxu0 0
      %838 = vmatmul.mubr.bf16.gmra.mrb[0].mxu0 %v699
      %v839 = vpop.f32.mrb[0].mxu0
      %v840 = vadd.f32 0.0, %v839
      %v841 = vpop.f32.mrb[0].mxu0
      %v842 = vpop.f32.mrb[0].mxu0
      %v843 = vadd.f32 0.0, %v842
      %v844 = vpop.f32.mrb[0].mxu0
      %845 = vmatprep.mubr.bf16.mxu0 0
      %846 = vmatmul.mubr.bf16.gmra.mrb[0].mxu0 %v702
      %v847 = vpop.f32.mrb[0].mxu0
      %v848 = vadd.f32 0.0, %v847
      %v849 = vpop.f32.mrb[0].mxu0
      %v850 = vpop.f32.mrb[0].mxu0
      %v851 = vadd.f32 0.0, %v850
      %v852 = vpop.f32.mrb[0].mxu0
      %853 = vmatprep.mubr.bf16.mxu0 0
      %854 = vmatmul.mubr.bf16.gmra.mrb[0].mxu0 %v705
      %v855 = vpop.f32.mrb[0].mxu0
      %v856 = vadd.f32 0.0, %v855
      %v857 = vpop.f32.mrb[0].mxu0
      %v858 = vpop.f32.mrb[0].mxu0
      %v859 = vadd.f32 0.0, %v858
      %v860 = vpop.f32.mrb[0].mxu0
      %861 = vmatprep.mubr.bf16.mxu0 0
      %862 = vmatmul.mubr.bf16.gmra.mrb[0].mxu0 %v708
      %v863 = vpop.f32.mrb[0].mxu0
      %v864 = vadd.f32 0.0, %v863
      %v865 = vpop.f32.mrb[0].mxu0
      %v866 = vpop.f32.mrb[0].mxu0
      %v867 = vadd.f32 0.0, %v866
      %v868 = vpop.f32.mrb[0].mxu0
      %869 = vmatprep.mubr.bf16.mxu0 0
      %870 = vmatmul.mubr.bf16.gmra.mrb[0].mxu0 %v711
      %v871 = vpop.f32.mrb[0].mxu0
      %v872 = vadd.f32 0.0, %v871
      %v873 = vpop.f32.mrb[0].mxu0
      %v874 = vpop.f32.mrb[0].mxu0
      %v875 = vadd.f32 0.0, %v874
      %v876 = vpop.f32.mrb[0].mxu0
      %877 = vdwg.mxu0
      %v910 = vunpack.c.l.b16 %v177
      %v911 = vunpack.c.l.b16 %v178
      %v912 = vunpack.c.l.b16 %v180
      %v913 = vunpack.c.l.b16 %v181
      %v914 = vunpack.c.l.b16 %v183
      %v915 = vunpack.c.l.b16 %v184
      %v916 = vunpack.c.l.b16 %v186
      %v917 = vunpack.c.l.b16 %v187
      %v918 = vunpack.c.l.b16 %v189
      %v919 = vunpack.c.l.b16 %v190
      %v920 = vunpack.c.l.b16 %v192
      %v921 = vunpack.c.l.b16 %v193
      %v922 = vunpack.c.l.b16 %v195
      %v923 = vunpack.c.l.b16 %v196
      %v924 = vunpack.c.l.b16 %v198
      %v925 = vunpack.c.l.b16 %v199
      %v926 = vunpack.c.l.b16 %v201
      %v927 = vunpack.c.l.b16 %v202
      %v928 = vunpack.c.l.b16 %v204
      %v929 = vunpack.c.l.b16 %v205
      %v930 = vunpack.c.l.b16 %v207
      %v931 = vunpack.c.l.b16 %v208
      %v932 = vunpack.c.l.b16 %v210
      %v933 = vunpack.c.l.b16 %v211
      %v934 = vunpack.c.l.b16 %v213
      %v935 = vunpack.c.l.b16 %v214
      %v936 = vunpack.c.l.b16 %v216
      %v937 = vunpack.c.l.b16 %v217
      %v938 = vunpack.c.l.b16 %v219
      %v939 = vunpack.c.l.b16 %v220
      %v940 = vunpack.c.l.b16 %v222
      %v941 = vunpack.c.l.b16 %v223
      %v942 = vpack.c.b16 %v911, %v910
      %v943 = vpack.c.b16 %v913, %v912
      %v944 = vpack.c.b16 %v915, %v914
      %v945 = vpack.c.b16 %v917, %v916
      %v946 = vpack.c.b16 %v919, %v918
      %v947 = vpack.c.b16 %v921, %v920
      %v948 = vpack.c.b16 %v923, %v922
      %v949 = vpack.c.b16 %v925, %v924
      %v950 = vpack.c.b16 %v927, %v926
      %v951 = vpack.c.b16 %v929, %v928
      %v952 = vpack.c.b16 %v931, %v930
      %v953 = vpack.c.b16 %v933, %v932
      %v954 = vpack.c.b16 %v935, %v934
      %v955 = vpack.c.b16 %v937, %v936
      %v956 = vpack.c.b16 %v939, %v938
      %v957 = vpack.c.b16 %v941, %v940
      %v959 = vsel %vm664, %v942, 0
      %v962 = vsel %vm664, %v943, 0
      %v965 = vsel %vm664, %v944, 0
      %v968 = vsel %vm664, %v945, 0
      %v971 = vsel %vm664, %v946, 0
      %v974 = vsel %vm664, %v947, 0
      %v977 = vsel %vm664, %v948, 0
      %v980 = vsel %vm664, %v949, 0
      %v983 = vsel %vm664, %v950, 0
      %v986 = vsel %vm664, %v951, 0
      %v989 = vsel %vm664, %v952, 0
      %v992 = vsel %vm664, %v953, 0
      %v995 = vsel %vm664, %v954, 0
      %v998 = vsel %vm664, %v955, 0
      %v1001 = vsel %vm664, %v956, 0
      %v1004 = vsel %vm664, %v957, 0
      %v1007 = vsel %vm713, %v169, 0
      %1009 = vmatprep.subr.bf16.mxu0 0
      %1010 = vmatpush1.bf16.msra.mxu0 %v1007
      %1011 = vmatprep.subr.bf16.mxu0 0
      %1012 = vmatpush1.bf16.msra.mxu0 0
      %1013 = vmatprep.subr.bf16.mxu0 0
      %1014 = vmatpush1.bf16.msra.mxu0 0
      %1015 = vmatprep.subr.bf16.mxu0 0
      %1016 = vmatpush1.bf16.msra.mxu0 0
      %1017 = vmatprep.subr.bf16.mxu0 0
      %1018 = vmatpush1.bf16.msra.mxu0 0
      %1019 = vmatprep.subr.bf16.mxu0 0
      %1020 = vmatpush1.bf16.msra.mxu0 0
      %1021 = vmatprep.subr.bf16.mxu0 0
      %1022 = vmatpush1.bf16.msra.mxu0 0
      %1023 = vmatprep.subr.bf16.mxu0 0
      %1024 = vmatpush1.bf16.msra.mxu0 0
      %1025 = vmatprep.subr.bf16.mxu0 0
      %1026 = vmatpush1.bf16.msra.mxu0 0
      %1027 = vmatprep.subr.bf16.mxu0 0
      %1028 = vmatpush1.bf16.msra.mxu0 0
      %1029 = vmatprep.subr.bf16.mxu0 0
      %1030 = vmatpush1.bf16.msra.mxu0 0
      %1031 = vmatprep.subr.bf16.mxu0 0
      %1032 = vmatpush1.bf16.msra.mxu0 0
      %1033 = vmatprep.subr.bf16.mxu0 0
      %1034 = vmatpush1.bf16.msra.mxu0 0
      %1035 = vmatprep.subr.bf16.mxu0 0
      %1036 = vmatpush1.bf16.msra.mxu0 0
      %1037 = vmatprep.subr.bf16.mxu0 0
      %1038 = vmatpush1.bf16.msra.mxu0 0
      %1039 = vmatprep.subr.bf16.mxu0 0
      %1040 = vmatpush1.bf16.msra.mxu0 0
      %1041 = vmatprep.mubr.bf16.mxu0 0
      %1042 = vmatmul.mubr.bf16.gmra.mrb[0].mxu0 %v959
      %v1043 = vpop.f32.mrb[0].mxu0
      %v1044 = vadd.f32 %v752, %v1043
      %v1045 = vpop.f32.mrb[0].mxu0
      %v1046 = vpop.f32.mrb[0].mxu0
      %v1047 = vadd.f32 %v755, %v1046
      %v1048 = vpop.f32.mrb[0].mxu0
      %1049 = vmatprep.mubr.bf16.mxu0 0
      %1050 = vmatmul.mubr.bf16.gmra.mrb[0].mxu0 %v962
      %v1051 = vpop.f32.mrb[0].mxu0
      %v1052 = vadd.f32 %v760, %v1051
      %v1053 = vpop.f32.mrb[0].mxu0
      %v1054 = vpop.f32.mrb[0].mxu0
      %v1055 = vadd.f32 %v763, %v1054
      %v1056 = vpop.f32.mrb[0].mxu0
      %1057 = vmatprep.mubr.bf16.mxu0 0
      %1058 = vmatmul.mubr.bf16.gmra.mrb[0].mxu0 %v965
      %v1059 = vpop.f32.mrb[0].mxu0
      %v1060 = vadd.f32 %v768, %v1059
      %v1061 = vpop.f32.mrb[0].mxu0
      %v1062 = vpop.f32.mrb[0].mxu0
      %v1063 = vadd.f32 %v771, %v1062
      %v1064 = vpop.f32.mrb[0].mxu0
      %1065 = vmatprep.mubr.bf16.mxu0 0
      %1066 = vmatmul.mubr.bf16.gmra.mrb[0].mxu0 %v968
      %v1067 = vpop.f32.mrb[0].mxu0
      %v1068 = vadd.f32 %v776, %v1067
      %v1069 = vpop.f32.mrb[0].mxu0
      %v1070 = vpop.f32.mrb[0].mxu0
      %v1071 = vadd.f32 %v779, %v1070
      %v1072 = vpop.f32.mrb[0].mxu0
      %1073 = vmatprep.mubr.bf16.mxu0 0
      %1074 = vmatmul.mubr.bf16.gmra.mrb[0].mxu0 %v971
      %v1075 = vpop.f32.mrb[0].mxu0
      %v1076 = vadd.f32 %v784, %v1075
      %v1077 = vpop.f32.mrb[0].mxu0
      %v1078 = vpop.f32.mrb[0].mxu0
      %v1079 = vadd.f32 %v787, %v1078
      %v1080 = vpop.f32.mrb[0].mxu0
      %1081 = vmatprep.mubr.bf16.mxu0 0
      %1082 = vmatmul.mubr.bf16.gmra.mrb[0].mxu0 %v974
      %v1083 = vpop.f32.mrb[0].mxu0
      %v1084 = vadd.f32 %v792, %v1083
      %v1085 = vpop.f32.mrb[0].mxu0
      %v1086 = vpop.f32.mrb[0].mxu0
      %v1087 = vadd.f32 %v795, %v1086
      %v1088 = vpop.f32.mrb[0].mxu0
      %1089 = vmatprep.mubr.bf16.mxu0 0
      %1090 = vmatmul.mubr.bf16.gmra.mrb[0].mxu0 %v977
      %v1091 = vpop.f32.mrb[0].mxu0
      %v1092 = vadd.f32 %v800, %v1091
      %v1093 = vpop.f32.mrb[0].mxu0
      %v1094 = vpop.f32.mrb[0].mxu0
      %v1095 = vadd.f32 %v803, %v1094
      %v1096 = vpop.f32.mrb[0].mxu0
      %1097 = vmatprep.mubr.bf16.mxu0 0
      %1098 = vmatmul.mubr.bf16.gmra.mrb[0].mxu0 %v980
      %v1099 = vpop.f32.mrb[0].mxu0
      %v1100 = vadd.f32 %v808, %v1099
      %v1101 = vpop.f32.mrb[0].mxu0
      %v1102 = vpop.f32.mrb[0].mxu0
      %v1103 = vadd.f32 %v811, %v1102
      %v1104 = vpop.f32.mrb[0].mxu0
      %1105 = vmatprep.mubr.bf16.mxu0 0
      %1106 = vmatmul.mubr.bf16.gmra.mrb[0].mxu0 %v983
      %v1107 = vpop.f32.mrb[0].mxu0
      %v1108 = vadd.f32 %v816, %v1107
      %v1109 = vpop.f32.mrb[0].mxu0
      %v1110 = vpop.f32.mrb[0].mxu0
      %v1111 = vadd.f32 %v819, %v1110
      %v1112 = vpop.f32.mrb[0].mxu0
      %1113 = vmatprep.mubr.bf16.mxu0 0
      %1114 = vmatmul.mubr.bf16.gmra.mrb[0].mxu0 %v986
      %v1115 = vpop.f32.mrb[0].mxu0
      %v1116 = vadd.f32 %v824, %v1115
      %v1117 = vpop.f32.mrb[0].mxu0
      %v1118 = vpop.f32.mrb[0].mxu0
      %v1119 = vadd.f32 %v827, %v1118
      %v1120 = vpop.f32.mrb[0].mxu0
      %1121 = vmatprep.mubr.bf16.mxu0 0
      %1122 = vmatmul.mubr.bf16.gmra.mrb[0].mxu0 %v989
      %v1123 = vpop.f32.mrb[0].mxu0
      %v1124 = vadd.f32 %v832, %v1123
      %v1125 = vpop.f32.mrb[0].mxu0
      %v1126 = vpop.f32.mrb[0].mxu0
      %v1127 = vadd.f32 %v835, %v1126
      %v1128 = vpop.f32.mrb[0].mxu0
      %1129 = vmatprep.mubr.bf16.mxu0 0
      %1130 = vmatmul.mubr.bf16.gmra.mrb[0].mxu0 %v992
      %v1131 = vpop.f32.mrb[0].mxu0
      %v1132 = vadd.f32 %v840, %v1131
      %v1133 = vpop.f32.mrb[0].mxu0
      %v1134 = vpop.f32.mrb[0].mxu0
      %v1135 = vadd.f32 %v843, %v1134
      %v1136 = vpop.f32.mrb[0].mxu0
      %1137 = vmatprep.mubr.bf16.mxu0 0
      %1138 = vmatmul.mubr.bf16.gmra.mrb[0].mxu0 %v995
      %v1139 = vpop.f32.mrb[0].mxu0
      %v1140 = vadd.f32 %v848, %v1139
      %v1141 = vpop.f32.mrb[0].mxu0
      %v1142 = vpop.f32.mrb[0].mxu0
      %v1143 = vadd.f32 %v851, %v1142
      %v1144 = vpop.f32.mrb[0].mxu0
      %1145 = vmatprep.mubr.bf16.mxu0 0
      %1146 = vmatmul.mubr.bf16.gmra.mrb[0].mxu0 %v998
      %v1147 = vpop.f32.mrb[0].mxu0
      %v1148 = vadd.f32 %v856, %v1147
      %v1149 = vpop.f32.mrb[0].mxu0
      %v1150 = vpop.f32.mrb[0].mxu0
      %v1151 = vadd.f32 %v859, %v1150
      %v1152 = vpop.f32.mrb[0].mxu0
      %1153 = vmatprep.mubr.bf16.mxu0 0
      %1154 = vmatmul.mubr.bf16.gmra.mrb[0].mxu0 %v1001
      %v1155 = vpop.f32.mrb[0].mxu0
      %v1156 = vadd.f32 %v864, %v1155
      %v1157 = vpop.f32.mrb[0].mxu0
      %v1158 = vpop.f32.mrb[0].mxu0
      %v1159 = vadd.f32 %v867, %v1158
      %v1160 = vpop.f32.mrb[0].mxu0
      %1161 = vmatprep.mubr.bf16.mxu0 0
      %1162 = vmatmul.mubr.bf16.gmra.mrb[0].mxu0 %v1004
      %v1163 = vpop.f32.mrb[0].mxu0
      %v1164 = vadd.f32 %v872, %v1163
      %v1165 = vpop.f32.mrb[0].mxu0
      %v1166 = vpop.f32.mrb[0].mxu0
      %v1167 = vadd.f32 %v875, %v1166
      %v1168 = vpop.f32.mrb[0].mxu0
      %1169 = vdwg.mxu0
      %vm1186 = vcmask 1042432
      %vm1187 = vcmask 1046532
      %vm1188 = vmor %vm1186, %vm1187
      %v1189 = vrot.slane %v177, 5
      %v1190 = vrot.slane %v1189, 4
      %v1191 = vrot.slane %v178, 5
      %v1192 = vsel %vm1188, %v1190, %v1191
      %v1193 = vrot.slane %v1191, 4
      %v1194 = vrot.slane %v179, 5
      %v1195 = vsel %vm1188, %v1193, %v1194
      %v1196 = vrot.slane %v180, 5
      %v1197 = vrot.slane %v1196, 4
      %v1198 = vrot.slane %v181, 5
      %v1199 = vsel %vm1188, %v1197, %v1198
      %v1200 = vrot.slane %v1198, 4
      %v1201 = vrot.slane %v182, 5
      %v1202 = vsel %vm1188, %v1200, %v1201
      %v1203 = vrot.slane %v183, 5
      %v1204 = vrot.slane %v1203, 4
      %v1205 = vrot.slane %v184, 5
      %v1206 = vsel %vm1188, %v1204, %v1205
      %v1207 = vrot.slane %v1205, 4
      %v1208 = vrot.slane %v185, 5
      %v1209 = vsel %vm1188, %v1207, %v1208
      %v1210 = vrot.slane %v186, 5
      %v1211 = vrot.slane %v1210, 4
      %v1212 = vrot.slane %v187, 5
      %v1213 = vsel %vm1188, %v1211, %v1212
      %v1214 = vrot.slane %v1212, 4
      %v1215 = vrot.slane %v188, 5
      %v1216 = vsel %vm1188, %v1214, %v1215
      %v1217 = vrot.slane %v189, 5
      %v1218 = vrot.slane %v1217, 4
      %v1219 = vrot.slane %v190, 5
      %v1220 = vsel %vm1188, %v1218, %v1219
      %v1221 = vrot.slane %v1219, 4
      %v1222 = vrot.slane %v191, 5
      %v1223 = vsel %vm1188, %v1221, %v1222
      %v1224 = vrot.slane %v192, 5
      %v1225 = vrot.slane %v1224, 4
      %v1226 = vrot.slane %v193, 5
      %v1227 = vsel %vm1188, %v1225, %v1226
      %v1228 = vrot.slane %v1226, 4
      %v1229 = vrot.slane %v194, 5
      %v1230 = vsel %vm1188, %v1228, %v1229
      %v1231 = vrot.slane %v195, 5
      %v1232 = vrot.slane %v1231, 4
      %v1233 = vrot.slane %v196, 5
      %v1234 = vsel %vm1188, %v1232, %v1233
      %v1235 = vrot.slane %v1233, 4
      %v1236 = vrot.slane %v197, 5
      %v1237 = vsel %vm1188, %v1235, %v1236
      %v1238 = vrot.slane %v198, 5
      %v1239 = vrot.slane %v1238, 4
      %v1240 = vrot.slane %v199, 5
      %v1241 = vsel %vm1188, %v1239, %v1240
      %v1242 = vrot.slane %v1240, 4
      %v1243 = vrot.slane %v200, 5
      %v1244 = vsel %vm1188, %v1242, %v1243
      %v1245 = vrot.slane %v201, 5
      %v1246 = vrot.slane %v1245, 4
      %v1247 = vrot.slane %v202, 5
      %v1248 = vsel %vm1188, %v1246, %v1247
      %v1249 = vrot.slane %v1247, 4
      %v1250 = vrot.slane %v203, 5
      %v1251 = vsel %vm1188, %v1249, %v1250
      %v1252 = vrot.slane %v204, 5
      %v1253 = vrot.slane %v1252, 4
      %v1254 = vrot.slane %v205, 5
      %v1255 = vsel %vm1188, %v1253, %v1254
      %v1256 = vrot.slane %v1254, 4
      %v1257 = vrot.slane %v206, 5
      %v1258 = vsel %vm1188, %v1256, %v1257
      %v1259 = vrot.slane %v207, 5
      %v1260 = vrot.slane %v1259, 4
      %v1261 = vrot.slane %v208, 5
      %v1262 = vsel %vm1188, %v1260, %v1261
      %v1263 = vrot.slane %v1261, 4
      %v1264 = vrot.slane %v209, 5
      %v1265 = vsel %vm1188, %v1263, %v1264
      %v1266 = vrot.slane %v210, 5
      %v1267 = vrot.slane %v1266, 4
      %v1268 = vrot.slane %v211, 5
      %v1269 = vsel %vm1188, %v1267, %v1268
      %v1270 = vrot.slane %v1268, 4
      %v1271 = vrot.slane %v212, 5
      %v1272 = vsel %vm1188, %v1270, %v1271
      %v1273 = vrot.slane %v213, 5
      %v1274 = vrot.slane %v1273, 4
      %v1275 = vrot.slane %v214, 5
      %v1276 = vsel %vm1188, %v1274, %v1275
      %v1277 = vrot.slane %v1275, 4
      %v1278 = vrot.slane %v215, 5
      %v1279 = vsel %vm1188, %v1277, %v1278
      %v1280 = vrot.slane %v216, 5
      %v1281 = vrot.slane %v1280, 4
      %v1282 = vrot.slane %v217, 5
      %v1283 = vsel %vm1188, %v1281, %v1282
      %v1284 = vrot.slane %v1282, 4
      %v1285 = vrot.slane %v218, 5
      %v1286 = vsel %vm1188, %v1284, %v1285
      %v1287 = vrot.slane %v219, 5
      %v1288 = vrot.slane %v1287, 4
      %v1289 = vrot.slane %v220, 5
      %v1290 = vsel %vm1188, %v1288, %v1289
      %v1291 = vrot.slane %v1289, 4
      %v1292 = vrot.slane %v221, 5
      %v1293 = vsel %vm1188, %v1291, %v1292
      %v1294 = vrot.slane %v222, 5
      %v1295 = vrot.slane %v1294, 4
      %v1296 = vrot.slane %v223, 5
      %v1297 = vsel %vm1188, %v1295, %v1296
      %v1298 = vrot.slane %v1296, 4
      %v1299 = vrot.slane %v224, 5
      %v1300 = vsel %vm1188, %v1298, %v1299
      %v1301 = vunpack.c.l.b16 %v1192
      %v1302 = vunpack.c.l.b16 %v1195
      %v1303 = vunpack.c.l.b16 %v1199
      %v1304 = vunpack.c.l.b16 %v1202
      %v1305 = vunpack.c.l.b16 %v1206
      %v1306 = vunpack.c.l.b16 %v1209
      %v1307 = vunpack.c.l.b16 %v1213
      %v1308 = vunpack.c.l.b16 %v1216
      %v1309 = vunpack.c.l.b16 %v1220
      %v1310 = vunpack.c.l.b16 %v1223
      %v1311 = vunpack.c.l.b16 %v1227
      %v1312 = vunpack.c.l.b16 %v1230
      %v1313 = vunpack.c.l.b16 %v1234
      %v1314 = vunpack.c.l.b16 %v1237
      %v1315 = vunpack.c.l.b16 %v1241
      %v1316 = vunpack.c.l.b16 %v1244
      %v1317 = vunpack.c.l.b16 %v1248
      %v1318 = vunpack.c.l.b16 %v1251
      %v1319 = vunpack.c.l.b16 %v1255
      %v1320 = vunpack.c.l.b16 %v1258
      %v1321 = vunpack.c.l.b16 %v1262
      %v1322 = vunpack.c.l.b16 %v1265
      %v1323 = vunpack.c.l.b16 %v1269
      %v1324 = vunpack.c.l.b16 %v1272
      %v1325 = vunpack.c.l.b16 %v1276
      %v1326 = vunpack.c.l.b16 %v1279
      %v1327 = vunpack.c.l.b16 %v1283
      %v1328 = vunpack.c.l.b16 %v1286
      %v1329 = vunpack.c.l.b16 %v1290
      %v1330 = vunpack.c.l.b16 %v1293
      %v1331 = vunpack.c.l.b16 %v1297
      %v1332 = vunpack.c.l.b16 %v1300
      %v1333 = vpack.c.b16 %v1302, %v1301
      %v1334 = vpack.c.b16 %v1304, %v1303
      %v1335 = vpack.c.b16 %v1306, %v1305
      %v1336 = vpack.c.b16 %v1308, %v1307
      %v1337 = vpack.c.b16 %v1310, %v1309
      %v1338 = vpack.c.b16 %v1312, %v1311
      %v1339 = vpack.c.b16 %v1314, %v1313
      %v1340 = vpack.c.b16 %v1316, %v1315
      %v1341 = vpack.c.b16 %v1318, %v1317
      %v1342 = vpack.c.b16 %v1320, %v1319
      %v1343 = vpack.c.b16 %v1322, %v1321
      %v1344 = vpack.c.b16 %v1324, %v1323
      %v1345 = vpack.c.b16 %v1326, %v1325
      %v1346 = vpack.c.b16 %v1328, %v1327
      %v1347 = vpack.c.b16 %v1330, %v1329
      %v1348 = vpack.c.b16 %v1332, %v1331
      %v1350 = vsel %vm664, %v1333, 0
      %v1353 = vsel %vm664, %v1334, 0
      %v1356 = vsel %vm664, %v1335, 0
      %v1359 = vsel %vm664, %v1336, 0
      %v1362 = vsel %vm664, %v1337, 0
      %v1365 = vsel %vm664, %v1338, 0
      %v1368 = vsel %vm664, %v1339, 0
      %v1371 = vsel %vm664, %v1340, 0
      %v1374 = vsel %vm664, %v1341, 0
      %v1377 = vsel %vm664, %v1342, 0
      %v1380 = vsel %vm664, %v1343, 0
      %v1383 = vsel %vm664, %v1344, 0
      %v1386 = vsel %vm664, %v1345, 0
      %v1389 = vsel %vm664, %v1346, 0
      %v1392 = vsel %vm664, %v1347, 0
      %v1395 = vsel %vm664, %v1348, 0
      %v1398 = vsel %vm713, %v170, 0
      %1400 = vmatprep.subr.bf16.mxu0 0
      %1401 = vmatpush1.bf16.msra.mxu0 %v1398
      %1402 = vmatprep.subr.bf16.mxu0 0
      %1403 = vmatpush1.bf16.msra.mxu0 0
      %1404 = vmatprep.subr.bf16.mxu0 0
      %1405 = vmatpush1.bf16.msra.mxu0 0
      %1406 = vmatprep.subr.bf16.mxu0 0
      %1407 = vmatpush1.bf16.msra.mxu0 0
      %1408 = vmatprep.subr.bf16.mxu0 0
      %1409 = vmatpush1.bf16.msra.mxu0 0
      %1410 = vmatprep.subr.bf16.mxu0 0
      %1411 = vmatpush1.bf16.msra.mxu0 0
      %1412 = vmatprep.subr.bf16.mxu0 0
      %1413 = vmatpush1.bf16.msra.mxu0 0
      %1414 = vmatprep.subr.bf16.mxu0 0
      %1415 = vmatpush1.bf16.msra.mxu0 0
      %1416 = vmatprep.subr.bf16.mxu0 0
      %1417 = vmatpush1.bf16.msra.mxu0 0
      %1418 = vmatprep.subr.bf16.mxu0 0
      %1419 = vmatpush1.bf16.msra.mxu0 0
      %1420 = vmatprep.subr.bf16.mxu0 0
      %1421 = vmatpush1.bf16.msra.mxu0 0
      %1422 = vmatprep.subr.bf16.mxu0 0
      %1423 = vmatpush1.bf16.msra.mxu0 0
      %1424 = vmatprep.subr.bf16.mxu0 0
      %1425 = vmatpush1.bf16.msra.mxu0 0
      %1426 = vmatprep.subr.bf16.mxu0 0
      %1427 = vmatpush1.bf16.msra.mxu0 0
      %1428 = vmatprep.subr.bf16.mxu0 0
      %1429 = vmatpush1.bf16.msra.mxu0 0
      %1430 = vmatprep.subr.bf16.mxu0 0
      %1431 = vmatpush1.bf16.msra.mxu0 0
      %1432 = vmatprep.mubr.bf16.mxu0 0
      %1433 = vmatmul.mubr.bf16.gmra.mrb[0].mxu0 %v1350
      %v1434 = vpop.f32.mrb[0].mxu0
      %v1435 = vadd.f32 0.0, %v1434
      %v1436 = vpop.f32.mrb[0].mxu0
      %v1437 = vpop.f32.mrb[0].mxu0
      %v1438 = vadd.f32 0.0, %v1437
      %v1439 = vpop.f32.mrb[0].mxu0
      %1440 = vmatprep.mubr.bf16.mxu0 0
      %1441 = vmatmul.mubr.bf16.gmra.mrb[0].mxu0 %v1353
      %v1442 = vpop.f32.mrb[0].mxu0
      %v1443 = vadd.f32 0.0, %v1442
      %v1444 = vpop.f32.mrb[0].mxu0
      %v1445 = vpop.f32.mrb[0].mxu0
      %v1446 = vadd.f32 0.0, %v1445
      %v1447 = vpop.f32.mrb[0].mxu0
      %1448 = vmatprep.mubr.bf16.mxu0 0
      %1449 = vmatmul.mubr.bf16.gmra.mrb[0].mxu0 %v1356
      %v1450 = vpop.f32.mrb[0].mxu0
      %v1451 = vadd.f32 0.0, %v1450
      %v1452 = vpop.f32.mrb[0].mxu0
      %v1453 = vpop.f32.mrb[0].mxu0
      %v1454 = vadd.f32 0.0, %v1453
      %v1455 = vpop.f32.mrb[0].mxu0
      %1456 = vmatprep.mubr.bf16.mxu0 0
      %1457 = vmatmul.mubr.bf16.gmra.mrb[0].mxu0 %v1359
      %v1458 = vpop.f32.mrb[0].mxu0
      %v1459 = vadd.f32 0.0, %v1458
      %v1460 = vpop.f32.mrb[0].mxu0
      %v1461 = vpop.f32.mrb[0].mxu0
      %v1462 = vadd.f32 0.0, %v1461
      %v1463 = vpop.f32.mrb[0].mxu0
      %1464 = vmatprep.mubr.bf16.mxu0 0
      %1465 = vmatmul.mubr.bf16.gmra.mrb[0].mxu0 %v1362
      %v1466 = vpop.f32.mrb[0].mxu0
      %v1467 = vadd.f32 0.0, %v1466
      %v1468 = vpop.f32.mrb[0].mxu0
      %v1469 = vpop.f32.mrb[0].mxu0
      %v1470 = vadd.f32 0.0, %v1469
      %v1471 = vpop.f32.mrb[0].mxu0
      %1472 = vmatprep.mubr.bf16.mxu0 0
      %1473 = vmatmul.mubr.bf16.gmra.mrb[0].mxu0 %v1365
      %v1474 = vpop.f32.mrb[0].mxu0
      %v1475 = vadd.f32 0.0, %v1474
      %v1476 = vpop.f32.mrb[0].mxu0
      %v1477 = vpop.f32.mrb[0].mxu0
      %v1478 = vadd.f32 0.0, %v1477
      %v1479 = vpop.f32.mrb[0].mxu0
      %1480 = vmatprep.mubr.bf16.mxu0 0
      %1481 = vmatmul.mubr.bf16.gmra.mrb[0].mxu0 %v1368
      %v1482 = vpop.f32.mrb[0].mxu0
      %v1483 = vadd.f32 0.0, %v1482
      %v1484 = vpop.f32.mrb[0].mxu0
      %v1485 = vpop.f32.mrb[0].mxu0
      %v1486 = vadd.f32 0.0, %v1485
      %v1487 = vpop.f32.mrb[0].mxu0
      %1488 = vmatprep.mubr.bf16.mxu0 0
      %1489 = vmatmul.mubr.bf16.gmra.mrb[0].mxu0 %v1371
      %v1490 = vpop.f32.mrb[0].mxu0
      %v1491 = vadd.f32 0.0, %v1490
      %v1492 = vpop.f32.mrb[0].mxu0
      %v1493 = vpop.f32.mrb[0].mxu0
      %v1494 = vadd.f32 0.0, %v1493
      %v1495 = vpop.f32.mrb[0].mxu0
      %1496 = vmatprep.mubr.bf16.mxu0 0
      %1497 = vmatmul.mubr.bf16.gmra.mrb[0].mxu0 %v1374
      %v1498 = vpop.f32.mrb[0].mxu0
      %v1499 = vadd.f32 0.0, %v1498
      %v1500 = vpop.f32.mrb[0].mxu0
      %v1501 = vpop.f32.mrb[0].mxu0
      %v1502 = vadd.f32 0.0, %v1501
      %v1503 = vpop.f32.mrb[0].mxu0
      %1504 = vmatprep.mubr.bf16.mxu0 0
      %1505 = vmatmul.mubr.bf16.gmra.mrb[0].mxu0 %v1377
      %v1506 = vpop.f32.mrb[0].mxu0
      %v1507 = vadd.f32 0.0, %v1506
      %v1508 = vpop.f32.mrb[0].mxu0
      %v1509 = vpop.f32.mrb[0].mxu0
      %v1510 = vadd.f32 0.0, %v1509
      %v1511 = vpop.f32.mrb[0].mxu0
      %1512 = vmatprep.mubr.bf16.mxu0 0
      %1513 = vmatmul.mubr.bf16.gmra.mrb[0].mxu0 %v1380
      %v1514 = vpop.f32.mrb[0].mxu0
      %v1515 = vadd.f32 0.0, %v1514
      %v1516 = vpop.f32.mrb[0].mxu0
      %v1517 = vpop.f32.mrb[0].mxu0
      %v1518 = vadd.f32 0.0, %v1517
      %v1519 = vpop.f32.mrb[0].mxu0
      %1520 = vmatprep.mubr.bf16.mxu0 0
      %1521 = vmatmul.mubr.bf16.gmra.mrb[0].mxu0 %v1383
      %v1522 = vpop.f32.mrb[0].mxu0
      %v1523 = vadd.f32 0.0, %v1522
      %v1524 = vpop.f32.mrb[0].mxu0
      %v1525 = vpop.f32.mrb[0].mxu0
      %v1526 = vadd.f32 0.0, %v1525
      %v1527 = vpop.f32.mrb[0].mxu0
      %1528 = vmatprep.mubr.bf16.mxu0 0
      %1529 = vmatmul.mubr.bf16.gmra.mrb[0].mxu0 %v1386
      %v1530 = vpop.f32.mrb[0].mxu0
      %v1531 = vadd.f32 0.0, %v1530
      %v1532 = vpop.f32.mrb[0].mxu0
      %v1533 = vpop.f32.mrb[0].mxu0
      %v1534 = vadd.f32 0.0, %v1533
      %v1535 = vpop.f32.mrb[0].mxu0
      %1536 = vmatprep.mubr.bf16.mxu0 0
      %1537 = vmatmul.mubr.bf16.gmra.mrb[0].mxu0 %v1389
      %v1538 = vpop.f32.mrb[0].mxu0
      %v1539 = vadd.f32 0.0, %v1538
      %v1540 = vpop.f32.mrb[0].mxu0
      %v1541 = vpop.f32.mrb[0].mxu0
      %v1542 = vadd.f32 0.0, %v1541
      %v1543 = vpop.f32.mrb[0].mxu0
      %1544 = vmatprep.mubr.bf16.mxu0 0
      %1545 = vmatmul.mubr.bf16.gmra.mrb[0].mxu0 %v1392
      %v1546 = vpop.f32.mrb[0].mxu0
      %v1547 = vadd.f32 0.0, %v1546
      %v1548 = vpop.f32.mrb[0].mxu0
      %v1549 = vpop.f32.mrb[0].mxu0
      %v1550 = vadd.f32 0.0, %v1549
      %v1551 = vpop.f32.mrb[0].mxu0
      %1552 = vmatprep.mubr.bf16.mxu0 0
      %1553 = vmatmul.mubr.bf16.gmra.mrb[0].mxu0 %v1395
      %v1554 = vpop.f32.mrb[0].mxu0
      %v1555 = vadd.f32 0.0, %v1554
      %v1556 = vpop.f32.mrb[0].mxu0
      %v1557 = vpop.f32.mrb[0].mxu0
      %v1558 = vadd.f32 0.0, %v1557
      %v1559 = vpop.f32.mrb[0].mxu0
      %1560 = vdwg.mxu0
      %v1561 = vadd.f32 %v1044, %v1435
      %v1562 = vadd.f32 %v1047, %v1438
      %v1563 = vadd.f32 %v1052, %v1443
      %v1564 = vadd.f32 %v1055, %v1446
      %v1565 = vadd.f32 %v1060, %v1451
      %v1566 = vadd.f32 %v1063, %v1454
      %v1567 = vadd.f32 %v1068, %v1459
      %v1568 = vadd.f32 %v1071, %v1462
      %v1569 = vadd.f32 %v1076, %v1467
      %v1570 = vadd.f32 %v1079, %v1470
      %v1571 = vadd.f32 %v1084, %v1475
      %v1572 = vadd.f32 %v1087, %v1478
      %v1573 = vadd.f32 %v1092, %v1483
      %v1574 = vadd.f32 %v1095, %v1486
      %v1575 = vadd.f32 %v1100, %v1491
      %v1576 = vadd.f32 %v1103, %v1494
      %v1577 = vadd.f32 %v1108, %v1499
      %v1578 = vadd.f32 %v1111, %v1502
      %v1579 = vadd.f32 %v1116, %v1507
      %v1580 = vadd.f32 %v1119, %v1510
      %v1581 = vadd.f32 %v1124, %v1515
      %v1582 = vadd.f32 %v1127, %v1518
      %v1583 = vadd.f32 %v1132, %v1523
      %v1584 = vadd.f32 %v1135, %v1526
      %v1585 = vadd.f32 %v1140, %v1531
      %v1586 = vadd.f32 %v1143, %v1534
      %v1587 = vadd.f32 %v1148, %v1539
      %v1588 = vadd.f32 %v1151, %v1542
      %v1589 = vadd.f32 %v1156, %v1547
      %v1590 = vadd.f32 %v1159, %v1550
      %v1591 = vadd.f32 %v1164, %v1555
      %v1592 = vadd.f32 %v1167, %v1558
      %s1593 = sadd.s32 %s168, 1
      %s1594 = smul.u32 %s1593, 3
      %s1595 = smul.addr %s1594, 4
      %s1596 = scalar_lea.vmem %s156, %s1595
      %v1597 = vld [vmem:[%s1596] sm:$0xf]
      %v1598 = vld [vmem:[%s1596 + $0x4] sm:$0xf]
      %v1599 = vld [vmem:[%s1596 + $0x8] sm:$0x1]
      %v1600 = vld [vmem:[%s1596 + $0xc] sm:$0xf]
      %v1601 = vld [vmem:[%s1596 + $0x10] sm:$0xf]
      %v1602 = vld [vmem:[%s1596 + $0x14] sm:$0x1]
      %v1603 = vld [vmem:[%s1596 + $0x18] sm:$0xf]
      %v1604 = vld [vmem:[%s1596 + $0x1c] sm:$0xf]
      %v1605 = vld [vmem:[%s1596 + $0x20] sm:$0x1]
      %v1606 = vld [vmem:[%s1596 + $0x24] sm:$0xf]
      %v1607 = vld [vmem:[%s1596 + $0x28] sm:$0xf]
      %v1608 = vld [vmem:[%s1596 + $0x2c] sm:$0x1]
      %v1609 = vld [vmem:[%s1596 + $0x30] sm:$0xf]
      %v1610 = vld [vmem:[%s1596 + $0x34] sm:$0xf]
      %v1611 = vld [vmem:[%s1596 + $0x38] sm:$0x1]
      %v1612 = vld [vmem:[%s1596 + $0x3c] sm:$0xf]
      %v1613 = vld [vmem:[%s1596 + $0x40] sm:$0xf]
      %v1614 = vld [vmem:[%s1596 + $0x44] sm:$0x1]
      %v1615 = vld [vmem:[%s1596 + $0x48] sm:$0xf]
      %v1616 = vld [vmem:[%s1596 + $0x4c] sm:$0xf]
      %v1617 = vld [vmem:[%s1596 + $0x50] sm:$0x1]
      %v1618 = vld [vmem:[%s1596 + $0x54] sm:$0xf]
      %v1619 = vld [vmem:[%s1596 + $0x58] sm:$0xf]
      %v1620 = vld [vmem:[%s1596 + $0x5c] sm:$0x1]
      %v1621 = vld [vmem:[%s1596 + $0x60] sm:$0xf]
      %v1622 = vld [vmem:[%s1596 + $0x64] sm:$0xf]
      %v1623 = vld [vmem:[%s1596 + $0x68] sm:$0x1]
      %v1624 = vld [vmem:[%s1596 + $0x6c] sm:$0xf]
      %v1625 = vld [vmem:[%s1596 + $0x70] sm:$0xf]
      %v1626 = vld [vmem:[%s1596 + $0x74] sm:$0x1]
      %v1627 = vld [vmem:[%s1596 + $0x78] sm:$0xf]
      %v1628 = vld [vmem:[%s1596 + $0x7c] sm:$0xf]
      %v1629 = vld [vmem:[%s1596 + $0x80] sm:$0x1]
      %v1630 = vld [vmem:[%s1596 + $0x84] sm:$0xf]
      %v1631 = vld [vmem:[%s1596 + $0x88] sm:$0xf]
      %v1632 = vld [vmem:[%s1596 + $0x8c] sm:$0x1]
      %v1633 = vld [vmem:[%s1596 + $0x90] sm:$0xf]
      %v1634 = vld [vmem:[%s1596 + $0x94] sm:$0xf]
      %v1635 = vld [vmem:[%s1596 + $0x98] sm:$0x1]
      %v1636 = vld [vmem:[%s1596 + $0x9c] sm:$0xf]
      %v1637 = vld [vmem:[%s1596 + $0xa0] sm:$0xf]
      %v1638 = vld [vmem:[%s1596 + $0xa4] sm:$0x1]
      %v1639 = vld [vmem:[%s1596 + $0xa8] sm:$0xf]
      %v1640 = vld [vmem:[%s1596 + $0xac] sm:$0xf]
      %v1641 = vld [vmem:[%s1596 + $0xb0] sm:$0x1]
      %v1642 = vld [vmem:[%s1596 + $0xb4] sm:$0xf]
      %v1643 = vld [vmem:[%s1596 + $0xb8] sm:$0xf]
      %v1644 = vld [vmem:[%s1596 + $0xbc] sm:$0x1]
      %v1677 = vunpack.c.l.b16 %v1597
      %v1678 = vunpack.c.l.b16 %v1598
      %v1679 = vunpack.c.l.b16 %v1600
      %v1680 = vunpack.c.l.b16 %v1601
      %v1681 = vunpack.c.l.b16 %v1603
      %v1682 = vunpack.c.l.b16 %v1604
      %v1683 = vunpack.c.l.b16 %v1606
      %v1684 = vunpack.c.l.b16 %v1607
      %v1685 = vunpack.c.l.b16 %v1609
      %v1686 = vunpack.c.l.b16 %v1610
      %v1687 = vunpack.c.l.b16 %v1612
      %v1688 = vunpack.c.l.b16 %v1613
      %v1689 = vunpack.c.l.b16 %v1615
      %v1690 = vunpack.c.l.b16 %v1616
      %v1691 = vunpack.c.l.b16 %v1618
      %v1692 = vunpack.c.l.b16 %v1619
      %v1693 = vunpack.c.l.b16 %v1621
      %v1694 = vunpack.c.l.b16 %v1622
      %v1695 = vunpack.c.l.b16 %v1624
      %v1696 = vunpack.c.l.b16 %v1625
      %v1697 = vunpack.c.l.b16 %v1627
      %v1698 = vunpack.c.l.b16 %v1628
      %v1699 = vunpack.c.l.b16 %v1630
      %v1700 = vunpack.c.l.b16 %v1631
      %v1701 = vunpack.c.l.b16 %v1633
      %v1702 = vunpack.c.l.b16 %v1634
      %v1703 = vunpack.c.l.b16 %v1636
      %v1704 = vunpack.c.l.b16 %v1637
      %v1705 = vunpack.c.l.b16 %v1639
      %v1706 = vunpack.c.l.b16 %v1640
      %v1707 = vunpack.c.l.b16 %v1642
      %v1708 = vunpack.c.l.b16 %v1643
      %v1709 = vpack.c.b16 %v1678, %v1677
      %v1710 = vpack.c.b16 %v1680, %v1679
      %v1711 = vpack.c.b16 %v1682, %v1681
      %v1712 = vpack.c.b16 %v1684, %v1683
      %v1713 = vpack.c.b16 %v1686, %v1685
      %v1714 = vpack.c.b16 %v1688, %v1687
      %v1715 = vpack.c.b16 %v1690, %v1689
      %v1716 = vpack.c.b16 %v1692, %v1691
      %v1717 = vpack.c.b16 %v1694, %v1693
      %v1718 = vpack.c.b16 %v1696, %v1695
      %v1719 = vpack.c.b16 %v1698, %v1697
      %v1720 = vpack.c.b16 %v1700, %v1699
      %v1721 = vpack.c.b16 %v1702, %v1701
      %v1722 = vpack.c.b16 %v1704, %v1703
      %v1723 = vpack.c.b16 %v1706, %v1705
      %v1724 = vpack.c.b16 %v1708, %v1707
      %v1726 = vunpack.c.l.b16 %v170
      %v1727 = vpack.c.b16 %v1726, %v1726
      %v1728 = vrot.slane %v1727, 2
      %v1730 = vsel %vm664, %v1709, 0
      %v1733 = vsel %vm664, %v1710, 0
      %v1736 = vsel %vm664, %v1711, 0
      %v1739 = vsel %vm664, %v1712, 0
      %v1742 = vsel %vm664, %v1713, 0
      %v1745 = vsel %vm664, %v1714, 0
      %v1748 = vsel %vm664, %v1715, 0
      %v1751 = vsel %vm664, %v1716, 0
      %v1754 = vsel %vm664, %v1717, 0
      %v1757 = vsel %vm664, %v1718, 0
      %v1760 = vsel %vm664, %v1719, 0
      %v1763 = vsel %vm664, %v1720, 0
      %v1766 = vsel %vm664, %v1721, 0
      %v1769 = vsel %vm664, %v1722, 0
      %v1772 = vsel %vm664, %v1723, 0
      %v1775 = vsel %vm664, %v1724, 0
      %v1778 = vsel %vm713, %v1728, 0
      %1780 = vmatprep.subr.bf16.mxu0 0
      %1781 = vmatpush1.bf16.msra.mxu0 %v1778
      %1782 = vmatprep.subr.bf16.mxu0 0
      %1783 = vmatpush1.bf16.msra.mxu0 0
      %1784 = vmatprep.subr.bf16.mxu0 0
      %1785 = vmatpush1.bf16.msra.mxu0 0
      %1786 = vmatprep.subr.bf16.mxu0 0
      %1787 = vmatpush1.bf16.msra.mxu0 0
      %1788 = vmatprep.subr.bf16.mxu0 0
      %1789 = vmatpush1.bf16.msra.mxu0 0
      %1790 = vmatprep.subr.bf16.mxu0 0
      %1791 = vmatpush1.bf16.msra.mxu0 0
      %1792 = vmatprep.subr.bf16.mxu0 0
      %1793 = vmatpush1.bf16.msra.mxu0 0
      %1794 = vmatprep.subr.bf16.mxu0 0
      %1795 = vmatpush1.bf16.msra.mxu0 0
      %1796 = vmatprep.subr.bf16.mxu0 0
      %1797 = vmatpush1.bf16.msra.mxu0 0
      %1798 = vmatprep.subr.bf16.mxu0 0
      %1799 = vmatpush1.bf16.msra.mxu0 0
      %1800 = vmatprep.subr.bf16.mxu0 0
      %1801 = vmatpush1.bf16.msra.mxu0 0
      %1802 = vmatprep.subr.bf16.mxu0 0
      %1803 = vmatpush1.bf16.msra.mxu0 0
      %1804 = vmatprep.subr.bf16.mxu0 0
      %1805 = vmatpush1.bf16.msra.mxu0 0
      %1806 = vmatprep.subr.bf16.mxu0 0
      %1807 = vmatpush1.bf16.msra.mxu0 0
      %1808 = vmatprep.subr.bf16.mxu0 0
      %1809 = vmatpush1.bf16.msra.mxu0 0
      %1810 = vmatprep.subr.bf16.mxu0 0
      %1811 = vmatpush1.bf16.msra.mxu0 0
      %1812 = vmatprep.mubr.bf16.mxu0 0
      %1813 = vmatmul.mubr.bf16.gmra.mrb[0].mxu0 %v1730
      %v1814 = vpop.f32.mrb[0].mxu0
      %v1815 = vadd.f32 0.0, %v1814
      %v1816 = vpop.f32.mrb[0].mxu0
      %v1817 = vpop.f32.mrb[0].mxu0
      %v1818 = vadd.f32 0.0, %v1817
      %v1819 = vpop.f32.mrb[0].mxu0
      %1820 = vmatprep.mubr.bf16.mxu0 0
      %1821 = vmatmul.mubr.bf16.gmra.mrb[0].mxu0 %v1733
      %v1822 = vpop.f32.mrb[0].mxu0
      %v1823 = vadd.f32 0.0, %v1822
      %v1824 = vpop.f32.mrb[0].mxu0
      %v1825 = vpop.f32.mrb[0].mxu0
      %v1826 = vadd.f32 0.0, %v1825
      %v1827 = vpop.f32.mrb[0].mxu0
      %1828 = vmatprep.mubr.bf16.mxu0 0
      %1829 = vmatmul.mubr.bf16.gmra.mrb[0].mxu0 %v1736
      %v1830 = vpop.f32.mrb[0].mxu0
      %v1831 = vadd.f32 0.0, %v1830
      %v1832 = vpop.f32.mrb[0].mxu0
      %v1833 = vpop.f32.mrb[0].mxu0
      %v1834 = vadd.f32 0.0, %v1833
      %v1835 = vpop.f32.mrb[0].mxu0
      %1836 = vmatprep.mubr.bf16.mxu0 0
      %1837 = vmatmul.mubr.bf16.gmra.mrb[0].mxu0 %v1739
      %v1838 = vpop.f32.mrb[0].mxu0
      %v1839 = vadd.f32 0.0, %v1838
      %v1840 = vpop.f32.mrb[0].mxu0
      %v1841 = vpop.f32.mrb[0].mxu0
      %v1842 = vadd.f32 0.0, %v1841
      %v1843 = vpop.f32.mrb[0].mxu0
      %1844 = vmatprep.mubr.bf16.mxu0 0
      %1845 = vmatmul.mubr.bf16.gmra.mrb[0].mxu0 %v1742
      %v1846 = vpop.f32.mrb[0].mxu0
      %v1847 = vadd.f32 0.0, %v1846
      %v1848 = vpop.f32.mrb[0].mxu0
      %v1849 = vpop.f32.mrb[0].mxu0
      %v1850 = vadd.f32 0.0, %v1849
      %v1851 = vpop.f32.mrb[0].mxu0
      %1852 = vmatprep.mubr.bf16.mxu0 0
      %1853 = vmatmul.mubr.bf16.gmra.mrb[0].mxu0 %v1745
      %v1854 = vpop.f32.mrb[0].mxu0
      %v1855 = vadd.f32 0.0, %v1854
      %v1856 = vpop.f32.mrb[0].mxu0
      %v1857 = vpop.f32.mrb[0].mxu0
      %v1858 = vadd.f32 0.0, %v1857
      %v1859 = vpop.f32.mrb[0].mxu0
      %1860 = vmatprep.mubr.bf16.mxu0 0
      %1861 = vmatmul.mubr.bf16.gmra.mrb[0].mxu0 %v1748
      %v1862 = vpop.f32.mrb[0].mxu0
      %v1863 = vadd.f32 0.0, %v1862
      %v1864 = vpop.f32.mrb[0].mxu0
      %v1865 = vpop.f32.mrb[0].mxu0
      %v1866 = vadd.f32 0.0, %v1865
      %v1867 = vpop.f32.mrb[0].mxu0
      %1868 = vmatprep.mubr.bf16.mxu0 0
      %1869 = vmatmul.mubr.bf16.gmra.mrb[0].mxu0 %v1751
      %v1870 = vpop.f32.mrb[0].mxu0
      %v1871 = vadd.f32 0.0, %v1870
      %v1872 = vpop.f32.mrb[0].mxu0
      %v1873 = vpop.f32.mrb[0].mxu0
      %v1874 = vadd.f32 0.0, %v1873
      %v1875 = vpop.f32.mrb[0].mxu0
      %1876 = vmatprep.mubr.bf16.mxu0 0
      %1877 = vmatmul.mubr.bf16.gmra.mrb[0].mxu0 %v1754
      %v1878 = vpop.f32.mrb[0].mxu0
      %v1879 = vadd.f32 0.0, %v1878
      %v1880 = vpop.f32.mrb[0].mxu0
      %v1881 = vpop.f32.mrb[0].mxu0
      %v1882 = vadd.f32 0.0, %v1881
      %v1883 = vpop.f32.mrb[0].mxu0
      %1884 = vmatprep.mubr.bf16.mxu0 0
      %1885 = vmatmul.mubr.bf16.gmra.mrb[0].mxu0 %v1757
      %v1886 = vpop.f32.mrb[0].mxu0
      %v1887 = vadd.f32 0.0, %v1886
      %v1888 = vpop.f32.mrb[0].mxu0
      %v1889 = vpop.f32.mrb[0].mxu0
      %v1890 = vadd.f32 0.0, %v1889
      %v1891 = vpop.f32.mrb[0].mxu0
      %1892 = vmatprep.mubr.bf16.mxu0 0
      %1893 = vmatmul.mubr.bf16.gmra.mrb[0].mxu0 %v1760
      %v1894 = vpop.f32.mrb[0].mxu0
      %v1895 = vadd.f32 0.0, %v1894
      %v1896 = vpop.f32.mrb[0].mxu0
      %v1897 = vpop.f32.mrb[0].mxu0
      %v1898 = vadd.f32 0.0, %v1897
      %v1899 = vpop.f32.mrb[0].mxu0
      %1900 = vmatprep.mubr.bf16.mxu0 0
      %1901 = vmatmul.mubr.bf16.gmra.mrb[0].mxu0 %v1763
      %v1902 = vpop.f32.mrb[0].mxu0
      %v1903 = vadd.f32 0.0, %v1902
      %v1904 = vpop.f32.mrb[0].mxu0
      %v1905 = vpop.f32.mrb[0].mxu0
      %v1906 = vadd.f32 0.0, %v1905
      %v1907 = vpop.f32.mrb[0].mxu0
      %1908 = vmatprep.mubr.bf16.mxu0 0
      %1909 = vmatmul.mubr.bf16.gmra.mrb[0].mxu0 %v1766
      %v1910 = vpop.f32.mrb[0].mxu0
      %v1911 = vadd.f32 0.0, %v1910
      %v1912 = vpop.f32.mrb[0].mxu0
      %v1913 = vpop.f32.mrb[0].mxu0
      %v1914 = vadd.f32 0.0, %v1913
      %v1915 = vpop.f32.mrb[0].mxu0
      %1916 = vmatprep.mubr.bf16.mxu0 0
      %1917 = vmatmul.mubr.bf16.gmra.mrb[0].mxu0 %v1769
      %v1918 = vpop.f32.mrb[0].mxu0
      %v1919 = vadd.f32 0.0, %v1918
      %v1920 = vpop.f32.mrb[0].mxu0
      %v1921 = vpop.f32.mrb[0].mxu0
      %v1922 = vadd.f32 0.0, %v1921
      %v1923 = vpop.f32.mrb[0].mxu0
      %1924 = vmatprep.mubr.bf16.mxu0 0
      %1925 = vmatmul.mubr.bf16.gmra.mrb[0].mxu0 %v1772
      %v1926 = vpop.f32.mrb[0].mxu0
      %v1927 = vadd.f32 0.0, %v1926
      %v1928 = vpop.f32.mrb[0].mxu0
      %v1929 = vpop.f32.mrb[0].mxu0
      %v1930 = vadd.f32 0.0, %v1929
      %v1931 = vpop.f32.mrb[0].mxu0
      %1932 = vmatprep.mubr.bf16.mxu0 0
      %1933 = vmatmul.mubr.bf16.gmra.mrb[0].mxu0 %v1775
      %v1934 = vpop.f32.mrb[0].mxu0
      %v1935 = vadd.f32 0.0, %v1934
      %v1936 = vpop.f32.mrb[0].mxu0
      %v1937 = vpop.f32.mrb[0].mxu0
      %v1938 = vadd.f32 0.0, %v1937
      %v1939 = vpop.f32.mrb[0].mxu0
      %1940 = vdwg.mxu0
      %v1941 = vadd.f32 %v1561, %v1815
      %v1942 = vadd.f32 %v1562, %v1818
      %v1943 = vadd.f32 %v1563, %v1823
      %v1944 = vadd.f32 %v1564, %v1826
      %v1945 = vadd.f32 %v1565, %v1831
      %v1946 = vadd.f32 %v1566, %v1834
      %v1947 = vadd.f32 %v1567, %v1839
      %v1948 = vadd.f32 %v1568, %v1842
      %v1949 = vadd.f32 %v1569, %v1847
      %v1950 = vadd.f32 %v1570, %v1850
      %v1951 = vadd.f32 %v1571, %v1855
      %v1952 = vadd.f32 %v1572, %v1858
      %v1953 = vadd.f32 %v1573, %v1863
      %v1954 = vadd.f32 %v1574, %v1866
      %v1955 = vadd.f32 %v1575, %v1871
      %v1956 = vadd.f32 %v1576, %v1874
      %v1957 = vadd.f32 %v1577, %v1879
      %v1958 = vadd.f32 %v1578, %v1882
      %v1959 = vadd.f32 %v1579, %v1887
      %v1960 = vadd.f32 %v1580, %v1890
      %v1961 = vadd.f32 %v1581, %v1895
      %v1962 = vadd.f32 %v1582, %v1898
      %v1963 = vadd.f32 %v1583, %v1903
      %v1964 = vadd.f32 %v1584, %v1906
      %v1965 = vadd.f32 %v1585, %v1911
      %v1966 = vadd.f32 %v1586, %v1914
      %v1967 = vadd.f32 %v1587, %v1919
      %v1968 = vadd.f32 %v1588, %v1922
      %v1969 = vadd.f32 %v1589, %v1927
      %v1970 = vadd.f32 %v1590, %v1930
      %v1971 = vadd.f32 %v1591, %v1935
      %v1972 = vadd.f32 %v1592, %v1938
      %v1974 = vshrl.u32 %v1597, 16
      %v1976 = vrot.slane %v1974, 4
      %v1977 = vshll.u32 %v1597, 16
      %v1979 = vrot.slane %v1977, 5
      %v1980 = vor.u32 %v1976, %v1979
      %v1981 = vrot.slane %v1980, 4
      %v1983 = vshll.u32 %v1598, 16
      %v1985 = vrot.slane %v1983, 5
      %v1986 = vsel %vm227, %v1981, %v1985
      %v1987 = vshrl.u32 %v1598, 16
      %v1989 = vrot.slane %v1987, 4
      %v1990 = vor.u32 %v1989, %v1985
      %v1991 = vrot.slane %v1990, 4
      %v1993 = vshll.u32 %v1599, 16
      %v1995 = vrot.slane %v1993, 5
      %v1996 = vsel %vm227, %v1991, %v1995
      %v1998 = vshrl.u32 %v1600, 16
      %v2000 = vrot.slane %v1998, 4
      %v2001 = vshll.u32 %v1600, 16
      %v2003 = vrot.slane %v2001, 5
      %v2004 = vor.u32 %v2000, %v2003
      %v2005 = vrot.slane %v2004, 4
      %v2007 = vshll.u32 %v1601, 16
      %v2009 = vrot.slane %v2007, 5
      %v2010 = vsel %vm227, %v2005, %v2009
      %v2011 = vshrl.u32 %v1601, 16
      %v2013 = vrot.slane %v2011, 4
      %v2014 = vor.u32 %v2013, %v2009
      %v2015 = vrot.slane %v2014, 4
      %v2017 = vshll.u32 %v1602, 16
      %v2019 = vrot.slane %v2017, 5
      %v2020 = vsel %vm227, %v2015, %v2019
      %v2022 = vshrl.u32 %v1603, 16
      %v2024 = vrot.slane %v2022, 4
      %v2025 = vshll.u32 %v1603, 16
      %v2027 = vrot.slane %v2025, 5
      %v2028 = vor.u32 %v2024, %v2027
      %v2029 = vrot.slane %v2028, 4
      %v2031 = vshll.u32 %v1604, 16
      %v2033 = vrot.slane %v2031, 5
      %v2034 = vsel %vm227, %v2029, %v2033
      %v2035 = vshrl.u32 %v1604, 16
      %v2037 = vrot.slane %v2035, 4
      %v2038 = vor.u32 %v2037, %v2033
      %v2039 = vrot.slane %v2038, 4
      %v2041 = vshll.u32 %v1605, 16
      %v2043 = vrot.slane %v2041, 5
      %v2044 = vsel %vm227, %v2039, %v2043
      %v2046 = vshrl.u32 %v1606, 16
      %v2048 = vrot.slane %v2046, 4
      %v2049 = vshll.u32 %v1606, 16
      %v2051 = vrot.slane %v2049, 5
      %v2052 = vor.u32 %v2048, %v2051
      %v2053 = vrot.slane %v2052, 4
      %v2055 = vshll.u32 %v1607, 16
      %v2057 = vrot.slane %v2055, 5
      %v2058 = vsel %vm227, %v2053, %v2057
      %v2059 = vshrl.u32 %v1607, 16
      %v2061 = vrot.slane %v2059, 4
      %v2062 = vor.u32 %v2061, %v2057
      %v2063 = vrot.slane %v2062, 4
      %v2065 = vshll.u32 %v1608, 16
      %v2067 = vrot.slane %v2065, 5
      %v2068 = vsel %vm227, %v2063, %v2067
      %v2070 = vshrl.u32 %v1609, 16
      %v2072 = vrot.slane %v2070, 4
      %v2073 = vshll.u32 %v1609, 16
      %v2075 = vrot.slane %v2073, 5
      %v2076 = vor.u32 %v2072, %v2075
      %v2077 = vrot.slane %v2076, 4
      %v2079 = vshll.u32 %v1610, 16
      %v2081 = vrot.slane %v2079, 5
      %v2082 = vsel %vm227, %v2077, %v2081
      %v2083 = vshrl.u32 %v1610, 16
      %v2085 = vrot.slane %v2083, 4
      %v2086 = vor.u32 %v2085, %v2081
      %v2087 = vrot.slane %v2086, 4
      %v2089 = vshll.u32 %v1611, 16
      %v2091 = vrot.slane %v2089, 5
      %v2092 = vsel %vm227, %v2087, %v2091
      %v2094 = vshrl.u32 %v1612, 16
      %v2096 = vrot.slane %v2094, 4
      %v2097 = vshll.u32 %v1612, 16
      %v2099 = vrot.slane %v2097, 5
      %v2100 = vor.u32 %v2096, %v2099
      %v2101 = vrot.slane %v2100, 4
      %v2103 = vshll.u32 %v1613, 16
      %v2105 = vrot.slane %v2103, 5
      %v2106 = vsel %vm227, %v2101, %v2105
      %v2107 = vshrl.u32 %v1613, 16
      %v2109 = vrot.slane %v2107, 4
      %v2110 = vor.u32 %v2109, %v2105
      %v2111 = vrot.slane %v2110, 4
      %v2113 = vshll.u32 %v1614, 16
      %v2115 = vrot.slane %v2113, 5
      %v2116 = vsel %vm227, %v2111, %v2115
      %v2118 = vshrl.u32 %v1615, 16
      %v2120 = vrot.slane %v2118, 4
      %v2121 = vshll.u32 %v1615, 16
      %v2123 = vrot.slane %v2121, 5
      %v2124 = vor.u32 %v2120, %v2123
      %v2125 = vrot.slane %v2124, 4
      %v2127 = vshll.u32 %v1616, 16
      %v2129 = vrot.slane %v2127, 5
      %v2130 = vsel %vm227, %v2125, %v2129
      %v2131 = vshrl.u32 %v1616, 16
      %v2133 = vrot.slane %v2131, 4
      %v2134 = vor.u32 %v2133, %v2129
      %v2135 = vrot.slane %v2134, 4
      %v2137 = vshll.u32 %v1617, 16
      %v2139 = vrot.slane %v2137, 5
      %v2140 = vsel %vm227, %v2135, %v2139
      %v2142 = vshrl.u32 %v1618, 16
      %v2144 = vrot.slane %v2142, 4
      %v2145 = vshll.u32 %v1618, 16
      %v2147 = vrot.slane %v2145, 5
      %v2148 = vor.u32 %v2144, %v2147
      %v2149 = vrot.slane %v2148, 4
      %v2151 = vshll.u32 %v1619, 16
      %v2153 = vrot.slane %v2151, 5
      %v2154 = vsel %vm227, %v2149, %v2153
      %v2155 = vshrl.u32 %v1619, 16
      %v2157 = vrot.slane %v2155, 4
      %v2158 = vor.u32 %v2157, %v2153
      %v2159 = vrot.slane %v2158, 4
      %v2161 = vshll.u32 %v1620, 16
      %v2163 = vrot.slane %v2161, 5
      %v2164 = vsel %vm227, %v2159, %v2163
      %v2166 = vshrl.u32 %v1621, 16
      %v2168 = vrot.slane %v2166, 4
      %v2169 = vshll.u32 %v1621, 16
      %v2171 = vrot.slane %v2169, 5
      %v2172 = vor.u32 %v2168, %v2171
      %v2173 = vrot.slane %v2172, 4
      %v2175 = vshll.u32 %v1622, 16
      %v2177 = vrot.slane %v2175, 5
      %v2178 = vsel %vm227, %v2173, %v2177
      %v2179 = vshrl.u32 %v1622, 16
      %v2181 = vrot.slane %v2179, 4
      %v2182 = vor.u32 %v2181, %v2177
      %v2183 = vrot.slane %v2182, 4
      %v2185 = vshll.u32 %v1623, 16
      %v2187 = vrot.slane %v2185, 5
      %v2188 = vsel %vm227, %v2183, %v2187
      %v2190 = vshrl.u32 %v1624, 16
      %v2192 = vrot.slane %v2190, 4
      %v2193 = vshll.u32 %v1624, 16
      %v2195 = vrot.slane %v2193, 5
      %v2196 = vor.u32 %v2192, %v2195
      %v2197 = vrot.slane %v2196, 4
      %v2199 = vshll.u32 %v1625, 16
      %v2201 = vrot.slane %v2199, 5
      %v2202 = vsel %vm227, %v2197, %v2201
      %v2203 = vshrl.u32 %v1625, 16
      %v2205 = vrot.slane %v2203, 4
      %v2206 = vor.u32 %v2205, %v2201
      %v2207 = vrot.slane %v2206, 4
      %v2209 = vshll.u32 %v1626, 16
      %v2211 = vrot.slane %v2209, 5
      %v2212 = vsel %vm227, %v2207, %v2211
      %v2214 = vshrl.u32 %v1627, 16
      %v2216 = vrot.slane %v2214, 4
      %v2217 = vshll.u32 %v1627, 16
      %v2219 = vrot.slane %v2217, 5
      %v2220 = vor.u32 %v2216, %v2219
      %v2221 = vrot.slane %v2220, 4
      %v2223 = vshll.u32 %v1628, 16
      %v2225 = vrot.slane %v2223, 5
      %v2226 = vsel %vm227, %v2221, %v2225
      %v2227 = vshrl.u32 %v1628, 16
      %v2229 = vrot.slane %v2227, 4
      %v2230 = vor.u32 %v2229, %v2225
      %v2231 = vrot.slane %v2230, 4
      %v2233 = vshll.u32 %v1629, 16
      %v2235 = vrot.slane %v2233, 5
      %v2236 = vsel %vm227, %v2231, %v2235
      %v2238 = vshrl.u32 %v1630, 16
      %v2240 = vrot.slane %v2238, 4
      %v2241 = vshll.u32 %v1630, 16
      %v2243 = vrot.slane %v2241, 5
      %v2244 = vor.u32 %v2240, %v2243
      %v2245 = vrot.slane %v2244, 4
      %v2247 = vshll.u32 %v1631, 16
      %v2249 = vrot.slane %v2247, 5
      %v2250 = vsel %vm227, %v2245, %v2249
      %v2251 = vshrl.u32 %v1631, 16
      %v2253 = vrot.slane %v2251, 4
      %v2254 = vor.u32 %v2253, %v2249
      %v2255 = vrot.slane %v2254, 4
      %v2257 = vshll.u32 %v1632, 16
      %v2259 = vrot.slane %v2257, 5
      %v2260 = vsel %vm227, %v2255, %v2259
      %v2262 = vshrl.u32 %v1633, 16
      %v2264 = vrot.slane %v2262, 4
      %v2265 = vshll.u32 %v1633, 16
      %v2267 = vrot.slane %v2265, 5
      %v2268 = vor.u32 %v2264, %v2267
      %v2269 = vrot.slane %v2268, 4
      %v2271 = vshll.u32 %v1634, 16
      %v2273 = vrot.slane %v2271, 5
      %v2274 = vsel %vm227, %v2269, %v2273
      %v2275 = vshrl.u32 %v1634, 16
      %v2277 = vrot.slane %v2275, 4
      %v2278 = vor.u32 %v2277, %v2273
      %v2279 = vrot.slane %v2278, 4
      %v2281 = vshll.u32 %v1635, 16
      %v2283 = vrot.slane %v2281, 5
      %v2284 = vsel %vm227, %v2279, %v2283
      %v2286 = vshrl.u32 %v1636, 16
      %v2288 = vrot.slane %v2286, 4
      %v2289 = vshll.u32 %v1636, 16
      %v2291 = vrot.slane %v2289, 5
      %v2292 = vor.u32 %v2288, %v2291
      %v2293 = vrot.slane %v2292, 4
      %v2295 = vshll.u32 %v1637, 16
      %v2297 = vrot.slane %v2295, 5
      %v2298 = vsel %vm227, %v2293, %v2297
      %v2299 = vshrl.u32 %v1637, 16
      %v2301 = vrot.slane %v2299, 4
      %v2302 = vor.u32 %v2301, %v2297
      %v2303 = vrot.slane %v2302, 4
      %v2305 = vshll.u32 %v1638, 16
      %v2307 = vrot.slane %v2305, 5
      %v2308 = vsel %vm227, %v2303, %v2307
      %v2310 = vshrl.u32 %v1639, 16
      %v2312 = vrot.slane %v2310, 4
      %v2313 = vshll.u32 %v1639, 16
      %v2315 = vrot.slane %v2313, 5
      %v2316 = vor.u32 %v2312, %v2315
      %v2317 = vrot.slane %v2316, 4
      %v2319 = vshll.u32 %v1640, 16
      %v2321 = vrot.slane %v2319, 5
      %v2322 = vsel %vm227, %v2317, %v2321
      %v2323 = vshrl.u32 %v1640, 16
      %v2325 = vrot.slane %v2323, 4
      %v2326 = vor.u32 %v2325, %v2321
      %v2327 = vrot.slane %v2326, 4
      %v2329 = vshll.u32 %v1641, 16
      %v2331 = vrot.slane %v2329, 5
      %v2332 = vsel %vm227, %v2327, %v2331
      %v2334 = vshrl.u32 %v1642, 16
      %v2336 = vrot.slane %v2334, 4
      %v2337 = vshll.u32 %v1642, 16
      %v2339 = vrot.slane %v2337, 5
      %v2340 = vor.u32 %v2336, %v2339
      %v2341 = vrot.slane %v2340, 4
      %v2343 = vshll.u32 %v1643, 16
      %v2345 = vrot.slane %v2343, 5
      %v2346 = vsel %vm227, %v2341, %v2345
      %v2347 = vshrl.u32 %v1643, 16
      %v2349 = vrot.slane %v2347, 4
      %v2350 = vor.u32 %v2349, %v2345
      %v2351 = vrot.slane %v2350, 4
      %v2353 = vshll.u32 %v1644, 16
      %v2355 = vrot.slane %v2353, 5
      %v2356 = vsel %vm227, %v2351, %v2355
      %v2357 = vunpack.c.l.b16 %v1986
      %v2358 = vunpack.c.l.b16 %v1996
      %v2359 = vunpack.c.l.b16 %v2010
      %v2360 = vunpack.c.l.b16 %v2020
      %v2361 = vunpack.c.l.b16 %v2034
      %v2362 = vunpack.c.l.b16 %v2044
      %v2363 = vunpack.c.l.b16 %v2058
      %v2364 = vunpack.c.l.b16 %v2068
      %v2365 = vunpack.c.l.b16 %v2082
      %v2366 = vunpack.c.l.b16 %v2092
      %v2367 = vunpack.c.l.b16 %v2106
      %v2368 = vunpack.c.l.b16 %v2116
      %v2369 = vunpack.c.l.b16 %v2130
      %v2370 = vunpack.c.l.b16 %v2140
      %v2371 = vunpack.c.l.b16 %v2154
      %v2372 = vunpack.c.l.b16 %v2164
      %v2373 = vunpack.c.l.b16 %v2178
      %v2374 = vunpack.c.l.b16 %v2188
      %v2375 = vunpack.c.l.b16 %v2202
      %v2376 = vunpack.c.l.b16 %v2212
      %v2377 = vunpack.c.l.b16 %v2226
      %v2378 = vunpack.c.l.b16 %v2236
      %v2379 = vunpack.c.l.b16 %v2250
      %v2380 = vunpack.c.l.b16 %v2260
      %v2381 = vunpack.c.l.b16 %v2274
      %v2382 = vunpack.c.l.b16 %v2284
      %v2383 = vunpack.c.l.b16 %v2298
      %v2384 = vunpack.c.l.b16 %v2308
      %v2385 = vunpack.c.l.b16 %v2322
      %v2386 = vunpack.c.l.b16 %v2332
      %v2387 = vunpack.c.l.b16 %v2346
      %v2388 = vunpack.c.l.b16 %v2356
      %v2389 = vpack.c.b16 %v2358, %v2357
      %v2390 = vpack.c.b16 %v2360, %v2359
      %v2391 = vpack.c.b16 %v2362, %v2361
      %v2392 = vpack.c.b16 %v2364, %v2363
      %v2393 = vpack.c.b16 %v2366, %v2365
      %v2394 = vpack.c.b16 %v2368, %v2367
      %v2395 = vpack.c.b16 %v2370, %v2369
      %v2396 = vpack.c.b16 %v2372, %v2371
      %v2397 = vpack.c.b16 %v2374, %v2373
      %v2398 = vpack.c.b16 %v2376, %v2375
      %v2399 = vpack.c.b16 %v2378, %v2377
      %v2400 = vpack.c.b16 %v2380, %v2379
      %v2401 = vpack.c.b16 %v2382, %v2381
      %v2402 = vpack.c.b16 %v2384, %v2383
      %v2403 = vpack.c.b16 %v2386, %v2385
      %v2404 = vpack.c.b16 %v2388, %v2387
      %v2406 = vsel %vm664, %v2389, 0
      %v2409 = vsel %vm664, %v2390, 0
      %v2412 = vsel %vm664, %v2391, 0
      %v2415 = vsel %vm664, %v2392, 0
      %v2418 = vsel %vm664, %v2393, 0
      %v2421 = vsel %vm664, %v2394, 0
      %v2424 = vsel %vm664, %v2395, 0
      %v2427 = vsel %vm664, %v2396, 0
      %v2430 = vsel %vm664, %v2397, 0
      %v2433 = vsel %vm664, %v2398, 0
      %v2436 = vsel %vm664, %v2399, 0
      %v2439 = vsel %vm664, %v2400, 0
      %v2442 = vsel %vm664, %v2401, 0
      %v2445 = vsel %vm664, %v2402, 0
      %v2448 = vsel %vm664, %v2403, 0
      %v2451 = vsel %vm664, %v2404, 0
      %v2454 = vsel %vm713, %v171, 0
      %2456 = vmatprep.subr.bf16.mxu0 0
      %2457 = vmatpush1.bf16.msra.mxu0 %v2454
      %2458 = vmatprep.subr.bf16.mxu0 0
      %2459 = vmatpush1.bf16.msra.mxu0 0
      %2460 = vmatprep.subr.bf16.mxu0 0
      %2461 = vmatpush1.bf16.msra.mxu0 0
      %2462 = vmatprep.subr.bf16.mxu0 0
      %2463 = vmatpush1.bf16.msra.mxu0 0
      %2464 = vmatprep.subr.bf16.mxu0 0
      %2465 = vmatpush1.bf16.msra.mxu0 0
      %2466 = vmatprep.subr.bf16.mxu0 0
      %2467 = vmatpush1.bf16.msra.mxu0 0
      %2468 = vmatprep.subr.bf16.mxu0 0
      %2469 = vmatpush1.bf16.msra.mxu0 0
      %2470 = vmatprep.subr.bf16.mxu0 0
      %2471 = vmatpush1.bf16.msra.mxu0 0
      %2472 = vmatprep.subr.bf16.mxu0 0
      %2473 = vmatpush1.bf16.msra.mxu0 0
      %2474 = vmatprep.subr.bf16.mxu0 0
      %2475 = vmatpush1.bf16.msra.mxu0 0
      %2476 = vmatprep.subr.bf16.mxu0 0
      %2477 = vmatpush1.bf16.msra.mxu0 0
      %2478 = vmatprep.subr.bf16.mxu0 0
      %2479 = vmatpush1.bf16.msra.mxu0 0
      %2480 = vmatprep.subr.bf16.mxu0 0
      %2481 = vmatpush1.bf16.msra.mxu0 0
      %2482 = vmatprep.subr.bf16.mxu0 0
      %2483 = vmatpush1.bf16.msra.mxu0 0
      %2484 = vmatprep.subr.bf16.mxu0 0
      %2485 = vmatpush1.bf16.msra.mxu0 0
      %2486 = vmatprep.subr.bf16.mxu0 0
      %2487 = vmatpush1.bf16.msra.mxu0 0
      %2488 = vmatprep.mubr.bf16.mxu0 0
      %2489 = vmatmul.mubr.bf16.gmra.mrb[0].mxu0 %v2406
      %v2490 = vpop.f32.mrb[0].mxu0
      %v2491 = vadd.f32 0.0, %v2490
      %v2492 = vpop.f32.mrb[0].mxu0
      %v2493 = vpop.f32.mrb[0].mxu0
      %v2494 = vadd.f32 0.0, %v2493
      %v2495 = vpop.f32.mrb[0].mxu0
      %2496 = vmatprep.mubr.bf16.mxu0 0
      %2497 = vmatmul.mubr.bf16.gmra.mrb[0].mxu0 %v2409
      %v2498 = vpop.f32.mrb[0].mxu0
      %v2499 = vadd.f32 0.0, %v2498
      %v2500 = vpop.f32.mrb[0].mxu0
      %v2501 = vpop.f32.mrb[0].mxu0
      %v2502 = vadd.f32 0.0, %v2501
      %v2503 = vpop.f32.mrb[0].mxu0
      %2504 = vmatprep.mubr.bf16.mxu0 0
      %2505 = vmatmul.mubr.bf16.gmra.mrb[0].mxu0 %v2412
      %v2506 = vpop.f32.mrb[0].mxu0
      %v2507 = vadd.f32 0.0, %v2506
      %v2508 = vpop.f32.mrb[0].mxu0
      %v2509 = vpop.f32.mrb[0].mxu0
      %v2510 = vadd.f32 0.0, %v2509
      %v2511 = vpop.f32.mrb[0].mxu0
      %2512 = vmatprep.mubr.bf16.mxu0 0
      %2513 = vmatmul.mubr.bf16.gmra.mrb[0].mxu0 %v2415
      %v2514 = vpop.f32.mrb[0].mxu0
      %v2515 = vadd.f32 0.0, %v2514
      %v2516 = vpop.f32.mrb[0].mxu0
      %v2517 = vpop.f32.mrb[0].mxu0
      %v2518 = vadd.f32 0.0, %v2517
      %v2519 = vpop.f32.mrb[0].mxu0
      %2520 = vmatprep.mubr.bf16.mxu0 0
      %2521 = vmatmul.mubr.bf16.gmra.mrb[0].mxu0 %v2418
      %v2522 = vpop.f32.mrb[0].mxu0
      %v2523 = vadd.f32 0.0, %v2522
      %v2524 = vpop.f32.mrb[0].mxu0
      %v2525 = vpop.f32.mrb[0].mxu0
      %v2526 = vadd.f32 0.0, %v2525
      %v2527 = vpop.f32.mrb[0].mxu0
      %2528 = vmatprep.mubr.bf16.mxu0 0
      %2529 = vmatmul.mubr.bf16.gmra.mrb[0].mxu0 %v2421
      %v2530 = vpop.f32.mrb[0].mxu0
      %v2531 = vadd.f32 0.0, %v2530
      %v2532 = vpop.f32.mrb[0].mxu0
      %v2533 = vpop.f32.mrb[0].mxu0
      %v2534 = vadd.f32 0.0, %v2533
      %v2535 = vpop.f32.mrb[0].mxu0
      %2536 = vmatprep.mubr.bf16.mxu0 0
      %2537 = vmatmul.mubr.bf16.gmra.mrb[0].mxu0 %v2424
      %v2538 = vpop.f32.mrb[0].mxu0
      %v2539 = vadd.f32 0.0, %v2538
      %v2540 = vpop.f32.mrb[0].mxu0
      %v2541 = vpop.f32.mrb[0].mxu0
      %v2542 = vadd.f32 0.0, %v2541
      %v2543 = vpop.f32.mrb[0].mxu0
      %2544 = vmatprep.mubr.bf16.mxu0 0
      %2545 = vmatmul.mubr.bf16.gmra.mrb[0].mxu0 %v2427
      %v2546 = vpop.f32.mrb[0].mxu0
      %v2547 = vadd.f32 0.0, %v2546
      %v2548 = vpop.f32.mrb[0].mxu0
      %v2549 = vpop.f32.mrb[0].mxu0
      %v2550 = vadd.f32 0.0, %v2549
      %v2551 = vpop.f32.mrb[0].mxu0
      %2552 = vmatprep.mubr.bf16.mxu0 0
      %2553 = vmatmul.mubr.bf16.gmra.mrb[0].mxu0 %v2430
      %v2554 = vpop.f32.mrb[0].mxu0
      %v2555 = vadd.f32 0.0, %v2554
      %v2556 = vpop.f32.mrb[0].mxu0
      %v2557 = vpop.f32.mrb[0].mxu0
      %v2558 = vadd.f32 0.0, %v2557
      %v2559 = vpop.f32.mrb[0].mxu0
      %2560 = vmatprep.mubr.bf16.mxu0 0
      %2561 = vmatmul.mubr.bf16.gmra.mrb[0].mxu0 %v2433
      %v2562 = vpop.f32.mrb[0].mxu0
      %v2563 = vadd.f32 0.0, %v2562
      %v2564 = vpop.f32.mrb[0].mxu0
      %v2565 = vpop.f32.mrb[0].mxu0
      %v2566 = vadd.f32 0.0, %v2565
      %v2567 = vpop.f32.mrb[0].mxu0
      %2568 = vmatprep.mubr.bf16.mxu0 0
      %2569 = vmatmul.mubr.bf16.gmra.mrb[0].mxu0 %v2436
      %v2570 = vpop.f32.mrb[0].mxu0
      %v2571 = vadd.f32 0.0, %v2570
      %v2572 = vpop.f32.mrb[0].mxu0
      %v2573 = vpop.f32.mrb[0].mxu0
      %v2574 = vadd.f32 0.0, %v2573
      %v2575 = vpop.f32.mrb[0].mxu0
      %2576 = vmatprep.mubr.bf16.mxu0 0
      %2577 = vmatmul.mubr.bf16.gmra.mrb[0].mxu0 %v2439
      %v2578 = vpop.f32.mrb[0].mxu0
      %v2579 = vadd.f32 0.0, %v2578
      %v2580 = vpop.f32.mrb[0].mxu0
      %v2581 = vpop.f32.mrb[0].mxu0
      %v2582 = vadd.f32 0.0, %v2581
      %v2583 = vpop.f32.mrb[0].mxu0
      %2584 = vmatprep.mubr.bf16.mxu0 0
      %2585 = vmatmul.mubr.bf16.gmra.mrb[0].mxu0 %v2442
      %v2586 = vpop.f32.mrb[0].mxu0
      %v2587 = vadd.f32 0.0, %v2586
      %v2588 = vpop.f32.mrb[0].mxu0
      %v2589 = vpop.f32.mrb[0].mxu0
      %v2590 = vadd.f32 0.0, %v2589
      %v2591 = vpop.f32.mrb[0].mxu0
      %2592 = vmatprep.mubr.bf16.mxu0 0
      %2593 = vmatmul.mubr.bf16.gmra.mrb[0].mxu0 %v2445
      %v2594 = vpop.f32.mrb[0].mxu0
      %v2595 = vadd.f32 0.0, %v2594
      %v2596 = vpop.f32.mrb[0].mxu0
      %v2597 = vpop.f32.mrb[0].mxu0
      %v2598 = vadd.f32 0.0, %v2597
      %v2599 = vpop.f32.mrb[0].mxu0
      %2600 = vmatprep.mubr.bf16.mxu0 0
      %2601 = vmatmul.mubr.bf16.gmra.mrb[0].mxu0 %v2448
      %v2602 = vpop.f32.mrb[0].mxu0
      %v2603 = vadd.f32 0.0, %v2602
      %v2604 = vpop.f32.mrb[0].mxu0
      %v2605 = vpop.f32.mrb[0].mxu0
      %v2606 = vadd.f32 0.0, %v2605
      %v2607 = vpop.f32.mrb[0].mxu0
      %2608 = vmatprep.mubr.bf16.mxu0 0
      %2609 = vmatmul.mubr.bf16.gmra.mrb[0].mxu0 %v2451
      %v2610 = vpop.f32.mrb[0].mxu0
      %v2611 = vadd.f32 0.0, %v2610
      %v2612 = vpop.f32.mrb[0].mxu0
      %v2613 = vpop.f32.mrb[0].mxu0
      %v2614 = vadd.f32 0.0, %v2613
      %v2615 = vpop.f32.mrb[0].mxu0
      %2616 = vdwg.mxu0
      %v2617 = vadd.f32 %v1941, %v2491
      %v2618 = vadd.f32 %v1942, %v2494
      %v2619 = vadd.f32 %v1943, %v2499
      %v2620 = vadd.f32 %v1944, %v2502
      %v2621 = vadd.f32 %v1945, %v2507
      %v2622 = vadd.f32 %v1946, %v2510
      %v2623 = vadd.f32 %v1947, %v2515
      %v2624 = vadd.f32 %v1948, %v2518
      %v2625 = vadd.f32 %v1949, %v2523
      %v2626 = vadd.f32 %v1950, %v2526
      %v2627 = vadd.f32 %v1951, %v2531
      %v2628 = vadd.f32 %v1952, %v2534
      %v2629 = vadd.f32 %v1953, %v2539
      %v2630 = vadd.f32 %v1954, %v2542
      %v2631 = vadd.f32 %v1955, %v2547
      %v2632 = vadd.f32 %v1956, %v2550
      %v2633 = vadd.f32 %v1957, %v2555
      %v2634 = vadd.f32 %v1958, %v2558
      %v2635 = vadd.f32 %v1959, %v2563
      %v2636 = vadd.f32 %v1960, %v2566
      %v2637 = vadd.f32 %v1961, %v2571
      %v2638 = vadd.f32 %v1962, %v2574
      %v2639 = vadd.f32 %v1963, %v2579
      %v2640 = vadd.f32 %v1964, %v2582
      %v2641 = vadd.f32 %v1965, %v2587
      %v2642 = vadd.f32 %v1966, %v2590
      %v2643 = vadd.f32 %v1967, %v2595
      %v2644 = vadd.f32 %v1968, %v2598
      %v2645 = vadd.f32 %v1969, %v2603
      %v2646 = vadd.f32 %v1970, %v2606
      %v2647 = vadd.f32 %v1971, %v2611
      %v2648 = vadd.f32 %v1972, %v2614
      %v2665 = vrot.slane %v1597, 5
      %v2666 = vrot.slane %v2665, 4
      %v2667 = vrot.slane %v1598, 5
      %v2668 = vsel %vm1188, %v2666, %v2667
      %v2669 = vrot.slane %v2667, 4
      %v2670 = vrot.slane %v1599, 5
      %v2671 = vsel %vm1188, %v2669, %v2670
      %v2672 = vrot.slane %v1600, 5
      %v2673 = vrot.slane %v2672, 4
      %v2674 = vrot.slane %v1601, 5
      %v2675 = vsel %vm1188, %v2673, %v2674
      %v2676 = vrot.slane %v2674, 4
      %v2677 = vrot.slane %v1602, 5
      %v2678 = vsel %vm1188, %v2676, %v2677
      %v2679 = vrot.slane %v1603, 5
      %v2680 = vrot.slane %v2679, 4
      %v2681 = vrot.slane %v1604, 5
      %v2682 = vsel %vm1188, %v2680, %v2681
      %v2683 = vrot.slane %v2681, 4
      %v2684 = vrot.slane %v1605, 5
      %v2685 = vsel %vm1188, %v2683, %v2684
      %v2686 = vrot.slane %v1606, 5
      %v2687 = vrot.slane %v2686, 4
      %v2688 = vrot.slane %v1607, 5
      %v2689 = vsel %vm1188, %v2687, %v2688
      %v2690 = vrot.slane %v2688, 4
      %v2691 = vrot.slane %v1608, 5
      %v2692 = vsel %vm1188, %v2690, %v2691
      %v2693 = vrot.slane %v1609, 5
      %v2694 = vrot.slane %v2693, 4
      %v2695 = vrot.slane %v1610, 5
      %v2696 = vsel %vm1188, %v2694, %v2695
      %v2697 = vrot.slane %v2695, 4
      %v2698 = vrot.slane %v1611, 5
      %v2699 = vsel %vm1188, %v2697, %v2698
      %v2700 = vrot.slane %v1612, 5
      %v2701 = vrot.slane %v2700, 4
      %v2702 = vrot.slane %v1613, 5
      %v2703 = vsel %vm1188, %v2701, %v2702
      %v2704 = vrot.slane %v2702, 4
      %v2705 = vrot.slane %v1614, 5
      %v2706 = vsel %vm1188, %v2704, %v2705
      %v2707 = vrot.slane %v1615, 5
      %v2708 = vrot.slane %v2707, 4
      %v2709 = vrot.slane %v1616, 5
      %v2710 = vsel %vm1188, %v2708, %v2709
      %v2711 = vrot.slane %v2709, 4
      %v2712 = vrot.slane %v1617, 5
      %v2713 = vsel %vm1188, %v2711, %v2712
      %v2714 = vrot.slane %v1618, 5
      %v2715 = vrot.slane %v2714, 4
      %v2716 = vrot.slane %v1619, 5
      %v2717 = vsel %vm1188, %v2715, %v2716
      %v2718 = vrot.slane %v2716, 4
      %v2719 = vrot.slane %v1620, 5
      %v2720 = vsel %vm1188, %v2718, %v2719
      %v2721 = vrot.slane %v1621, 5
      %v2722 = vrot.slane %v2721, 4
      %v2723 = vrot.slane %v1622, 5
      %v2724 = vsel %vm1188, %v2722, %v2723
      %v2725 = vrot.slane %v2723, 4
      %v2726 = vrot.slane %v1623, 5
      %v2727 = vsel %vm1188, %v2725, %v2726
      %v2728 = vrot.slane %v1624, 5
      %v2729 = vrot.slane %v2728, 4
      %v2730 = vrot.slane %v1625, 5
      %v2731 = vsel %vm1188, %v2729, %v2730
      %v2732 = vrot.slane %v2730, 4
      %v2733 = vrot.slane %v1626, 5
      %v2734 = vsel %vm1188, %v2732, %v2733
      %v2735 = vrot.slane %v1627, 5
      %v2736 = vrot.slane %v2735, 4
      %v2737 = vrot.slane %v1628, 5
      %v2738 = vsel %vm1188, %v2736, %v2737
      %v2739 = vrot.slane %v2737, 4
      %v2740 = vrot.slane %v1629, 5
      %v2741 = vsel %vm1188, %v2739, %v2740
      %v2742 = vrot.slane %v1630, 5
      %v2743 = vrot.slane %v2742, 4
      %v2744 = vrot.slane %v1631, 5
      %v2745 = vsel %vm1188, %v2743, %v2744
      %v2746 = vrot.slane %v2744, 4
      %v2747 = vrot.slane %v1632, 5
      %v2748 = vsel %vm1188, %v2746, %v2747
      %v2749 = vrot.slane %v1633, 5
      %v2750 = vrot.slane %v2749, 4
      %v2751 = vrot.slane %v1634, 5
      %v2752 = vsel %vm1188, %v2750, %v2751
      %v2753 = vrot.slane %v2751, 4
      %v2754 = vrot.slane %v1635, 5
      %v2755 = vsel %vm1188, %v2753, %v2754
      %v2756 = vrot.slane %v1636, 5
      %v2757 = vrot.slane %v2756, 4
      %v2758 = vrot.slane %v1637, 5
      %v2759 = vsel %vm1188, %v2757, %v2758
      %v2760 = vrot.slane %v2758, 4
      %v2761 = vrot.slane %v1638, 5
      %v2762 = vsel %vm1188, %v2760, %v2761
      %v2763 = vrot.slane %v1639, 5
      %v2764 = vrot.slane %v2763, 4
      %v2765 = vrot.slane %v1640, 5
      %v2766 = vsel %vm1188, %v2764, %v2765
      %v2767 = vrot.slane %v2765, 4
      %v2768 = vrot.slane %v1641, 5
      %v2769 = vsel %vm1188, %v2767, %v2768
      %v2770 = vrot.slane %v1642, 5
      %v2771 = vrot.slane %v2770, 4
      %v2772 = vrot.slane %v1643, 5
      %v2773 = vsel %vm1188, %v2771, %v2772
      %v2774 = vrot.slane %v2772, 4
      %v2775 = vrot.slane %v1644, 5
      %v2776 = vsel %vm1188, %v2774, %v2775
      %v2777 = vunpack.c.l.b16 %v2668
      %v2778 = vunpack.c.l.b16 %v2671
      %v2779 = vunpack.c.l.b16 %v2675
      %v2780 = vunpack.c.l.b16 %v2678
      %v2781 = vunpack.c.l.b16 %v2682
      %v2782 = vunpack.c.l.b16 %v2685
      %v2783 = vunpack.c.l.b16 %v2689
      %v2784 = vunpack.c.l.b16 %v2692
      %v2785 = vunpack.c.l.b16 %v2696
      %v2786 = vunpack.c.l.b16 %v2699
      %v2787 = vunpack.c.l.b16 %v2703
      %v2788 = vunpack.c.l.b16 %v2706
      %v2789 = vunpack.c.l.b16 %v2710
      %v2790 = vunpack.c.l.b16 %v2713
      %v2791 = vunpack.c.l.b16 %v2717
      %v2792 = vunpack.c.l.b16 %v2720
      %v2793 = vunpack.c.l.b16 %v2724
      %v2794 = vunpack.c.l.b16 %v2727
      %v2795 = vunpack.c.l.b16 %v2731
      %v2796 = vunpack.c.l.b16 %v2734
      %v2797 = vunpack.c.l.b16 %v2738
      %v2798 = vunpack.c.l.b16 %v2741
      %v2799 = vunpack.c.l.b16 %v2745
      %v2800 = vunpack.c.l.b16 %v2748
      %v2801 = vunpack.c.l.b16 %v2752
      %v2802 = vunpack.c.l.b16 %v2755
      %v2803 = vunpack.c.l.b16 %v2759
      %v2804 = vunpack.c.l.b16 %v2762
      %v2805 = vunpack.c.l.b16 %v2766
      %v2806 = vunpack.c.l.b16 %v2769
      %v2807 = vunpack.c.l.b16 %v2773
      %v2808 = vunpack.c.l.b16 %v2776
      %v2809 = vpack.c.b16 %v2778, %v2777
      %v2810 = vpack.c.b16 %v2780, %v2779
      %v2811 = vpack.c.b16 %v2782, %v2781
      %v2812 = vpack.c.b16 %v2784, %v2783
      %v2813 = vpack.c.b16 %v2786, %v2785
      %v2814 = vpack.c.b16 %v2788, %v2787
      %v2815 = vpack.c.b16 %v2790, %v2789
      %v2816 = vpack.c.b16 %v2792, %v2791
      %v2817 = vpack.c.b16 %v2794, %v2793
      %v2818 = vpack.c.b16 %v2796, %v2795
      %v2819 = vpack.c.b16 %v2798, %v2797
      %v2820 = vpack.c.b16 %v2800, %v2799
      %v2821 = vpack.c.b16 %v2802, %v2801
      %v2822 = vpack.c.b16 %v2804, %v2803
      %v2823 = vpack.c.b16 %v2806, %v2805
      %v2824 = vpack.c.b16 %v2808, %v2807
      %v2826 = vunpack.c.l.b16 %v171
      %v2827 = vpack.c.b16 %v2826, %v2826
      %v2828 = vrot.slane %v2827, 2
      %v2830 = vsel %vm664, %v2809, 0
      %v2833 = vsel %vm664, %v2810, 0
      %v2836 = vsel %vm664, %v2811, 0
      %v2839 = vsel %vm664, %v2812, 0
      %v2842 = vsel %vm664, %v2813, 0
      %v2845 = vsel %vm664, %v2814, 0
      %v2848 = vsel %vm664, %v2815, 0
      %v2851 = vsel %vm664, %v2816, 0
      %v2854 = vsel %vm664, %v2817, 0
      %v2857 = vsel %vm664, %v2818, 0
      %v2860 = vsel %vm664, %v2819, 0
      %v2863 = vsel %vm664, %v2820, 0
      %v2866 = vsel %vm664, %v2821, 0
      %v2869 = vsel %vm664, %v2822, 0
      %v2872 = vsel %vm664, %v2823, 0
      %v2875 = vsel %vm664, %v2824, 0
      %v2878 = vsel %vm713, %v2828, 0
      %2880 = vmatprep.subr.bf16.mxu0 0
      %2881 = vmatpush1.bf16.msra.mxu0 %v2878
      %2882 = vmatprep.subr.bf16.mxu0 0
      %2883 = vmatpush1.bf16.msra.mxu0 0
      %2884 = vmatprep.subr.bf16.mxu0 0
      %2885 = vmatpush1.bf16.msra.mxu0 0
      %2886 = vmatprep.subr.bf16.mxu0 0
      %2887 = vmatpush1.bf16.msra.mxu0 0
      %2888 = vmatprep.subr.bf16.mxu0 0
      %2889 = vmatpush1.bf16.msra.mxu0 0
      %2890 = vmatprep.subr.bf16.mxu0 0
      %2891 = vmatpush1.bf16.msra.mxu0 0
      %2892 = vmatprep.subr.bf16.mxu0 0
      %2893 = vmatpush1.bf16.msra.mxu0 0
      %2894 = vmatprep.subr.bf16.mxu0 0
      %2895 = vmatpush1.bf16.msra.mxu0 0
      %2896 = vmatprep.subr.bf16.mxu0 0
      %2897 = vmatpush1.bf16.msra.mxu0 0
      %2898 = vmatprep.subr.bf16.mxu0 0
      %2899 = vmatpush1.bf16.msra.mxu0 0
      %2900 = vmatprep.subr.bf16.mxu0 0
      %2901 = vmatpush1.bf16.msra.mxu0 0
      %2902 = vmatprep.subr.bf16.mxu0 0
      %2903 = vmatpush1.bf16.msra.mxu0 0
      %2904 = vmatprep.subr.bf16.mxu0 0
      %2905 = vmatpush1.bf16.msra.mxu0 0
      %2906 = vmatprep.subr.bf16.mxu0 0
      %2907 = vmatpush1.bf16.msra.mxu0 0
      %2908 = vmatprep.subr.bf16.mxu0 0
      %2909 = vmatpush1.bf16.msra.mxu0 0
      %2910 = vmatprep.subr.bf16.mxu0 0
      %2911 = vmatpush1.bf16.msra.mxu0 0
      %2912 = vmatprep.mubr.bf16.mxu0 0
      %2913 = vmatmul.mubr.bf16.gmra.mrb[0].mxu0 %v2830
      %v2914 = vpop.f32.mrb[0].mxu0
      %v2915 = vadd.f32 0.0, %v2914
      %v2916 = vpop.f32.mrb[0].mxu0
      %v2917 = vpop.f32.mrb[0].mxu0
      %v2918 = vadd.f32 0.0, %v2917
      %v2919 = vpop.f32.mrb[0].mxu0
      %2920 = vmatprep.mubr.bf16.mxu0 0
      %2921 = vmatmul.mubr.bf16.gmra.mrb[0].mxu0 %v2833
      %v2922 = vpop.f32.mrb[0].mxu0
      %v2923 = vadd.f32 0.0, %v2922
      %v2924 = vpop.f32.mrb[0].mxu0
      %v2925 = vpop.f32.mrb[0].mxu0
      %v2926 = vadd.f32 0.0, %v2925
      %v2927 = vpop.f32.mrb[0].mxu0
      %2928 = vmatprep.mubr.bf16.mxu0 0
      %2929 = vmatmul.mubr.bf16.gmra.mrb[0].mxu0 %v2836
      %v2930 = vpop.f32.mrb[0].mxu0
      %v2931 = vadd.f32 0.0, %v2930
      %v2932 = vpop.f32.mrb[0].mxu0
      %v2933 = vpop.f32.mrb[0].mxu0
      %v2934 = vadd.f32 0.0, %v2933
      %v2935 = vpop.f32.mrb[0].mxu0
      %2936 = vmatprep.mubr.bf16.mxu0 0
      %2937 = vmatmul.mubr.bf16.gmra.mrb[0].mxu0 %v2839
      %v2938 = vpop.f32.mrb[0].mxu0
      %v2939 = vadd.f32 0.0, %v2938
      %v2940 = vpop.f32.mrb[0].mxu0
      %v2941 = vpop.f32.mrb[0].mxu0
      %v2942 = vadd.f32 0.0, %v2941
      %v2943 = vpop.f32.mrb[0].mxu0
      %2944 = vmatprep.mubr.bf16.mxu0 0
      %2945 = vmatmul.mubr.bf16.gmra.mrb[0].mxu0 %v2842
      %v2946 = vpop.f32.mrb[0].mxu0
      %v2947 = vadd.f32 0.0, %v2946
      %v2948 = vpop.f32.mrb[0].mxu0
      %v2949 = vpop.f32.mrb[0].mxu0
      %v2950 = vadd.f32 0.0, %v2949
      %v2951 = vpop.f32.mrb[0].mxu0
      %2952 = vmatprep.mubr.bf16.mxu0 0
      %2953 = vmatmul.mubr.bf16.gmra.mrb[0].mxu0 %v2845
      %v2954 = vpop.f32.mrb[0].mxu0
      %v2955 = vadd.f32 0.0, %v2954
      %v2956 = vpop.f32.mrb[0].mxu0
      %v2957 = vpop.f32.mrb[0].mxu0
      %v2958 = vadd.f32 0.0, %v2957
      %v2959 = vpop.f32.mrb[0].mxu0
      %2960 = vmatprep.mubr.bf16.mxu0 0
      %2961 = vmatmul.mubr.bf16.gmra.mrb[0].mxu0 %v2848
      %v2962 = vpop.f32.mrb[0].mxu0
      %v2963 = vadd.f32 0.0, %v2962
      %v2964 = vpop.f32.mrb[0].mxu0
      %v2965 = vpop.f32.mrb[0].mxu0
      %v2966 = vadd.f32 0.0, %v2965
      %v2967 = vpop.f32.mrb[0].mxu0
      %2968 = vmatprep.mubr.bf16.mxu0 0
      %2969 = vmatmul.mubr.bf16.gmra.mrb[0].mxu0 %v2851
      %v2970 = vpop.f32.mrb[0].mxu0
      %v2971 = vadd.f32 0.0, %v2970
      %v2972 = vpop.f32.mrb[0].mxu0
      %v2973 = vpop.f32.mrb[0].mxu0
      %v2974 = vadd.f32 0.0, %v2973
      %v2975 = vpop.f32.mrb[0].mxu0
      %2976 = vmatprep.mubr.bf16.mxu0 0
      %2977 = vmatmul.mubr.bf16.gmra.mrb[0].mxu0 %v2854
      %v2978 = vpop.f32.mrb[0].mxu0
      %v2979 = vadd.f32 0.0, %v2978
      %v2980 = vpop.f32.mrb[0].mxu0
      %v2981 = vpop.f32.mrb[0].mxu0
      %v2982 = vadd.f32 0.0, %v2981
      %v2983 = vpop.f32.mrb[0].mxu0
      %2984 = vmatprep.mubr.bf16.mxu0 0
      %2985 = vmatmul.mubr.bf16.gmra.mrb[0].mxu0 %v2857
      %v2986 = vpop.f32.mrb[0].mxu0
      %v2987 = vadd.f32 0.0, %v2986
      %v2988 = vpop.f32.mrb[0].mxu0
      %v2989 = vpop.f32.mrb[0].mxu0
      %v2990 = vadd.f32 0.0, %v2989
      %v2991 = vpop.f32.mrb[0].mxu0
      %2992 = vmatprep.mubr.bf16.mxu0 0
      %2993 = vmatmul.mubr.bf16.gmra.mrb[0].mxu0 %v2860
      %v2994 = vpop.f32.mrb[0].mxu0
      %v2995 = vadd.f32 0.0, %v2994
      %v2996 = vpop.f32.mrb[0].mxu0
      %v2997 = vpop.f32.mrb[0].mxu0
      %v2998 = vadd.f32 0.0, %v2997
      %v2999 = vpop.f32.mrb[0].mxu0
      %3000 = vmatprep.mubr.bf16.mxu0 0
      %3001 = vmatmul.mubr.bf16.gmra.mrb[0].mxu0 %v2863
      %v3002 = vpop.f32.mrb[0].mxu0
      %v3003 = vadd.f32 0.0, %v3002
      %v3004 = vpop.f32.mrb[0].mxu0
      %v3005 = vpop.f32.mrb[0].mxu0
      %v3006 = vadd.f32 0.0, %v3005
      %v3007 = vpop.f32.mrb[0].mxu0
      %3008 = vmatprep.mubr.bf16.mxu0 0
      %3009 = vmatmul.mubr.bf16.gmra.mrb[0].mxu0 %v2866
      %v3010 = vpop.f32.mrb[0].mxu0
      %v3011 = vadd.f32 0.0, %v3010
      %v3012 = vpop.f32.mrb[0].mxu0
      %v3013 = vpop.f32.mrb[0].mxu0
      %v3014 = vadd.f32 0.0, %v3013
      %v3015 = vpop.f32.mrb[0].mxu0
      %3016 = vmatprep.mubr.bf16.mxu0 0
      %3017 = vmatmul.mubr.bf16.gmra.mrb[0].mxu0 %v2869
      %v3018 = vpop.f32.mrb[0].mxu0
      %v3019 = vadd.f32 0.0, %v3018
      %v3020 = vpop.f32.mrb[0].mxu0
      %v3021 = vpop.f32.mrb[0].mxu0
      %v3022 = vadd.f32 0.0, %v3021
      %v3023 = vpop.f32.mrb[0].mxu0
      %3024 = vmatprep.mubr.bf16.mxu0 0
      %3025 = vmatmul.mubr.bf16.gmra.mrb[0].mxu0 %v2872
      %v3026 = vpop.f32.mrb[0].mxu0
      %v3027 = vadd.f32 0.0, %v3026
      %v3028 = vpop.f32.mrb[0].mxu0
      %v3029 = vpop.f32.mrb[0].mxu0
      %v3030 = vadd.f32 0.0, %v3029
      %v3031 = vpop.f32.mrb[0].mxu0
      %3032 = vmatprep.mubr.bf16.mxu0 0
      %3033 = vmatmul.mubr.bf16.gmra.mrb[0].mxu0 %v2875
      %v3034 = vpop.f32.mrb[0].mxu0
      %v3035 = vadd.f32 0.0, %v3034
      %v3036 = vpop.f32.mrb[0].mxu0
      %v3037 = vpop.f32.mrb[0].mxu0
      %v3038 = vadd.f32 0.0, %v3037
      %v3039 = vpop.f32.mrb[0].mxu0
      %3040 = vdwg.mxu0
      %v3041 = vadd.f32 %v2617, %v2915
      %v3042 = vadd.f32 %v2618, %v2918
      %v3043 = vadd.f32 %v2619, %v2923
      %v3044 = vadd.f32 %v2620, %v2926
      %v3045 = vadd.f32 %v2621, %v2931
      %v3046 = vadd.f32 %v2622, %v2934
      %v3047 = vadd.f32 %v2623, %v2939
      %v3048 = vadd.f32 %v2624, %v2942
      %v3049 = vadd.f32 %v2625, %v2947
      %v3050 = vadd.f32 %v2626, %v2950
      %v3051 = vadd.f32 %v2627, %v2955
      %v3052 = vadd.f32 %v2628, %v2958
      %v3053 = vadd.f32 %v2629, %v2963
      %v3054 = vadd.f32 %v2630, %v2966
      %v3055 = vadd.f32 %v2631, %v2971
      %v3056 = vadd.f32 %v2632, %v2974
      %v3057 = vadd.f32 %v2633, %v2979
      %v3058 = vadd.f32 %v2634, %v2982
      %v3059 = vadd.f32 %v2635, %v2987
      %v3060 = vadd.f32 %v2636, %v2990
      %v3061 = vadd.f32 %v2637, %v2995
      %v3062 = vadd.f32 %v2638, %v2998
      %v3063 = vadd.f32 %v2639, %v3003
      %v3064 = vadd.f32 %v2640, %v3006
      %v3065 = vadd.f32 %v2641, %v3011
      %v3066 = vadd.f32 %v2642, %v3014
      %v3067 = vadd.f32 %v2643, %v3019
      %v3068 = vadd.f32 %v2644, %v3022
      %v3069 = vadd.f32 %v2645, %v3027
      %v3070 = vadd.f32 %v2646, %v3030
      %v3071 = vadd.f32 %v2647, %v3035
      %v3072 = vadd.f32 %v2648, %v3038
      %s3073 = sadd.s32 %s168, 2
      %s3074 = smul.u32 %s3073, 3
      %s3075 = smul.addr %s3074, 4
      %s3076 = scalar_lea.vmem %s156, %s3075
      %v3077 = vld [vmem:[%s3076] sm:$0xf]
      %v3078 = vld [vmem:[%s3076 + $0x4] sm:$0xf]
      %v3079 = vld [vmem:[%s3076 + $0x8] sm:$0x1]
      %v3080 = vld [vmem:[%s3076 + $0xc] sm:$0xf]
      %v3081 = vld [vmem:[%s3076 + $0x10] sm:$0xf]
      %v3082 = vld [vmem:[%s3076 + $0x14] sm:$0x1]
      %v3083 = vld [vmem:[%s3076 + $0x18] sm:$0xf]
      %v3084 = vld [vmem:[%s3076 + $0x1c] sm:$0xf]
      %v3085 = vld [vmem:[%s3076 + $0x20] sm:$0x1]
      %v3086 = vld [vmem:[%s3076 + $0x24] sm:$0xf]
      %v3087 = vld [vmem:[%s3076 + $0x28] sm:$0xf]
      %v3088 = vld [vmem:[%s3076 + $0x2c] sm:$0x1]
      %v3089 = vld [vmem:[%s3076 + $0x30] sm:$0xf]
      %v3090 = vld [vmem:[%s3076 + $0x34] sm:$0xf]
      %v3091 = vld [vmem:[%s3076 + $0x38] sm:$0x1]
      %v3092 = vld [vmem:[%s3076 + $0x3c] sm:$0xf]
      %v3093 = vld [vmem:[%s3076 + $0x40] sm:$0xf]
      %v3094 = vld [vmem:[%s3076 + $0x44] sm:$0x1]
      %v3095 = vld [vmem:[%s3076 + $0x48] sm:$0xf]
      %v3096 = vld [vmem:[%s3076 + $0x4c] sm:$0xf]
      %v3097 = vld [vmem:[%s3076 + $0x50] sm:$0x1]
      %v3098 = vld [vmem:[%s3076 + $0x54] sm:$0xf]
      %v3099 = vld [vmem:[%s3076 + $0x58] sm:$0xf]
      %v3100 = vld [vmem:[%s3076 + $0x5c] sm:$0x1]
      %v3101 = vld [vmem:[%s3076 + $0x60] sm:$0xf]
      %v3102 = vld [vmem:[%s3076 + $0x64] sm:$0xf]
      %v3103 = vld [vmem:[%s3076 + $0x68] sm:$0x1]
      %v3104 = vld [vmem:[%s3076 + $0x6c] sm:$0xf]
      %v3105 = vld [vmem:[%s3076 + $0x70] sm:$0xf]
      %v3106 = vld [vmem:[%s3076 + $0x74] sm:$0x1]
      %v3107 = vld [vmem:[%s3076 + $0x78] sm:$0xf]
      %v3108 = vld [vmem:[%s3076 + $0x7c] sm:$0xf]
      %v3109 = vld [vmem:[%s3076 + $0x80] sm:$0x1]
      %v3110 = vld [vmem:[%s3076 + $0x84] sm:$0xf]
      %v3111 = vld [vmem:[%s3076 + $0x88] sm:$0xf]
      %v3112 = vld [vmem:[%s3076 + $0x8c] sm:$0x1]
      %v3113 = vld [vmem:[%s3076 + $0x90] sm:$0xf]
      %v3114 = vld [vmem:[%s3076 + $0x94] sm:$0xf]
      %v3115 = vld [vmem:[%s3076 + $0x98] sm:$0x1]
      %v3116 = vld [vmem:[%s3076 + $0x9c] sm:$0xf]
      %v3117 = vld [vmem:[%s3076 + $0xa0] sm:$0xf]
      %v3118 = vld [vmem:[%s3076 + $0xa4] sm:$0x1]
      %v3119 = vld [vmem:[%s3076 + $0xa8] sm:$0xf]
      %v3120 = vld [vmem:[%s3076 + $0xac] sm:$0xf]
      %v3121 = vld [vmem:[%s3076 + $0xb0] sm:$0x1]
      %v3122 = vld [vmem:[%s3076 + $0xb4] sm:$0xf]
      %v3123 = vld [vmem:[%s3076 + $0xb8] sm:$0xf]
      %v3124 = vld [vmem:[%s3076 + $0xbc] sm:$0x1]
      %v3157 = vunpack.c.l.b16 %v3077
      %v3158 = vunpack.c.l.b16 %v3078
      %v3159 = vunpack.c.l.b16 %v3080
      %v3160 = vunpack.c.l.b16 %v3081
      %v3161 = vunpack.c.l.b16 %v3083
      %v3162 = vunpack.c.l.b16 %v3084
      %v3163 = vunpack.c.l.b16 %v3086
      %v3164 = vunpack.c.l.b16 %v3087
      %v3165 = vunpack.c.l.b16 %v3089
      %v3166 = vunpack.c.l.b16 %v3090
      %v3167 = vunpack.c.l.b16 %v3092
      %v3168 = vunpack.c.l.b16 %v3093
      %v3169 = vunpack.c.l.b16 %v3095
      %v3170 = vunpack.c.l.b16 %v3096
      %v3171 = vunpack.c.l.b16 %v3098
      %v3172 = vunpack.c.l.b16 %v3099
      %v3173 = vunpack.c.l.b16 %v3101
      %v3174 = vunpack.c.l.b16 %v3102
      %v3175 = vunpack.c.l.b16 %v3104
      %v3176 = vunpack.c.l.b16 %v3105
      %v3177 = vunpack.c.l.b16 %v3107
      %v3178 = vunpack.c.l.b16 %v3108
      %v3179 = vunpack.c.l.b16 %v3110
      %v3180 = vunpack.c.l.b16 %v3111
      %v3181 = vunpack.c.l.b16 %v3113
      %v3182 = vunpack.c.l.b16 %v3114
      %v3183 = vunpack.c.l.b16 %v3116
      %v3184 = vunpack.c.l.b16 %v3117
      %v3185 = vunpack.c.l.b16 %v3119
      %v3186 = vunpack.c.l.b16 %v3120
      %v3187 = vunpack.c.l.b16 %v3122
      %v3188 = vunpack.c.l.b16 %v3123
      %v3189 = vpack.c.b16 %v3158, %v3157
      %v3190 = vpack.c.b16 %v3160, %v3159
      %v3191 = vpack.c.b16 %v3162, %v3161
      %v3192 = vpack.c.b16 %v3164, %v3163
      %v3193 = vpack.c.b16 %v3166, %v3165
      %v3194 = vpack.c.b16 %v3168, %v3167
      %v3195 = vpack.c.b16 %v3170, %v3169
      %v3196 = vpack.c.b16 %v3172, %v3171
      %v3197 = vpack.c.b16 %v3174, %v3173
      %v3198 = vpack.c.b16 %v3176, %v3175
      %v3199 = vpack.c.b16 %v3178, %v3177
      %v3200 = vpack.c.b16 %v3180, %v3179
      %v3201 = vpack.c.b16 %v3182, %v3181
      %v3202 = vpack.c.b16 %v3184, %v3183
      %v3203 = vpack.c.b16 %v3186, %v3185
      %v3204 = vpack.c.b16 %v3188, %v3187
      %v3206 = vsel %vm664, %v3189, 0
      %v3209 = vsel %vm664, %v3190, 0
      %v3212 = vsel %vm664, %v3191, 0
      %v3215 = vsel %vm664, %v3192, 0
      %v3218 = vsel %vm664, %v3193, 0
      %v3221 = vsel %vm664, %v3194, 0
      %v3224 = vsel %vm664, %v3195, 0
      %v3227 = vsel %vm664, %v3196, 0
      %v3230 = vsel %vm664, %v3197, 0
      %v3233 = vsel %vm664, %v3198, 0
      %v3236 = vsel %vm664, %v3199, 0
      %v3239 = vsel %vm664, %v3200, 0
      %v3242 = vsel %vm664, %v3201, 0
      %v3245 = vsel %vm664, %v3202, 0
      %v3248 = vsel %vm664, %v3203, 0
      %v3251 = vsel %vm664, %v3204, 0
      %v3254 = vsel %vm713, %v172, 0
      %3256 = vmatprep.subr.bf16.mxu0 0
      %3257 = vmatpush1.bf16.msra.mxu0 %v3254
      %3258 = vmatprep.subr.bf16.mxu0 0
      %3259 = vmatpush1.bf16.msra.mxu0 0
      %3260 = vmatprep.subr.bf16.mxu0 0
      %3261 = vmatpush1.bf16.msra.mxu0 0
      %3262 = vmatprep.subr.bf16.mxu0 0
      %3263 = vmatpush1.bf16.msra.mxu0 0
      %3264 = vmatprep.subr.bf16.mxu0 0
      %3265 = vmatpush1.bf16.msra.mxu0 0
      %3266 = vmatprep.subr.bf16.mxu0 0
      %3267 = vmatpush1.bf16.msra.mxu0 0
      %3268 = vmatprep.subr.bf16.mxu0 0
      %3269 = vmatpush1.bf16.msra.mxu0 0
      %3270 = vmatprep.subr.bf16.mxu0 0
      %3271 = vmatpush1.bf16.msra.mxu0 0
      %3272 = vmatprep.subr.bf16.mxu0 0
      %3273 = vmatpush1.bf16.msra.mxu0 0
      %3274 = vmatprep.subr.bf16.mxu0 0
      %3275 = vmatpush1.bf16.msra.mxu0 0
      %3276 = vmatprep.subr.bf16.mxu0 0
      %3277 = vmatpush1.bf16.msra.mxu0 0
      %3278 = vmatprep.subr.bf16.mxu0 0
      %3279 = vmatpush1.bf16.msra.mxu0 0
      %3280 = vmatprep.subr.bf16.mxu0 0
      %3281 = vmatpush1.bf16.msra.mxu0 0
      %3282 = vmatprep.subr.bf16.mxu0 0
      %3283 = vmatpush1.bf16.msra.mxu0 0
      %3284 = vmatprep.subr.bf16.mxu0 0
      %3285 = vmatpush1.bf16.msra.mxu0 0
      %3286 = vmatprep.subr.bf16.mxu0 0
      %3287 = vmatpush1.bf16.msra.mxu0 0
      %3288 = vmatprep.mubr.bf16.mxu0 0
      %3289 = vmatmul.mubr.bf16.gmra.mrb[0].mxu0 %v3206
      %v3290 = vpop.f32.mrb[0].mxu0
      %v3291 = vadd.f32 0.0, %v3290
      %v3292 = vpop.f32.mrb[0].mxu0
      %v3293 = vpop.f32.mrb[0].mxu0
      %v3294 = vadd.f32 0.0, %v3293
      %v3295 = vpop.f32.mrb[0].mxu0
      %3296 = vmatprep.mubr.bf16.mxu0 0
      %3297 = vmatmul.mubr.bf16.gmra.mrb[0].mxu0 %v3209
      %v3298 = vpop.f32.mrb[0].mxu0
      %v3299 = vadd.f32 0.0, %v3298
      %v3300 = vpop.f32.mrb[0].mxu0
      %v3301 = vpop.f32.mrb[0].mxu0
      %v3302 = vadd.f32 0.0, %v3301
      %v3303 = vpop.f32.mrb[0].mxu0
      %3304 = vmatprep.mubr.bf16.mxu0 0
      %3305 = vmatmul.mubr.bf16.gmra.mrb[0].mxu0 %v3212
      %v3306 = vpop.f32.mrb[0].mxu0
      %v3307 = vadd.f32 0.0, %v3306
      %v3308 = vpop.f32.mrb[0].mxu0
      %v3309 = vpop.f32.mrb[0].mxu0
      %v3310 = vadd.f32 0.0, %v3309
      %v3311 = vpop.f32.mrb[0].mxu0
      %3312 = vmatprep.mubr.bf16.mxu0 0
      %3313 = vmatmul.mubr.bf16.gmra.mrb[0].mxu0 %v3215
      %v3314 = vpop.f32.mrb[0].mxu0
      %v3315 = vadd.f32 0.0, %v3314
      %v3316 = vpop.f32.mrb[0].mxu0
      %v3317 = vpop.f32.mrb[0].mxu0
      %v3318 = vadd.f32 0.0, %v3317
      %v3319 = vpop.f32.mrb[0].mxu0
      %3320 = vmatprep.mubr.bf16.mxu0 0
      %3321 = vmatmul.mubr.bf16.gmra.mrb[0].mxu0 %v3218
      %v3322 = vpop.f32.mrb[0].mxu0
      %v3323 = vadd.f32 0.0, %v3322
      %v3324 = vpop.f32.mrb[0].mxu0
      %v3325 = vpop.f32.mrb[0].mxu0
      %v3326 = vadd.f32 0.0, %v3325
      %v3327 = vpop.f32.mrb[0].mxu0
      %3328 = vmatprep.mubr.bf16.mxu0 0
      %3329 = vmatmul.mubr.bf16.gmra.mrb[0].mxu0 %v3221
      %v3330 = vpop.f32.mrb[0].mxu0
      %v3331 = vadd.f32 0.0, %v3330
      %v3332 = vpop.f32.mrb[0].mxu0
      %v3333 = vpop.f32.mrb[0].mxu0
      %v3334 = vadd.f32 0.0, %v3333
      %v3335 = vpop.f32.mrb[0].mxu0
      %3336 = vmatprep.mubr.bf16.mxu0 0
      %3337 = vmatmul.mubr.bf16.gmra.mrb[0].mxu0 %v3224
      %v3338 = vpop.f32.mrb[0].mxu0
      %v3339 = vadd.f32 0.0, %v3338
      %v3340 = vpop.f32.mrb[0].mxu0
      %v3341 = vpop.f32.mrb[0].mxu0
      %v3342 = vadd.f32 0.0, %v3341
      %v3343 = vpop.f32.mrb[0].mxu0
      %3344 = vmatprep.mubr.bf16.mxu0 0
      %3345 = vmatmul.mubr.bf16.gmra.mrb[0].mxu0 %v3227
      %v3346 = vpop.f32.mrb[0].mxu0
      %v3347 = vadd.f32 0.0, %v3346
      %v3348 = vpop.f32.mrb[0].mxu0
      %v3349 = vpop.f32.mrb[0].mxu0
      %v3350 = vadd.f32 0.0, %v3349
      %v3351 = vpop.f32.mrb[0].mxu0
      %3352 = vmatprep.mubr.bf16.mxu0 0
      %3353 = vmatmul.mubr.bf16.gmra.mrb[0].mxu0 %v3230
      %v3354 = vpop.f32.mrb[0].mxu0
      %v3355 = vadd.f32 0.0, %v3354
      %v3356 = vpop.f32.mrb[0].mxu0
      %v3357 = vpop.f32.mrb[0].mxu0
      %v3358 = vadd.f32 0.0, %v3357
      %v3359 = vpop.f32.mrb[0].mxu0
      %3360 = vmatprep.mubr.bf16.mxu0 0
      %3361 = vmatmul.mubr.bf16.gmra.mrb[0].mxu0 %v3233
      %v3362 = vpop.f32.mrb[0].mxu0
      %v3363 = vadd.f32 0.0, %v3362
      %v3364 = vpop.f32.mrb[0].mxu0
      %v3365 = vpop.f32.mrb[0].mxu0
      %v3366 = vadd.f32 0.0, %v3365
      %v3367 = vpop.f32.mrb[0].mxu0
      %3368 = vmatprep.mubr.bf16.mxu0 0
      %3369 = vmatmul.mubr.bf16.gmra.mrb[0].mxu0 %v3236
      %v3370 = vpop.f32.mrb[0].mxu0
      %v3371 = vadd.f32 0.0, %v3370
      %v3372 = vpop.f32.mrb[0].mxu0
      %v3373 = vpop.f32.mrb[0].mxu0
      %v3374 = vadd.f32 0.0, %v3373
      %v3375 = vpop.f32.mrb[0].mxu0
      %3376 = vmatprep.mubr.bf16.mxu0 0
      %3377 = vmatmul.mubr.bf16.gmra.mrb[0].mxu0 %v3239
      %v3378 = vpop.f32.mrb[0].mxu0
      %v3379 = vadd.f32 0.0, %v3378
      %v3380 = vpop.f32.mrb[0].mxu0
      %v3381 = vpop.f32.mrb[0].mxu0
      %v3382 = vadd.f32 0.0, %v3381
      %v3383 = vpop.f32.mrb[0].mxu0
      %3384 = vmatprep.mubr.bf16.mxu0 0
      %3385 = vmatmul.mubr.bf16.gmra.mrb[0].mxu0 %v3242
      %v3386 = vpop.f32.mrb[0].mxu0
      %v3387 = vadd.f32 0.0, %v3386
      %v3388 = vpop.f32.mrb[0].mxu0
      %v3389 = vpop.f32.mrb[0].mxu0
      %v3390 = vadd.f32 0.0, %v3389
      %v3391 = vpop.f32.mrb[0].mxu0
      %3392 = vmatprep.mubr.bf16.mxu0 0
      %3393 = vmatmul.mubr.bf16.gmra.mrb[0].mxu0 %v3245
      %v3394 = vpop.f32.mrb[0].mxu0
      %v3395 = vadd.f32 0.0, %v3394
      %v3396 = vpop.f32.mrb[0].mxu0
      %v3397 = vpop.f32.mrb[0].mxu0
      %v3398 = vadd.f32 0.0, %v3397
      %v3399 = vpop.f32.mrb[0].mxu0
      %3400 = vmatprep.mubr.bf16.mxu0 0
      %3401 = vmatmul.mubr.bf16.gmra.mrb[0].mxu0 %v3248
      %v3402 = vpop.f32.mrb[0].mxu0
      %v3403 = vadd.f32 0.0, %v3402
      %v3404 = vpop.f32.mrb[0].mxu0
      %v3405 = vpop.f32.mrb[0].mxu0
      %v3406 = vadd.f32 0.0, %v3405
      %v3407 = vpop.f32.mrb[0].mxu0
      %3408 = vmatprep.mubr.bf16.mxu0 0
      %3409 = vmatmul.mubr.bf16.gmra.mrb[0].mxu0 %v3251
      %v3410 = vpop.f32.mrb[0].mxu0
      %v3411 = vadd.f32 0.0, %v3410
      %v3412 = vpop.f32.mrb[0].mxu0
      %v3413 = vpop.f32.mrb[0].mxu0
      %v3414 = vadd.f32 0.0, %v3413
      %v3415 = vpop.f32.mrb[0].mxu0
      %3416 = vdwg.mxu0
      %v3417 = vadd.f32 %v3041, %v3291
      %v3418 = vadd.f32 %v3042, %v3294
      %v3419 = vadd.f32 %v3043, %v3299
      %v3420 = vadd.f32 %v3044, %v3302
      %v3421 = vadd.f32 %v3045, %v3307
      %v3422 = vadd.f32 %v3046, %v3310
      %v3423 = vadd.f32 %v3047, %v3315
      %v3424 = vadd.f32 %v3048, %v3318
      %v3425 = vadd.f32 %v3049, %v3323
      %v3426 = vadd.f32 %v3050, %v3326
      %v3427 = vadd.f32 %v3051, %v3331
      %v3428 = vadd.f32 %v3052, %v3334
      %v3429 = vadd.f32 %v3053, %v3339
      %v3430 = vadd.f32 %v3054, %v3342
      %v3431 = vadd.f32 %v3055, %v3347
      %v3432 = vadd.f32 %v3056, %v3350
      %v3433 = vadd.f32 %v3057, %v3355
      %v3434 = vadd.f32 %v3058, %v3358
      %v3435 = vadd.f32 %v3059, %v3363
      %v3436 = vadd.f32 %v3060, %v3366
      %v3437 = vadd.f32 %v3061, %v3371
      %v3438 = vadd.f32 %v3062, %v3374
      %v3439 = vadd.f32 %v3063, %v3379
      %v3440 = vadd.f32 %v3064, %v3382
      %v3441 = vadd.f32 %v3065, %v3387
      %v3442 = vadd.f32 %v3066, %v3390
      %v3443 = vadd.f32 %v3067, %v3395
      %v3444 = vadd.f32 %v3068, %v3398
      %v3445 = vadd.f32 %v3069, %v3403
      %v3446 = vadd.f32 %v3070, %v3406
      %v3447 = vadd.f32 %v3071, %v3411
      %v3448 = vadd.f32 %v3072, %v3414
      %v3450 = vshrl.u32 %v3077, 16
      %v3452 = vrot.slane %v3450, 4
      %v3453 = vshll.u32 %v3077, 16
      %v3455 = vrot.slane %v3453, 5
      %v3456 = vor.u32 %v3452, %v3455
      %v3457 = vrot.slane %v3456, 4
      %v3459 = vshll.u32 %v3078, 16
      %v3461 = vrot.slane %v3459, 5
      %v3462 = vsel %vm227, %v3457, %v3461
      %v3463 = vshrl.u32 %v3078, 16
      %v3465 = vrot.slane %v3463, 4
      %v3466 = vor.u32 %v3465, %v3461
      %v3467 = vrot.slane %v3466, 4
      %v3469 = vshll.u32 %v3079, 16
      %v3471 = vrot.slane %v3469, 5
      %v3472 = vsel %vm227, %v3467, %v3471
      %v3474 = vshrl.u32 %v3080, 16
      %v3476 = vrot.slane %v3474, 4
      %v3477 = vshll.u32 %v3080, 16
      %v3479 = vrot.slane %v3477, 5
      %v3480 = vor.u32 %v3476, %v3479
      %v3481 = vrot.slane %v3480, 4
      %v3483 = vshll.u32 %v3081, 16
      %v3485 = vrot.slane %v3483, 5
      %v3486 = vsel %vm227, %v3481, %v3485
      %v3487 = vshrl.u32 %v3081, 16
      %v3489 = vrot.slane %v3487, 4
      %v3490 = vor.u32 %v3489, %v3485
      %v3491 = vrot.slane %v3490, 4
      %v3493 = vshll.u32 %v3082, 16
      %v3495 = vrot.slane %v3493, 5
      %v3496 = vsel %vm227, %v3491, %v3495
      %v3498 = vshrl.u32 %v3083, 16
      %v3500 = vrot.slane %v3498, 4
      %v3501 = vshll.u32 %v3083, 16
      %v3503 = vrot.slane %v3501, 5
      %v3504 = vor.u32 %v3500, %v3503
      %v3505 = vrot.slane %v3504, 4
      %v3507 = vshll.u32 %v3084, 16
      %v3509 = vrot.slane %v3507, 5
      %v3510 = vsel %vm227, %v3505, %v3509
      %v3511 = vshrl.u32 %v3084, 16
      %v3513 = vrot.slane %v3511, 4
      %v3514 = vor.u32 %v3513, %v3509
      %v3515 = vrot.slane %v3514, 4
      %v3517 = vshll.u32 %v3085, 16
      %v3519 = vrot.slane %v3517, 5
      %v3520 = vsel %vm227, %v3515, %v3519
      %v3522 = vshrl.u32 %v3086, 16
      %v3524 = vrot.slane %v3522, 4
      %v3525 = vshll.u32 %v3086, 16
      %v3527 = vrot.slane %v3525, 5
      %v3528 = vor.u32 %v3524, %v3527
      %v3529 = vrot.slane %v3528, 4
      %v3531 = vshll.u32 %v3087, 16
      %v3533 = vrot.slane %v3531, 5
      %v3534 = vsel %vm227, %v3529, %v3533
      %v3535 = vshrl.u32 %v3087, 16
      %v3537 = vrot.slane %v3535, 4
      %v3538 = vor.u32 %v3537, %v3533
      %v3539 = vrot.slane %v3538, 4
      %v3541 = vshll.u32 %v3088, 16
      %v3543 = vrot.slane %v3541, 5
      %v3544 = vsel %vm227, %v3539, %v3543
      %v3546 = vshrl.u32 %v3089, 16
      %v3548 = vrot.slane %v3546, 4
      %v3549 = vshll.u32 %v3089, 16
      %v3551 = vrot.slane %v3549, 5
      %v3552 = vor.u32 %v3548, %v3551
      %v3553 = vrot.slane %v3552, 4
      %v3555 = vshll.u32 %v3090, 16
      %v3557 = vrot.slane %v3555, 5
      %v3558 = vsel %vm227, %v3553, %v3557
      %v3559 = vshrl.u32 %v3090, 16
      %v3561 = vrot.slane %v3559, 4
      %v3562 = vor.u32 %v3561, %v3557
      %v3563 = vrot.slane %v3562, 4
      %v3565 = vshll.u32 %v3091, 16
      %v3567 = vrot.slane %v3565, 5
      %v3568 = vsel %vm227, %v3563, %v3567
      %v3570 = vshrl.u32 %v3092, 16
      %v3572 = vrot.slane %v3570, 4
      %v3573 = vshll.u32 %v3092, 16
      %v3575 = vrot.slane %v3573, 5
      %v3576 = vor.u32 %v3572, %v3575
      %v3577 = vrot.slane %v3576, 4
      %v3579 = vshll.u32 %v3093, 16
      %v3581 = vrot.slane %v3579, 5
      %v3582 = vsel %vm227, %v3577, %v3581
      %v3583 = vshrl.u32 %v3093, 16
      %v3585 = vrot.slane %v3583, 4
      %v3586 = vor.u32 %v3585, %v3581
      %v3587 = vrot.slane %v3586, 4
      %v3589 = vshll.u32 %v3094, 16
      %v3591 = vrot.slane %v3589, 5
      %v3592 = vsel %vm227, %v3587, %v3591
      %v3594 = vshrl.u32 %v3095, 16
      %v3596 = vrot.slane %v3594, 4
      %v3597 = vshll.u32 %v3095, 16
      %v3599 = vrot.slane %v3597, 5
      %v3600 = vor.u32 %v3596, %v3599
      %v3601 = vrot.slane %v3600, 4
      %v3603 = vshll.u32 %v3096, 16
      %v3605 = vrot.slane %v3603, 5
      %v3606 = vsel %vm227, %v3601, %v3605
      %v3607 = vshrl.u32 %v3096, 16
      %v3609 = vrot.slane %v3607, 4
      %v3610 = vor.u32 %v3609, %v3605
      %v3611 = vrot.slane %v3610, 4
      %v3613 = vshll.u32 %v3097, 16
      %v3615 = vrot.slane %v3613, 5
      %v3616 = vsel %vm227, %v3611, %v3615
      %v3618 = vshrl.u32 %v3098, 16
      %v3620 = vrot.slane %v3618, 4
      %v3621 = vshll.u32 %v3098, 16
      %v3623 = vrot.slane %v3621, 5
      %v3624 = vor.u32 %v3620, %v3623
      %v3625 = vrot.slane %v3624, 4
      %v3627 = vshll.u32 %v3099, 16
      %v3629 = vrot.slane %v3627, 5
      %v3630 = vsel %vm227, %v3625, %v3629
      %v3631 = vshrl.u32 %v3099, 16
      %v3633 = vrot.slane %v3631, 4
      %v3634 = vor.u32 %v3633, %v3629
      %v3635 = vrot.slane %v3634, 4
      %v3637 = vshll.u32 %v3100, 16
      %v3639 = vrot.slane %v3637, 5
      %v3640 = vsel %vm227, %v3635, %v3639
      %v3642 = vshrl.u32 %v3101, 16
      %v3644 = vrot.slane %v3642, 4
      %v3645 = vshll.u32 %v3101, 16
      %v3647 = vrot.slane %v3645, 5
      %v3648 = vor.u32 %v3644, %v3647
      %v3649 = vrot.slane %v3648, 4
      %v3651 = vshll.u32 %v3102, 16
      %v3653 = vrot.slane %v3651, 5
      %v3654 = vsel %vm227, %v3649, %v3653
      %v3655 = vshrl.u32 %v3102, 16
      %v3657 = vrot.slane %v3655, 4
      %v3658 = vor.u32 %v3657, %v3653
      %v3659 = vrot.slane %v3658, 4
      %v3661 = vshll.u32 %v3103, 16
      %v3663 = vrot.slane %v3661, 5
      %v3664 = vsel %vm227, %v3659, %v3663
      %v3666 = vshrl.u32 %v3104, 16
      %v3668 = vrot.slane %v3666, 4
      %v3669 = vshll.u32 %v3104, 16
      %v3671 = vrot.slane %v3669, 5
      %v3672 = vor.u32 %v3668, %v3671
      %v3673 = vrot.slane %v3672, 4
      %v3675 = vshll.u32 %v3105, 16
      %v3677 = vrot.slane %v3675, 5
      %v3678 = vsel %vm227, %v3673, %v3677
      %v3679 = vshrl.u32 %v3105, 16
      %v3681 = vrot.slane %v3679, 4
      %v3682 = vor.u32 %v3681, %v3677
      %v3683 = vrot.slane %v3682, 4
      %v3685 = vshll.u32 %v3106, 16
      %v3687 = vrot.slane %v3685, 5
      %v3688 = vsel %vm227, %v3683, %v3687
      %v3690 = vshrl.u32 %v3107, 16
      %v3692 = vrot.slane %v3690, 4
      %v3693 = vshll.u32 %v3107, 16
      %v3695 = vrot.slane %v3693, 5
      %v3696 = vor.u32 %v3692, %v3695
      %v3697 = vrot.slane %v3696, 4
      %v3699 = vshll.u32 %v3108, 16
      %v3701 = vrot.slane %v3699, 5
      %v3702 = vsel %vm227, %v3697, %v3701
      %v3703 = vshrl.u32 %v3108, 16
      %v3705 = vrot.slane %v3703, 4
      %v3706 = vor.u32 %v3705, %v3701
      %v3707 = vrot.slane %v3706, 4
      %v3709 = vshll.u32 %v3109, 16
      %v3711 = vrot.slane %v3709, 5
      %v3712 = vsel %vm227, %v3707, %v3711
      %v3714 = vshrl.u32 %v3110, 16
      %v3716 = vrot.slane %v3714, 4
      %v3717 = vshll.u32 %v3110, 16
      %v3719 = vrot.slane %v3717, 5
      %v3720 = vor.u32 %v3716, %v3719
      %v3721 = vrot.slane %v3720, 4
      %v3723 = vshll.u32 %v3111, 16
      %v3725 = vrot.slane %v3723, 5
      %v3726 = vsel %vm227, %v3721, %v3725
      %v3727 = vshrl.u32 %v3111, 16
      %v3729 = vrot.slane %v3727, 4
      %v3730 = vor.u32 %v3729, %v3725
      %v3731 = vrot.slane %v3730, 4
      %v3733 = vshll.u32 %v3112, 16
      %v3735 = vrot.slane %v3733, 5
      %v3736 = vsel %vm227, %v3731, %v3735
      %v3738 = vshrl.u32 %v3113, 16
      %v3740 = vrot.slane %v3738, 4
      %v3741 = vshll.u32 %v3113, 16
      %v3743 = vrot.slane %v3741, 5
      %v3744 = vor.u32 %v3740, %v3743
      %v3745 = vrot.slane %v3744, 4
      %v3747 = vshll.u32 %v3114, 16
      %v3749 = vrot.slane %v3747, 5
      %v3750 = vsel %vm227, %v3745, %v3749
      %v3751 = vshrl.u32 %v3114, 16
      %v3753 = vrot.slane %v3751, 4
      %v3754 = vor.u32 %v3753, %v3749
      %v3755 = vrot.slane %v3754, 4
      %v3757 = vshll.u32 %v3115, 16
      %v3759 = vrot.slane %v3757, 5
      %v3760 = vsel %vm227, %v3755, %v3759
      %v3762 = vshrl.u32 %v3116, 16
      %v3764 = vrot.slane %v3762, 4
      %v3765 = vshll.u32 %v3116, 16
      %v3767 = vrot.slane %v3765, 5
      %v3768 = vor.u32 %v3764, %v3767
      %v3769 = vrot.slane %v3768, 4
      %v3771 = vshll.u32 %v3117, 16
      %v3773 = vrot.slane %v3771, 5
      %v3774 = vsel %vm227, %v3769, %v3773
      %v3775 = vshrl.u32 %v3117, 16
      %v3777 = vrot.slane %v3775, 4
      %v3778 = vor.u32 %v3777, %v3773
      %v3779 = vrot.slane %v3778, 4
      %v3781 = vshll.u32 %v3118, 16
      %v3783 = vrot.slane %v3781, 5
      %v3784 = vsel %vm227, %v3779, %v3783
      %v3786 = vshrl.u32 %v3119, 16
      %v3788 = vrot.slane %v3786, 4
      %v3789 = vshll.u32 %v3119, 16
      %v3791 = vrot.slane %v3789, 5
      %v3792 = vor.u32 %v3788, %v3791
      %v3793 = vrot.slane %v3792, 4
      %v3795 = vshll.u32 %v3120, 16
      %v3797 = vrot.slane %v3795, 5
      %v3798 = vsel %vm227, %v3793, %v3797
      %v3799 = vshrl.u32 %v3120, 16
      %v3801 = vrot.slane %v3799, 4
      %v3802 = vor.u32 %v3801, %v3797
      %v3803 = vrot.slane %v3802, 4
      %v3805 = vshll.u32 %v3121, 16
      %v3807 = vrot.slane %v3805, 5
      %v3808 = vsel %vm227, %v3803, %v3807
      %v3810 = vshrl.u32 %v3122, 16
      %v3812 = vrot.slane %v3810, 4
      %v3813 = vshll.u32 %v3122, 16
      %v3815 = vrot.slane %v3813, 5
      %v3816 = vor.u32 %v3812, %v3815
      %v3817 = vrot.slane %v3816, 4
      %v3819 = vshll.u32 %v3123, 16
      %v3821 = vrot.slane %v3819, 5
      %v3822 = vsel %vm227, %v3817, %v3821
      %v3823 = vshrl.u32 %v3123, 16
      %v3825 = vrot.slane %v3823, 4
      %v3826 = vor.u32 %v3825, %v3821
      %v3827 = vrot.slane %v3826, 4
      %v3829 = vshll.u32 %v3124, 16
      %v3831 = vrot.slane %v3829, 5
      %v3832 = vsel %vm227, %v3827, %v3831
      %v3833 = vunpack.c.l.b16 %v3462
      %v3834 = vunpack.c.l.b16 %v3472
      %v3835 = vunpack.c.l.b16 %v3486
      %v3836 = vunpack.c.l.b16 %v3496
      %v3837 = vunpack.c.l.b16 %v3510
      %v3838 = vunpack.c.l.b16 %v3520
      %v3839 = vunpack.c.l.b16 %v3534
      %v3840 = vunpack.c.l.b16 %v3544
      %v3841 = vunpack.c.l.b16 %v3558
      %v3842 = vunpack.c.l.b16 %v3568
      %v3843 = vunpack.c.l.b16 %v3582
      %v3844 = vunpack.c.l.b16 %v3592
      %v3845 = vunpack.c.l.b16 %v3606
      %v3846 = vunpack.c.l.b16 %v3616
      %v3847 = vunpack.c.l.b16 %v3630
      %v3848 = vunpack.c.l.b16 %v3640
      %v3849 = vunpack.c.l.b16 %v3654
      %v3850 = vunpack.c.l.b16 %v3664
      %v3851 = vunpack.c.l.b16 %v3678
      %v3852 = vunpack.c.l.b16 %v3688
      %v3853 = vunpack.c.l.b16 %v3702
      %v3854 = vunpack.c.l.b16 %v3712
      %v3855 = vunpack.c.l.b16 %v3726
      %v3856 = vunpack.c.l.b16 %v3736
      %v3857 = vunpack.c.l.b16 %v3750
      %v3858 = vunpack.c.l.b16 %v3760
      %v3859 = vunpack.c.l.b16 %v3774
      %v3860 = vunpack.c.l.b16 %v3784
      %v3861 = vunpack.c.l.b16 %v3798
      %v3862 = vunpack.c.l.b16 %v3808
      %v3863 = vunpack.c.l.b16 %v3822
      %v3864 = vunpack.c.l.b16 %v3832
      %v3865 = vpack.c.b16 %v3834, %v3833
      %v3866 = vpack.c.b16 %v3836, %v3835
      %v3867 = vpack.c.b16 %v3838, %v3837
      %v3868 = vpack.c.b16 %v3840, %v3839
      %v3869 = vpack.c.b16 %v3842, %v3841
      %v3870 = vpack.c.b16 %v3844, %v3843
      %v3871 = vpack.c.b16 %v3846, %v3845
      %v3872 = vpack.c.b16 %v3848, %v3847
      %v3873 = vpack.c.b16 %v3850, %v3849
      %v3874 = vpack.c.b16 %v3852, %v3851
      %v3875 = vpack.c.b16 %v3854, %v3853
      %v3876 = vpack.c.b16 %v3856, %v3855
      %v3877 = vpack.c.b16 %v3858, %v3857
      %v3878 = vpack.c.b16 %v3860, %v3859
      %v3879 = vpack.c.b16 %v3862, %v3861
      %v3880 = vpack.c.b16 %v3864, %v3863
      %v3882 = vunpack.c.l.b16 %v172
      %v3883 = vpack.c.b16 %v3882, %v3882
      %v3884 = vrot.slane %v3883, 2
      %v3886 = vsel %vm664, %v3865, 0
      %v3889 = vsel %vm664, %v3866, 0
      %v3892 = vsel %vm664, %v3867, 0
      %v3895 = vsel %vm664, %v3868, 0
      %v3898 = vsel %vm664, %v3869, 0
      %v3901 = vsel %vm664, %v3870, 0
      %v3904 = vsel %vm664, %v3871, 0
      %v3907 = vsel %vm664, %v3872, 0
      %v3910 = vsel %vm664, %v3873, 0
      %v3913 = vsel %vm664, %v3874, 0
      %v3916 = vsel %vm664, %v3875, 0
      %v3919 = vsel %vm664, %v3876, 0
      %v3922 = vsel %vm664, %v3877, 0
      %v3925 = vsel %vm664, %v3878, 0
      %v3928 = vsel %vm664, %v3879, 0
      %v3931 = vsel %vm664, %v3880, 0
      %v3934 = vsel %vm713, %v3884, 0
      %3936 = vmatprep.subr.bf16.mxu0 0
      %3937 = vmatpush1.bf16.msra.mxu0 %v3934
      %3938 = vmatprep.subr.bf16.mxu0 0
      %3939 = vmatpush1.bf16.msra.mxu0 0
      %3940 = vmatprep.subr.bf16.mxu0 0
      %3941 = vmatpush1.bf16.msra.mxu0 0
      %3942 = vmatprep.subr.bf16.mxu0 0
      %3943 = vmatpush1.bf16.msra.mxu0 0
      %3944 = vmatprep.subr.bf16.mxu0 0
      %3945 = vmatpush1.bf16.msra.mxu0 0
      %3946 = vmatprep.subr.bf16.mxu0 0
      %3947 = vmatpush1.bf16.msra.mxu0 0
      %3948 = vmatprep.subr.bf16.mxu0 0
      %3949 = vmatpush1.bf16.msra.mxu0 0
      %3950 = vmatprep.subr.bf16.mxu0 0
      %3951 = vmatpush1.bf16.msra.mxu0 0
      %3952 = vmatprep.subr.bf16.mxu0 0
      %3953 = vmatpush1.bf16.msra.mxu0 0
      %3954 = vmatprep.subr.bf16.mxu0 0
      %3955 = vmatpush1.bf16.msra.mxu0 0
      %3956 = vmatprep.subr.bf16.mxu0 0
      %3957 = vmatpush1.bf16.msra.mxu0 0
      %3958 = vmatprep.subr.bf16.mxu0 0
      %3959 = vmatpush1.bf16.msra.mxu0 0
      %3960 = vmatprep.subr.bf16.mxu0 0
      %3961 = vmatpush1.bf16.msra.mxu0 0
      %3962 = vmatprep.subr.bf16.mxu0 0
      %3963 = vmatpush1.bf16.msra.mxu0 0
      %3964 = vmatprep.subr.bf16.mxu0 0
      %3965 = vmatpush1.bf16.msra.mxu0 0
      %3966 = vmatprep.subr.bf16.mxu0 0
      %3967 = vmatpush1.bf16.msra.mxu0 0
      %3968 = vmatprep.mubr.bf16.mxu0 0
      %3969 = vmatmul.mubr.bf16.gmra.mrb[0].mxu0 %v3886
      %v3970 = vpop.f32.mrb[0].mxu0
      %v3971 = vadd.f32 0.0, %v3970
      %v3972 = vpop.f32.mrb[0].mxu0
      %v3973 = vpop.f32.mrb[0].mxu0
      %v3974 = vadd.f32 0.0, %v3973
      %v3975 = vpop.f32.mrb[0].mxu0
      %3976 = vmatprep.mubr.bf16.mxu0 0
      %3977 = vmatmul.mubr.bf16.gmra.mrb[0].mxu0 %v3889
      %v3978 = vpop.f32.mrb[0].mxu0
      %v3979 = vadd.f32 0.0, %v3978
      %v3980 = vpop.f32.mrb[0].mxu0
      %v3981 = vpop.f32.mrb[0].mxu0
      %v3982 = vadd.f32 0.0, %v3981
      %v3983 = vpop.f32.mrb[0].mxu0
      %3984 = vmatprep.mubr.bf16.mxu0 0
      %3985 = vmatmul.mubr.bf16.gmra.mrb[0].mxu0 %v3892
      %v3986 = vpop.f32.mrb[0].mxu0
      %v3987 = vadd.f32 0.0, %v3986
      %v3988 = vpop.f32.mrb[0].mxu0
      %v3989 = vpop.f32.mrb[0].mxu0
      %v3990 = vadd.f32 0.0, %v3989
      %v3991 = vpop.f32.mrb[0].mxu0
      %3992 = vmatprep.mubr.bf16.mxu0 0
      %3993 = vmatmul.mubr.bf16.gmra.mrb[0].mxu0 %v3895
      %v3994 = vpop.f32.mrb[0].mxu0
      %v3995 = vadd.f32 0.0, %v3994
      %v3996 = vpop.f32.mrb[0].mxu0
      %v3997 = vpop.f32.mrb[0].mxu0
      %v3998 = vadd.f32 0.0, %v3997
      %v3999 = vpop.f32.mrb[0].mxu0
      %4000 = vmatprep.mubr.bf16.mxu0 0
      %4001 = vmatmul.mubr.bf16.gmra.mrb[0].mxu0 %v3898
      %v4002 = vpop.f32.mrb[0].mxu0
      %v4003 = vadd.f32 0.0, %v4002
      %v4004 = vpop.f32.mrb[0].mxu0
      %v4005 = vpop.f32.mrb[0].mxu0
      %v4006 = vadd.f32 0.0, %v4005
      %v4007 = vpop.f32.mrb[0].mxu0
      %4008 = vmatprep.mubr.bf16.mxu0 0
      %4009 = vmatmul.mubr.bf16.gmra.mrb[0].mxu0 %v3901
      %v4010 = vpop.f32.mrb[0].mxu0
      %v4011 = vadd.f32 0.0, %v4010
      %v4012 = vpop.f32.mrb[0].mxu0
      %v4013 = vpop.f32.mrb[0].mxu0
      %v4014 = vadd.f32 0.0, %v4013
      %v4015 = vpop.f32.mrb[0].mxu0
      %4016 = vmatprep.mubr.bf16.mxu0 0
      %4017 = vmatmul.mubr.bf16.gmra.mrb[0].mxu0 %v3904
      %v4018 = vpop.f32.mrb[0].mxu0
      %v4019 = vadd.f32 0.0, %v4018
      %v4020 = vpop.f32.mrb[0].mxu0
      %v4021 = vpop.f32.mrb[0].mxu0
      %v4022 = vadd.f32 0.0, %v4021
      %v4023 = vpop.f32.mrb[0].mxu0
      %4024 = vmatprep.mubr.bf16.mxu0 0
      %4025 = vmatmul.mubr.bf16.gmra.mrb[0].mxu0 %v3907
      %v4026 = vpop.f32.mrb[0].mxu0
      %v4027 = vadd.f32 0.0, %v4026
      %v4028 = vpop.f32.mrb[0].mxu0
      %v4029 = vpop.f32.mrb[0].mxu0
      %v4030 = vadd.f32 0.0, %v4029
      %v4031 = vpop.f32.mrb[0].mxu0
      %4032 = vmatprep.mubr.bf16.mxu0 0
      %4033 = vmatmul.mubr.bf16.gmra.mrb[0].mxu0 %v3910
      %v4034 = vpop.f32.mrb[0].mxu0
      %v4035 = vadd.f32 0.0, %v4034
      %v4036 = vpop.f32.mrb[0].mxu0
      %v4037 = vpop.f32.mrb[0].mxu0
      %v4038 = vadd.f32 0.0, %v4037
      %v4039 = vpop.f32.mrb[0].mxu0
      %4040 = vmatprep.mubr.bf16.mxu0 0
      %4041 = vmatmul.mubr.bf16.gmra.mrb[0].mxu0 %v3913
      %v4042 = vpop.f32.mrb[0].mxu0
      %v4043 = vadd.f32 0.0, %v4042
      %v4044 = vpop.f32.mrb[0].mxu0
      %v4045 = vpop.f32.mrb[0].mxu0
      %v4046 = vadd.f32 0.0, %v4045
      %v4047 = vpop.f32.mrb[0].mxu0
      %4048 = vmatprep.mubr.bf16.mxu0 0
      %4049 = vmatmul.mubr.bf16.gmra.mrb[0].mxu0 %v3916
      %v4050 = vpop.f32.mrb[0].mxu0
      %v4051 = vadd.f32 0.0, %v4050
      %v4052 = vpop.f32.mrb[0].mxu0
      %v4053 = vpop.f32.mrb[0].mxu0
      %v4054 = vadd.f32 0.0, %v4053
      %v4055 = vpop.f32.mrb[0].mxu0
      %4056 = vmatprep.mubr.bf16.mxu0 0
      %4057 = vmatmul.mubr.bf16.gmra.mrb[0].mxu0 %v3919
      %v4058 = vpop.f32.mrb[0].mxu0
      %v4059 = vadd.f32 0.0, %v4058
      %v4060 = vpop.f32.mrb[0].mxu0
      %v4061 = vpop.f32.mrb[0].mxu0
      %v4062 = vadd.f32 0.0, %v4061
      %v4063 = vpop.f32.mrb[0].mxu0
      %4064 = vmatprep.mubr.bf16.mxu0 0
      %4065 = vmatmul.mubr.bf16.gmra.mrb[0].mxu0 %v3922
      %v4066 = vpop.f32.mrb[0].mxu0
      %v4067 = vadd.f32 0.0, %v4066
      %v4068 = vpop.f32.mrb[0].mxu0
      %v4069 = vpop.f32.mrb[0].mxu0
      %v4070 = vadd.f32 0.0, %v4069
      %v4071 = vpop.f32.mrb[0].mxu0
      %4072 = vmatprep.mubr.bf16.mxu0 0
      %4073 = vmatmul.mubr.bf16.gmra.mrb[0].mxu0 %v3925
      %v4074 = vpop.f32.mrb[0].mxu0
      %v4075 = vadd.f32 0.0, %v4074
      %v4076 = vpop.f32.mrb[0].mxu0
      %v4077 = vpop.f32.mrb[0].mxu0
      %v4078 = vadd.f32 0.0, %v4077
      %v4079 = vpop.f32.mrb[0].mxu0
      %4080 = vmatprep.mubr.bf16.mxu0 0
      %4081 = vmatmul.mubr.bf16.gmra.mrb[0].mxu0 %v3928
      %v4082 = vpop.f32.mrb[0].mxu0
      %v4083 = vadd.f32 0.0, %v4082
      %v4084 = vpop.f32.mrb[0].mxu0
      %v4085 = vpop.f32.mrb[0].mxu0
      %v4086 = vadd.f32 0.0, %v4085
      %v4087 = vpop.f32.mrb[0].mxu0
      %4088 = vmatprep.mubr.bf16.mxu0 0
      %4089 = vmatmul.mubr.bf16.gmra.mrb[0].mxu0 %v3931
      %v4090 = vpop.f32.mrb[0].mxu0
      %v4091 = vadd.f32 0.0, %v4090
      %v4092 = vpop.f32.mrb[0].mxu0
      %v4093 = vpop.f32.mrb[0].mxu0
      %v4094 = vadd.f32 0.0, %v4093
      %v4095 = vpop.f32.mrb[0].mxu0
      %4096 = vdwg.mxu0
      %v4097 = vadd.f32 %v3417, %v3971
      %v4098 = vadd.f32 %v3418, %v3974
      %v4099 = vadd.f32 %v3419, %v3979
      %v4100 = vadd.f32 %v3420, %v3982
      %v4101 = vadd.f32 %v3421, %v3987
      %v4102 = vadd.f32 %v3422, %v3990
      %v4103 = vadd.f32 %v3423, %v3995
      %v4104 = vadd.f32 %v3424, %v3998
      %v4105 = vadd.f32 %v3425, %v4003
      %v4106 = vadd.f32 %v3426, %v4006
      %v4107 = vadd.f32 %v3427, %v4011
      %v4108 = vadd.f32 %v3428, %v4014
      %v4109 = vadd.f32 %v3429, %v4019
      %v4110 = vadd.f32 %v3430, %v4022
      %v4111 = vadd.f32 %v3431, %v4027
      %v4112 = vadd.f32 %v3432, %v4030
      %v4113 = vadd.f32 %v3433, %v4035
      %v4114 = vadd.f32 %v3434, %v4038
      %v4115 = vadd.f32 %v3435, %v4043
      %v4116 = vadd.f32 %v3436, %v4046
      %v4117 = vadd.f32 %v3437, %v4051
      %v4118 = vadd.f32 %v3438, %v4054
      %v4119 = vadd.f32 %v3439, %v4059
      %v4120 = vadd.f32 %v3440, %v4062
      %v4121 = vadd.f32 %v3441, %v4067
      %v4122 = vadd.f32 %v3442, %v4070
      %v4123 = vadd.f32 %v3443, %v4075
      %v4124 = vadd.f32 %v3444, %v4078
      %v4125 = vadd.f32 %v3445, %v4083
      %v4126 = vadd.f32 %v3446, %v4086
      %v4127 = vadd.f32 %v3447, %v4091
      %v4128 = vadd.f32 %v3448, %v4094
      %v4145 = vrot.slane %v3077, 5
      %v4146 = vrot.slane %v4145, 4
      %v4147 = vrot.slane %v3078, 5
      %v4148 = vsel %vm1188, %v4146, %v4147
      %v4149 = vrot.slane %v4147, 4
      %v4150 = vrot.slane %v3079, 5
      %v4151 = vsel %vm1188, %v4149, %v4150
      %v4152 = vrot.slane %v3080, 5
      %v4153 = vrot.slane %v4152, 4
      %v4154 = vrot.slane %v3081, 5
      %v4155 = vsel %vm1188, %v4153, %v4154
      %v4156 = vrot.slane %v4154, 4
      %v4157 = vrot.slane %v3082, 5
      %v4158 = vsel %vm1188, %v4156, %v4157
      %v4159 = vrot.slane %v3083, 5
      %v4160 = vrot.slane %v4159, 4
      %v4161 = vrot.slane %v3084, 5
      %v4162 = vsel %vm1188, %v4160, %v4161
      %v4163 = vrot.slane %v4161, 4
      %v4164 = vrot.slane %v3085, 5
      %v4165 = vsel %vm1188, %v4163, %v4164
      %v4166 = vrot.slane %v3086, 5
      %v4167 = vrot.slane %v4166, 4
      %v4168 = vrot.slane %v3087, 5
      %v4169 = vsel %vm1188, %v4167, %v4168
      %v4170 = vrot.slane %v4168, 4
      %v4171 = vrot.slane %v3088, 5
      %v4172 = vsel %vm1188, %v4170, %v4171
      %v4173 = vrot.slane %v3089, 5
      %v4174 = vrot.slane %v4173, 4
      %v4175 = vrot.slane %v3090, 5
      %v4176 = vsel %vm1188, %v4174, %v4175
      %v4177 = vrot.slane %v4175, 4
      %v4178 = vrot.slane %v3091, 5
      %v4179 = vsel %vm1188, %v4177, %v4178
      %v4180 = vrot.slane %v3092, 5
      %v4181 = vrot.slane %v4180, 4
      %v4182 = vrot.slane %v3093, 5
      %v4183 = vsel %vm1188, %v4181, %v4182
      %v4184 = vrot.slane %v4182, 4
      %v4185 = vrot.slane %v3094, 5
      %v4186 = vsel %vm1188, %v4184, %v4185
      %v4187 = vrot.slane %v3095, 5
      %v4188 = vrot.slane %v4187, 4
      %v4189 = vrot.slane %v3096, 5
      %v4190 = vsel %vm1188, %v4188, %v4189
      %v4191 = vrot.slane %v4189, 4
      %v4192 = vrot.slane %v3097, 5
      %v4193 = vsel %vm1188, %v4191, %v4192
      %v4194 = vrot.slane %v3098, 5
      %v4195 = vrot.slane %v4194, 4
      %v4196 = vrot.slane %v3099, 5
      %v4197 = vsel %vm1188, %v4195, %v4196
      %v4198 = vrot.slane %v4196, 4
      %v4199 = vrot.slane %v3100, 5
      %v4200 = vsel %vm1188, %v4198, %v4199
      %v4201 = vrot.slane %v3101, 5
      %v4202 = vrot.slane %v4201, 4
      %v4203 = vrot.slane %v3102, 5
      %v4204 = vsel %vm1188, %v4202, %v4203
      %v4205 = vrot.slane %v4203, 4
      %v4206 = vrot.slane %v3103, 5
      %v4207 = vsel %vm1188, %v4205, %v4206
      %v4208 = vrot.slane %v3104, 5
      %v4209 = vrot.slane %v4208, 4
      %v4210 = vrot.slane %v3105, 5
      %v4211 = vsel %vm1188, %v4209, %v4210
      %v4212 = vrot.slane %v4210, 4
      %v4213 = vrot.slane %v3106, 5
      %v4214 = vsel %vm1188, %v4212, %v4213
      %v4215 = vrot.slane %v3107, 5
      %v4216 = vrot.slane %v4215, 4
      %v4217 = vrot.slane %v3108, 5
      %v4218 = vsel %vm1188, %v4216, %v4217
      %v4219 = vrot.slane %v4217, 4
      %v4220 = vrot.slane %v3109, 5
      %v4221 = vsel %vm1188, %v4219, %v4220
      %v4222 = vrot.slane %v3110, 5
      %v4223 = vrot.slane %v4222, 4
      %v4224 = vrot.slane %v3111, 5
      %v4225 = vsel %vm1188, %v4223, %v4224
      %v4226 = vrot.slane %v4224, 4
      %v4227 = vrot.slane %v3112, 5
      %v4228 = vsel %vm1188, %v4226, %v4227
      %v4229 = vrot.slane %v3113, 5
      %v4230 = vrot.slane %v4229, 4
      %v4231 = vrot.slane %v3114, 5
      %v4232 = vsel %vm1188, %v4230, %v4231
      %v4233 = vrot.slane %v4231, 4
      %v4234 = vrot.slane %v3115, 5
      %v4235 = vsel %vm1188, %v4233, %v4234
      %v4236 = vrot.slane %v3116, 5
      %v4237 = vrot.slane %v4236, 4
      %v4238 = vrot.slane %v3117, 5
      %v4239 = vsel %vm1188, %v4237, %v4238
      %v4240 = vrot.slane %v4238, 4
      %v4241 = vrot.slane %v3118, 5
      %v4242 = vsel %vm1188, %v4240, %v4241
      %v4243 = vrot.slane %v3119, 5
      %v4244 = vrot.slane %v4243, 4
      %v4245 = vrot.slane %v3120, 5
      %v4246 = vsel %vm1188, %v4244, %v4245
      %v4247 = vrot.slane %v4245, 4
      %v4248 = vrot.slane %v3121, 5
      %v4249 = vsel %vm1188, %v4247, %v4248
      %v4250 = vrot.slane %v3122, 5
      %v4251 = vrot.slane %v4250, 4
      %v4252 = vrot.slane %v3123, 5
      %v4253 = vsel %vm1188, %v4251, %v4252
      %v4254 = vrot.slane %v4252, 4
      %v4255 = vrot.slane %v3124, 5
      %v4256 = vsel %vm1188, %v4254, %v4255
      %v4257 = vunpack.c.l.b16 %v4148
      %v4258 = vunpack.c.l.b16 %v4151
      %v4259 = vunpack.c.l.b16 %v4155
      %v4260 = vunpack.c.l.b16 %v4158
      %v4261 = vunpack.c.l.b16 %v4162
      %v4262 = vunpack.c.l.b16 %v4165
      %v4263 = vunpack.c.l.b16 %v4169
      %v4264 = vunpack.c.l.b16 %v4172
      %v4265 = vunpack.c.l.b16 %v4176
      %v4266 = vunpack.c.l.b16 %v4179
      %v4267 = vunpack.c.l.b16 %v4183
      %v4268 = vunpack.c.l.b16 %v4186
      %v4269 = vunpack.c.l.b16 %v4190
      %v4270 = vunpack.c.l.b16 %v4193
      %v4271 = vunpack.c.l.b16 %v4197
      %v4272 = vunpack.c.l.b16 %v4200
      %v4273 = vunpack.c.l.b16 %v4204
      %v4274 = vunpack.c.l.b16 %v4207
      %v4275 = vunpack.c.l.b16 %v4211
      %v4276 = vunpack.c.l.b16 %v4214
      %v4277 = vunpack.c.l.b16 %v4218
      %v4278 = vunpack.c.l.b16 %v4221
      %v4279 = vunpack.c.l.b16 %v4225
      %v4280 = vunpack.c.l.b16 %v4228
      %v4281 = vunpack.c.l.b16 %v4232
      %v4282 = vunpack.c.l.b16 %v4235
      %v4283 = vunpack.c.l.b16 %v4239
      %v4284 = vunpack.c.l.b16 %v4242
      %v4285 = vunpack.c.l.b16 %v4246
      %v4286 = vunpack.c.l.b16 %v4249
      %v4287 = vunpack.c.l.b16 %v4253
      %v4288 = vunpack.c.l.b16 %v4256
      %v4289 = vpack.c.b16 %v4258, %v4257
      %v4290 = vpack.c.b16 %v4260, %v4259
      %v4291 = vpack.c.b16 %v4262, %v4261
      %v4292 = vpack.c.b16 %v4264, %v4263
      %v4293 = vpack.c.b16 %v4266, %v4265
      %v4294 = vpack.c.b16 %v4268, %v4267
      %v4295 = vpack.c.b16 %v4270, %v4269
      %v4296 = vpack.c.b16 %v4272, %v4271
      %v4297 = vpack.c.b16 %v4274, %v4273
      %v4298 = vpack.c.b16 %v4276, %v4275
      %v4299 = vpack.c.b16 %v4278, %v4277
      %v4300 = vpack.c.b16 %v4280, %v4279
      %v4301 = vpack.c.b16 %v4282, %v4281
      %v4302 = vpack.c.b16 %v4284, %v4283
      %v4303 = vpack.c.b16 %v4286, %v4285
      %v4304 = vpack.c.b16 %v4288, %v4287
      %v4306 = vsel %vm664, %v4289, 0
      %v4309 = vsel %vm664, %v4290, 0
      %v4312 = vsel %vm664, %v4291, 0
      %v4315 = vsel %vm664, %v4292, 0
      %v4318 = vsel %vm664, %v4293, 0
      %v4321 = vsel %vm664, %v4294, 0
      %v4324 = vsel %vm664, %v4295, 0
      %v4327 = vsel %vm664, %v4296, 0
      %v4330 = vsel %vm664, %v4297, 0
      %v4333 = vsel %vm664, %v4298, 0
      %v4336 = vsel %vm664, %v4299, 0
      %v4339 = vsel %vm664, %v4300, 0
      %v4342 = vsel %vm664, %v4301, 0
      %v4345 = vsel %vm664, %v4302, 0
      %v4348 = vsel %vm664, %v4303, 0
      %v4351 = vsel %vm664, %v4304, 0
      %v4354 = vsel %vm713, %v173, 0
      %4356 = vmatprep.subr.bf16.mxu0 0
      %4357 = vmatpush1.bf16.msra.mxu0 %v4354
      %4358 = vmatprep.subr.bf16.mxu0 0
      %4359 = vmatpush1.bf16.msra.mxu0 0
      %4360 = vmatprep.subr.bf16.mxu0 0
      %4361 = vmatpush1.bf16.msra.mxu0 0
      %4362 = vmatprep.subr.bf16.mxu0 0
      %4363 = vmatpush1.bf16.msra.mxu0 0
      %4364 = vmatprep.subr.bf16.mxu0 0
      %4365 = vmatpush1.bf16.msra.mxu0 0
      %4366 = vmatprep.subr.bf16.mxu0 0
      %4367 = vmatpush1.bf16.msra.mxu0 0
      %4368 = vmatprep.subr.bf16.mxu0 0
      %4369 = vmatpush1.bf16.msra.mxu0 0
      %4370 = vmatprep.subr.bf16.mxu0 0
      %4371 = vmatpush1.bf16.msra.mxu0 0
      %4372 = vmatprep.subr.bf16.mxu0 0
      %4373 = vmatpush1.bf16.msra.mxu0 0
      %4374 = vmatprep.subr.bf16.mxu0 0
      %4375 = vmatpush1.bf16.msra.mxu0 0
      %4376 = vmatprep.subr.bf16.mxu0 0
      %4377 = vmatpush1.bf16.msra.mxu0 0
      %4378 = vmatprep.subr.bf16.mxu0 0
      %4379 = vmatpush1.bf16.msra.mxu0 0
      %4380 = vmatprep.subr.bf16.mxu0 0
      %4381 = vmatpush1.bf16.msra.mxu0 0
      %4382 = vmatprep.subr.bf16.mxu0 0
      %4383 = vmatpush1.bf16.msra.mxu0 0
      %4384 = vmatprep.subr.bf16.mxu0 0
      %4385 = vmatpush1.bf16.msra.mxu0 0
      %4386 = vmatprep.subr.bf16.mxu0 0
      %4387 = vmatpush1.bf16.msra.mxu0 0
      %4388 = vmatprep.mubr.bf16.mxu0 0
      %4389 = vmatmul.mubr.bf16.gmra.mrb[0].mxu0 %v4306
      %v4390 = vpop.f32.mrb[0].mxu0
      %v4391 = vadd.f32 0.0, %v4390
      %v4392 = vpop.f32.mrb[0].mxu0
      %v4393 = vpop.f32.mrb[0].mxu0
      %v4394 = vadd.f32 0.0, %v4393
      %v4395 = vpop.f32.mrb[0].mxu0
      %4396 = vmatprep.mubr.bf16.mxu0 0
      %4397 = vmatmul.mubr.bf16.gmra.mrb[0].mxu0 %v4309
      %v4398 = vpop.f32.mrb[0].mxu0
      %v4399 = vadd.f32 0.0, %v4398
      %v4400 = vpop.f32.mrb[0].mxu0
      %v4401 = vpop.f32.mrb[0].mxu0
      %v4402 = vadd.f32 0.0, %v4401
      %v4403 = vpop.f32.mrb[0].mxu0
      %4404 = vmatprep.mubr.bf16.mxu0 0
      %4405 = vmatmul.mubr.bf16.gmra.mrb[0].mxu0 %v4312
      %v4406 = vpop.f32.mrb[0].mxu0
      %v4407 = vadd.f32 0.0, %v4406
      %v4408 = vpop.f32.mrb[0].mxu0
      %v4409 = vpop.f32.mrb[0].mxu0
      %v4410 = vadd.f32 0.0, %v4409
      %v4411 = vpop.f32.mrb[0].mxu0
      %4412 = vmatprep.mubr.bf16.mxu0 0
      %4413 = vmatmul.mubr.bf16.gmra.mrb[0].mxu0 %v4315
      %v4414 = vpop.f32.mrb[0].mxu0
      %v4415 = vadd.f32 0.0, %v4414
      %v4416 = vpop.f32.mrb[0].mxu0
      %v4417 = vpop.f32.mrb[0].mxu0
      %v4418 = vadd.f32 0.0, %v4417
      %v4419 = vpop.f32.mrb[0].mxu0
      %4420 = vmatprep.mubr.bf16.mxu0 0
      %4421 = vmatmul.mubr.bf16.gmra.mrb[0].mxu0 %v4318
      %v4422 = vpop.f32.mrb[0].mxu0
      %v4423 = vadd.f32 0.0, %v4422
      %v4424 = vpop.f32.mrb[0].mxu0
      %v4425 = vpop.f32.mrb[0].mxu0
      %v4426 = vadd.f32 0.0, %v4425
      %v4427 = vpop.f32.mrb[0].mxu0
      %4428 = vmatprep.mubr.bf16.mxu0 0
      %4429 = vmatmul.mubr.bf16.gmra.mrb[0].mxu0 %v4321
      %v4430 = vpop.f32.mrb[0].mxu0
      %v4431 = vadd.f32 0.0, %v4430
      %v4432 = vpop.f32.mrb[0].mxu0
      %v4433 = vpop.f32.mrb[0].mxu0
      %v4434 = vadd.f32 0.0, %v4433
      %v4435 = vpop.f32.mrb[0].mxu0
      %4436 = vmatprep.mubr.bf16.mxu0 0
      %4437 = vmatmul.mubr.bf16.gmra.mrb[0].mxu0 %v4324
      %v4438 = vpop.f32.mrb[0].mxu0
      %v4439 = vadd.f32 0.0, %v4438
      %v4440 = vpop.f32.mrb[0].mxu0
      %v4441 = vpop.f32.mrb[0].mxu0
      %v4442 = vadd.f32 0.0, %v4441
      %v4443 = vpop.f32.mrb[0].mxu0
      %4444 = vmatprep.mubr.bf16.mxu0 0
      %4445 = vmatmul.mubr.bf16.gmra.mrb[0].mxu0 %v4327
      %v4446 = vpop.f32.mrb[0].mxu0
      %v4447 = vadd.f32 0.0, %v4446
      %v4448 = vpop.f32.mrb[0].mxu0
      %v4449 = vpop.f32.mrb[0].mxu0
      %v4450 = vadd.f32 0.0, %v4449
      %v4451 = vpop.f32.mrb[0].mxu0
      %4452 = vmatprep.mubr.bf16.mxu0 0
      %4453 = vmatmul.mubr.bf16.gmra.mrb[0].mxu0 %v4330
      %v4454 = vpop.f32.mrb[0].mxu0
      %v4455 = vadd.f32 0.0, %v4454
      %v4456 = vpop.f32.mrb[0].mxu0
      %v4457 = vpop.f32.mrb[0].mxu0
      %v4458 = vadd.f32 0.0, %v4457
      %v4459 = vpop.f32.mrb[0].mxu0
      %4460 = vmatprep.mubr.bf16.mxu0 0
      %4461 = vmatmul.mubr.bf16.gmra.mrb[0].mxu0 %v4333
      %v4462 = vpop.f32.mrb[0].mxu0
      %v4463 = vadd.f32 0.0, %v4462
      %v4464 = vpop.f32.mrb[0].mxu0
      %v4465 = vpop.f32.mrb[0].mxu0
      %v4466 = vadd.f32 0.0, %v4465
      %v4467 = vpop.f32.mrb[0].mxu0
      %4468 = vmatprep.mubr.bf16.mxu0 0
      %4469 = vmatmul.mubr.bf16.gmra.mrb[0].mxu0 %v4336
      %v4470 = vpop.f32.mrb[0].mxu0
      %v4471 = vadd.f32 0.0, %v4470
      %v4472 = vpop.f32.mrb[0].mxu0
      %v4473 = vpop.f32.mrb[0].mxu0
      %v4474 = vadd.f32 0.0, %v4473
      %v4475 = vpop.f32.mrb[0].mxu0
      %4476 = vmatprep.mubr.bf16.mxu0 0
      %4477 = vmatmul.mubr.bf16.gmra.mrb[0].mxu0 %v4339
      %v4478 = vpop.f32.mrb[0].mxu0
      %v4479 = vadd.f32 0.0, %v4478
      %v4480 = vpop.f32.mrb[0].mxu0
      %v4481 = vpop.f32.mrb[0].mxu0
      %v4482 = vadd.f32 0.0, %v4481
      %v4483 = vpop.f32.mrb[0].mxu0
      %4484 = vmatprep.mubr.bf16.mxu0 0
      %4485 = vmatmul.mubr.bf16.gmra.mrb[0].mxu0 %v4342
      %v4486 = vpop.f32.mrb[0].mxu0
      %v4487 = vadd.f32 0.0, %v4486
      %v4488 = vpop.f32.mrb[0].mxu0
      %v4489 = vpop.f32.mrb[0].mxu0
      %v4490 = vadd.f32 0.0, %v4489
      %v4491 = vpop.f32.mrb[0].mxu0
      %4492 = vmatprep.mubr.bf16.mxu0 0
      %4493 = vmatmul.mubr.bf16.gmra.mrb[0].mxu0 %v4345
      %v4494 = vpop.f32.mrb[0].mxu0
      %v4495 = vadd.f32 0.0, %v4494
      %v4496 = vpop.f32.mrb[0].mxu0
      %v4497 = vpop.f32.mrb[0].mxu0
      %v4498 = vadd.f32 0.0, %v4497
      %v4499 = vpop.f32.mrb[0].mxu0
      %4500 = vmatprep.mubr.bf16.mxu0 0
      %4501 = vmatmul.mubr.bf16.gmra.mrb[0].mxu0 %v4348
      %v4502 = vpop.f32.mrb[0].mxu0
      %v4503 = vadd.f32 0.0, %v4502
      %v4504 = vpop.f32.mrb[0].mxu0
      %v4505 = vpop.f32.mrb[0].mxu0
      %v4506 = vadd.f32 0.0, %v4505
      %v4507 = vpop.f32.mrb[0].mxu0
      %4508 = vmatprep.mubr.bf16.mxu0 0
      %4509 = vmatmul.mubr.bf16.gmra.mrb[0].mxu0 %v4351
      %v4510 = vpop.f32.mrb[0].mxu0
      %v4511 = vadd.f32 0.0, %v4510
      %v4512 = vpop.f32.mrb[0].mxu0
      %v4513 = vpop.f32.mrb[0].mxu0
      %v4514 = vadd.f32 0.0, %v4513
      %v4515 = vpop.f32.mrb[0].mxu0
      %4516 = vdwg.mxu0
      %v4517 = vadd.f32 %v4097, %v4391
      %v4518 = vadd.f32 %v4098, %v4394
      %v4519 = vadd.f32 %v4099, %v4399
      %v4520 = vadd.f32 %v4100, %v4402
      %v4521 = vadd.f32 %v4101, %v4407
      %v4522 = vadd.f32 %v4102, %v4410
      %v4523 = vadd.f32 %v4103, %v4415
      %v4524 = vadd.f32 %v4104, %v4418
      %v4525 = vadd.f32 %v4105, %v4423
      %v4526 = vadd.f32 %v4106, %v4426
      %v4527 = vadd.f32 %v4107, %v4431
      %v4528 = vadd.f32 %v4108, %v4434
      %v4529 = vadd.f32 %v4109, %v4439
      %v4530 = vadd.f32 %v4110, %v4442
      %v4531 = vadd.f32 %v4111, %v4447
      %v4532 = vadd.f32 %v4112, %v4450
      %v4533 = vadd.f32 %v4113, %v4455
      %v4534 = vadd.f32 %v4114, %v4458
      %v4535 = vadd.f32 %v4115, %v4463
      %v4536 = vadd.f32 %v4116, %v4466
      %v4537 = vadd.f32 %v4117, %v4471
      %v4538 = vadd.f32 %v4118, %v4474
      %v4539 = vadd.f32 %v4119, %v4479
      %v4540 = vadd.f32 %v4120, %v4482
      %v4541 = vadd.f32 %v4121, %v4487
      %v4542 = vadd.f32 %v4122, %v4490
      %v4543 = vadd.f32 %v4123, %v4495
      %v4544 = vadd.f32 %v4124, %v4498
      %v4545 = vadd.f32 %v4125, %v4503
      %v4546 = vadd.f32 %v4126, %v4506
      %v4547 = vadd.f32 %v4127, %v4511
      %v4548 = vadd.f32 %v4128, %v4514
      %4549 = vst [vmem:[%s165] sm:$0xff] %v4517
      %4550 = vst [vmem:[%s165 + $0x8] sm:$0xff] %v4518
      %4551 = vst [vmem:[%s165 + $0x10] sm:$0xff] %v4519
      %4552 = vst [vmem:[%s165 + $0x18] sm:$0xff] %v4520
      %4553 = vst [vmem:[%s165 + $0x20] sm:$0xff] %v4521
      %4554 = vst [vmem:[%s165 + $0x28] sm:$0xff] %v4522
      %4555 = vst [vmem:[%s165 + $0x30] sm:$0xff] %v4523
      %4556 = vst [vmem:[%s165 + $0x38] sm:$0xff] %v4524
      %4557 = vst [vmem:[%s165 + $0x40] sm:$0xff] %v4525
      %4558 = vst [vmem:[%s165 + $0x48] sm:$0xff] %v4526
      %4559 = vst [vmem:[%s165 + $0x50] sm:$0xff] %v4527
      %4560 = vst [vmem:[%s165 + $0x58] sm:$0xff] %v4528
      %4561 = vst [vmem:[%s165 + $0x60] sm:$0xff] %v4529
      %4562 = vst [vmem:[%s165 + $0x68] sm:$0xff] %v4530
      %4563 = vst [vmem:[%s165 + $0x70] sm:$0xff] %v4531
      %4564 = vst [vmem:[%s165 + $0x78] sm:$0xff] %v4532
      %4565 = vst [vmem:[%s165 + $0x80] sm:$0xff] %v4533
      %4566 = vst [vmem:[%s165 + $0x88] sm:$0xff] %v4534
      %4567 = vst [vmem:[%s165 + $0x90] sm:$0xff] %v4535
      %4568 = vst [vmem:[%s165 + $0x98] sm:$0xff] %v4536
      %4569 = vst [vmem:[%s165 + $0xa0] sm:$0xff] %v4537
      %4570 = vst [vmem:[%s165 + $0xa8] sm:$0xff] %v4538
      %4571 = vst [vmem:[%s165 + $0xb0] sm:$0xff] %v4539
      %4572 = vst [vmem:[%s165 + $0xb8] sm:$0xff] %v4540
      %4573 = vst [vmem:[%s165 + $0xc0] sm:$0xff] %v4541
      %4574 = vst [vmem:[%s165 + $0xc8] sm:$0xff] %v4542
      %4575 = vst [vmem:[%s165 + $0xd0] sm:$0xff] %v4543
      %4576 = vst [vmem:[%s165 + $0xd8] sm:$0xff] %v4544
      %4577 = vst [vmem:[%s165 + $0xe0] sm:$0xff] %v4545
      %4578 = vst [vmem:[%s165 + $0xe8] sm:$0xff] %v4546
      %4579 = vst [vmem:[%s165 + $0xf0] sm:$0xff] %v4547
      %4580 = vst [vmem:[%s165 + $0xf8] sm:$0xff] %v4548
      %s4581 = smul.u32 32, %s18
      %p4582 = scmp.lt.s32.totalorder %s17, 1
      %s4583 = scalar_select %p4582, %s17, 1
      %p4584 = scmp.lt.s32.totalorder %s4581, 31
      %s4585 = scalar_select %p4584, %s4581, 31
      %s4586 = smul.addr %s4583, 32
      %s4587 = sadd.s32 %s4585, %s4586
      %s4588 = smul.addr %s4587, 8
      %s4589 = scalar_lea.vmem %s2, %s4588
      // Predicated region
      $region29: #{conv2d_pallas.1} parent=27 // pred_check
        %p4590 = pneg %p92
      $region30: #{conv2d_pallas.1} parent=27 // pred_check_branch
        %4592 = sbr.rel (%p4590) target = $region32
      $region31: #{conv2d_pallas.1} parent=27 // pred_region
        %s4593 = smul.u32 32, %s18
      $region32: #{conv2d_pallas.1} parent=27 // pred_fallthru
        _
    $region28: #{conv2d_pallas.1} parent=5 // pred_fallthru
      _
    %p4594 = scmp.le.s32.totalorder 2, %s8
    // Predicated region
    $region33: #{conv2d_pallas.1} parent=5 // pred_check
      %p4595 = pneg %p4594
    $region34: #{conv2d_pallas.1} parent=5 // pred_check_branch
      %4597 = sbr.rel (%p4595) target = $region36
    $region35: #{conv2d_pallas.1} parent=5 // pred_region
      %s4598 = ssub.s32 %s8, 2
      // Predicated region
      $region37: #{conv2d_pallas.1} parent=35 // pred_check
        %p4599 = pneg %p98
      $region38: #{conv2d_pallas.1} parent=35 // pred_check_branch
        %4601 = sbr.rel (%p4599) target = $region40
      $region39: #{conv2d_pallas.1} parent=35 // pred_region
        %s4602 = smul.u32 32, %s20
        %p4603 = scmp.lt.s32.totalorder %s19, 1
        %s4604 = scalar_select %p4603, %s19, 1
        %p4605 = scmp.lt.s32.totalorder %s4602, 31
        %s4606 = scalar_select %p4605, %s4602, 31
        %s4607 = smul.addr %s4604, 32
        %s4608 = sadd.s32 %s4606, %s4607
        %s4609 = smul.addr %s4608, 8
        %s4610 = scalar_lea.vmem %s2, %s4609
      $region40: #{conv2d_pallas.1} parent=35 // pred_fallthru
        _
    $region36: #{conv2d_pallas.1} parent=5 // pred_fallthru
      _
  $region6: #{conv2d_pallas.1} parent=0 // loop_footer
    %s12 = sadd.s32 1, %s8
  $region7: #{conv2d_pallas.1} parent=0 // loop_footer_branch
    %7 = sbr.rel target = $region3
  $region8: #{conv2d_pallas.1} parent=0 // loop_exit
    _

</llo_original>
